<compile_context>
chip_gen: v6e
topology: v6e:2x2x1
jax: 0.10.0
libtpu: 0.0.40
codegen_flags: <defaults>
</compile_context>

<pallas_src>
import functools

import jax
import jax.numpy as jnp
from jax import lax
from jax.experimental import pallas as pl
from jax.experimental.pallas import tpu as pltpu


def _sigmoid(x):
    # Exact logistic via tanh: one EUP transcendental, no VPU divide on the
    # recurrent critical path.
    return 0.5 * jnp.tanh(0.5 * x) + 0.5


def bilstm_kernel(x_ref, fc1_w_ref, fc1_b_ref, *rest, num_layers, hidden_size):
    # rest = [w_ih_l0, w_hh_blk_l0, b_l0, ... per layer ...,
    #         fc2_w, fc2_b, fc3_w, fc3_b,
    #         out_ref, xp_ref, seq_f_ref, seq_b_ref]
    lstm_refs = rest[: 3 * num_layers]
    (fc2_w_ref, fc2_b_ref, fc3_w_ref, fc3_b_ref,
     out_ref, xp_ref, seq_f_ref, seq_b_ref) = rest[3 * num_layers:]

    H = hidden_size
    G = 4 * H                         # per-direction gate width
    T, Bb, D = x_ref.shape            # time-major block: (T, batch_block, D)

    # ---------------- fc1 + ReLU (single batched MXU matmul) ----------------
    x2d = x_ref[...].reshape(T * Bb, D)
    h1 = jnp.dot(x2d.astype(jnp.bfloat16), fc1_w_ref[...],
                 preferred_element_type=jnp.float32) + fc1_b_ref[...]
    layer_in = jnp.maximum(h1, 0.0)                     # (T*Bb, H), f32

    def lstm_cell(gates, c):
        # Gate order [i, f, g, o] (PyTorch). 32-lane sub-vreg slices are fine
        # at H=32; at production H>=128 they become vreg-aligned.
        i_g = _sigmoid(gates[:, 0 * H:1 * H])
        f_g = _sigmoid(gates[:, 1 * H:2 * H])
        g_g = jnp.tanh(gates[:, 2 * H:3 * H])
        o_g = _sigmoid(gates[:, 3 * H:4 * H])
        c = f_g * c + i_g * g_g
        h = o_g * jnp.tanh(c)
        return h, c

    # ---------------- bidirectional multi-layer LSTM -------------------------
    for l in range(num_layers):
        w_ih = lstm_refs[3 * l + 0][...]   # (in_l, 8H)  columns: [fwd 4H | bwd 4H]
        w_hh = lstm_refs[3 * l + 1][...]   # (2H, 8H)    block-diag(W_hh_f, W_hh_b)
        b = lstm_refs[3 * l + 2][...]      # (1, 8H)     [b_f | b_b]

        # Hoisted fused input projection for BOTH directions (bias folded in).
        xp_ref[...] = (jnp.dot(layer_in.astype(jnp.bfloat16), w_ih,
                               preferred_element_type=jnp.float32)
                       + b).reshape(T, Bb, 2 * G)

        zeros = jnp.zeros((Bb, H), jnp.float32)

        def step(s, carry, _w=w_hh):
            # Forward direction processes timestep s, backward processes
            # T-1-s; both recurrent matmuls are fused into one block-diagonal
            # MXU op so the serial chain is T (not 2T) steps long.
            h_f, c_f, h_b, c_b = carry
            t_b = T - 1 - s
            h_cat = jnp.concatenate([h_f, h_b], axis=-1).astype(jnp.bfloat16)
            rec = jnp.dot(h_cat, _w, preferred_element_type=jnp.float32)  # (Bb, 8H)
            xp_f = xp_ref[s]                     # (Bb, 8H)
            xp_b = xp_ref[t_b]                   # (Bb, 8H)
            gates_f = xp_f[:, :G] + rec[:, :G]
            gates_b = xp_b[:, G:] + rec[:, G:]
            h_f, c_f = lstm_cell(gates_f, c_f)
            h_b, c_b = lstm_cell(gates_b, c_b)
            seq_f_ref[s] = h_f
            seq_b_ref[t_b] = h_b
            return h_f, c_f, h_b, c_b

        lax.fori_loop(0, T, step, (zeros, zeros, zeros, zeros), unroll=True)

        # Next layer's input: concat of both directions -> (T*Bb, 2H).
        layer_in = jnp.concatenate(
            [seq_f_ref[...], seq_b_ref[...]], axis=-1).reshape(T * Bb, 2 * H)

    # ---------------- dropout(identity, eval) -> relu -> fc2 -> relu -> fc3 --
    # TODO(synk): training-mode dropout (random masking) not implemented;
    # eval-mode identity is used, matching module.eval() semantics.
    s = jnp.maximum(layer_in, 0.0)                      # (T*Bb, 2H)
    z2 = jnp.dot(s.astype(jnp.bfloat16), fc2_w_ref[...],
                 preferred_element_type=jnp.float32) + fc2_b_ref[...]
    z2 = jnp.maximum(z2, 0.0)
    z3 = jnp.dot(z2.astype(jnp.bfloat16), fc3_w_ref[...],
                 preferred_element_type=jnp.float32) + fc3_b_ref[...]
    out = _sigmoid(z3)                                  # (T*Bb, O)
    # NOTE: output last dim (O) << 128 -> masked stores; fine at these sizes.
    out_ref[...] = out.reshape(T, Bb, -1).astype(out_ref.dtype)


def _fuse_lstm_weights(params, num_layers):
    """Fuse per-direction LSTM weights (done once, outside the kernel)."""
    fused = []
    for l in range(num_layers):
        w_ih_f = params[f"w_ih_f{l}"]
        w_ih_b = params[f"w_ih_b{l}"]
        w_hh_f = params[f"w_hh_f{l}"]
        w_hh_b = params[f"w_hh_b{l}"]
        b_f = params[f"b_f{l}"]
        b_b = params[f"b_b{l}"]
        w_ih = jnp.concatenate([w_ih_f, w_ih_b], axis=-1)        # (in_l, 8H)
        z = jnp.zeros_like(w_hh_f)
        w_hh = jnp.concatenate(
            [jnp.concatenate([w_hh_f, z], axis=-1),
             jnp.concatenate([z, w_hh_b], axis=-1)], axis=0)      # (2H, 8H)
        b = jnp.concatenate([b_f, b_b], axis=-1)                  # (1, 8H)
        fused += [w_ih, w_hh, b]
    return fused


def bilstm_forward(x, params, *, num_layers, hidden_size, output_size,
                   batch_block=None):
    B, T, D = x.shape
    H = hidden_size
    if batch_block is None:
        # Full batch per block when small; multiples of 8 required when tiling.
        batch_block = B if B < 8 else 8
    assert B % batch_block == 0
    grid = (B // batch_block,)

    # Time-major layout for the kernel (cheap XLA transpose outside the kernel).
    x_tm = jnp.transpose(x, (1, 0, 2))                  # (T, B, D)

    args = [x_tm, params["fc1_w"], params["fc1_b"]]
    args += _fuse_lstm_weights(params, num_layers)
    args += [params["fc2_w"], params["fc2_b"], params["fc3_w"], params["fc3_b"]]

    def weight_spec(a):
        return pl.BlockSpec(a.shape, lambda b: (0, 0))  # full array, grid-invariant

    in_specs = [pl.BlockSpec((T, batch_block, D), lambda b: (0, b, 0))]
    in_specs += [weight_spec(a) for a in args[1:]]
    out_spec = pl.BlockSpec((T, batch_block, output_size), lambda b: (0, b, 0))

    kernel = functools.partial(bilstm_kernel,
                               num_layers=num_layers, hidden_size=H)

    out_tm = pl.pallas_call(
        kernel,
        out_shape=jax.ShapeDtypeStruct((T, B, output_size), jnp.float32),
        grid_spec=pltpu.PrefetchScalarGridSpec(
            num_scalar_prefetch=0,
            grid=grid,
            in_specs=in_specs,
            out_specs=out_spec,
            scratch_shapes=[
                pltpu.VMEM((T, batch_block, 8 * H), jnp.float32),  # fused xp
                pltpu.VMEM((T, batch_block, H), jnp.float32),      # seq fwd
                pltpu.VMEM((T, batch_block, H), jnp.float32),      # seq bwd
            ],
        ),
        # Batch axis is truly independent -> parallel (uses both v7x TCs when
        # grid > 1). For production H/T, tile B smaller and/or raise
        # vmem_limit_bytes to budget v7x's 64 MiB VMEM.
        compiler_params=pltpu.CompilerParams(
            dimension_semantics=("parallel",)),
    )(*args)

    return jnp.transpose(out_tm, (1, 0, 2))             # back to (B, T, O)


def init_params(key, input_size, hidden_size, num_layers, output_size):
    H = hidden_size
    keys = iter(jax.random.split(key, 6 + 6 * num_layers))
    scale = 0.1
    wdt = jnp.bfloat16  # matmul weights bf16; biases/state stay f32
    p = {
        "fc1_w": (scale * jax.random.normal(next(keys), (input_size, H))).astype(wdt),
        "fc1_b": scale * jax.random.normal(next(keys), (1, H), jnp.float32),
        "fc2_w": (scale * jax.random.normal(next(keys), (2 * H, 2 * H))).astype(wdt),
        "fc2_b": scale * jax.random.normal(next(keys), (1, 2 * H), jnp.float32),
        "fc3_w": (scale * jax.random.normal(next(keys), (2 * H, output_size))).astype(wdt),
        "fc3_b": scale * jax.random.normal(next(keys), (1, output_size), jnp.float32),
    }
    for l in range(num_layers):
        in_l = H if l == 0 else 2 * H   # layers > 0 consume the 2H bi-dir concat
        for tag in ("f", "b"):
            p[f"w_ih_{tag}{l}"] = (scale * jax.random.normal(
                next(keys), (in_l, 4 * H))).astype(wdt)
            p[f"w_hh_{tag}{l}"] = (scale * jax.random.normal(
                next(keys), (H, 4 * H))).astype(wdt)
            # combined b_ih + b_hh, gate order [i, f, g, o]
            p[f"b_{tag}{l}"] = scale * jax.random.normal(
                next(keys), (1, 4 * H), jnp.float32)
    return p


if __name__ == "__main__":
    B, T = 2, 8
    input_size, hidden_size, num_layers, output_size = 16, 32, 2, 4

    key = jax.random.PRNGKey(0)
    kx, kp = jax.random.split(key)
    x = jax.random.normal(kx, (B, T, input_size), jnp.float32)
    params = init_params(kp, input_size, hidden_size, num_layers, output_size)

    out = bilstm_forward(x, params,
                         num_layers=num_layers,
                         hidden_size=hidden_size,
                         output_size=output_size)
    out = jax.block_until_ready(out)
    assert out.shape == (B, T, output_size)
    assert bool(jnp.all((out >= 0.0) & (out <= 1.0)))
    print("KERNEL_OK")
</pallas_src>

<mosaic_0001>
module attributes {stable_mosaic.version = 11 : i64} {
  func.func @bilstm_kernel(%arg0: i32, %arg1: memref<8x2x16xf32, #tpu.memory_space<vmem>>, %arg2: memref<16x32xbf16, #tpu.memory_space<vmem>>, %arg3: memref<1x32xf32, #tpu.memory_space<vmem>>, %arg4: memref<32x256xbf16, #tpu.memory_space<vmem>>, %arg5: memref<64x256xbf16, #tpu.memory_space<vmem>>, %arg6: memref<1x256xf32, #tpu.memory_space<vmem>>, %arg7: memref<64x256xbf16, #tpu.memory_space<vmem>>, %arg8: memref<64x256xbf16, #tpu.memory_space<vmem>>, %arg9: memref<1x256xf32, #tpu.memory_space<vmem>>, %arg10: memref<64x64xbf16, #tpu.memory_space<vmem>>, %arg11: memref<1x64xf32, #tpu.memory_space<vmem>>, %arg12: memref<64x4xbf16, #tpu.memory_space<vmem>>, %arg13: memref<1x4xf32, #tpu.memory_space<vmem>>, %arg14: memref<8x2x4xf32, #tpu.memory_space<vmem>>, %arg15: memref<8x2x256xf32, #tpu.memory_space<vmem>>, %arg16: memref<8x2x32xf32, #tpu.memory_space<vmem>>, %arg17: memref<8x2x32xf32, #tpu.memory_space<vmem>>) attributes {dimension_semantics = [#tpu.dimension_semantics<parallel>], iteration_bounds = array<i64: 1>, scalar_prefetch = 0 : i64, scratch_operands = 3 : i64, tpu.core_type = #tpu.core_type<tc>, window_params = [{transform_indices = @transform_0, window_bounds = array<i64: 8, 2, 16>}, {pipeline_mode = #tpu.pipeline_mode<synchronous>, transform_indices = @transform_1, window_bounds = array<i64: 16, 32>}, {pipeline_mode = #tpu.pipeline_mode<synchronous>, transform_indices = @transform_2, window_bounds = array<i64: 1, 32>}, {pipeline_mode = #tpu.pipeline_mode<synchronous>, transform_indices = @transform_3, window_bounds = array<i64: 32, 256>}, {pipeline_mode = #tpu.pipeline_mode<synchronous>, transform_indices = @transform_4, window_bounds = array<i64: 64, 256>}, {pipeline_mode = #tpu.pipeline_mode<synchronous>, transform_indices = @transform_5, window_bounds = array<i64: 1, 256>}, {pipeline_mode = #tpu.pipeline_mode<synchronous>, transform_indices = @transform_6, window_bounds = array<i64: 64, 256>}, {pipeline_mode = #tpu.pipeline_mode<synchronous>, transform_indices = @transform_7, window_bounds = array<i64: 64, 256>}, {pipeline_mode = #tpu.pipeline_mode<synchronous>, transform_indices = @transform_8, window_bounds = array<i64: 1, 256>}, {pipeline_mode = #tpu.pipeline_mode<synchronous>, transform_indices = @transform_9, window_bounds = array<i64: 64, 64>}, {pipeline_mode = #tpu.pipeline_mode<synchronous>, transform_indices = @transform_10, window_bounds = array<i64: 1, 64>}, {pipeline_mode = #tpu.pipeline_mode<synchronous>, transform_indices = @transform_11, window_bounds = array<i64: 64, 4>}, {pipeline_mode = #tpu.pipeline_mode<synchronous>, transform_indices = @transform_12, window_bounds = array<i64: 1, 4>}, {transform_indices = @transform_13, window_bounds = array<i64: 8, 2, 4>}]} {
    %c0 = arith.constant 0 : index
    %c0_0 = arith.constant 0 : index
    %c0_1 = arith.constant 0 : index
    %0 = vector.load %arg1[%c0, %c0_0, %c0_1] : memref<8x2x16xf32, #tpu.memory_space<vmem>>, vector<8x2x16xf32>
    %1 = vector.shape_cast %0 : vector<8x2x16xf32> to vector<16x16xf32>
    %2 = arith.truncf %1 : vector<16x16xf32> to vector<16x16xbf16>
    %c0_2 = arith.constant 0 : index
    %c0_3 = arith.constant 0 : index
    %3 = vector.load %arg2[%c0_2, %c0_3] : memref<16x32xbf16, #tpu.memory_space<vmem>>, vector<16x32xbf16>
    %cst = arith.constant dense<0.000000e+00> : vector<16x32xf32>
    %4 = tpu.matmul %2, %3, %cst {dimension_numbers = #tpu.dot_dimension_numbers<[1], [0], [0], [1], [0, 0, 1, 1], [], []>} : vector<16x16xbf16>, vector<16x32xbf16>, vector<16x32xf32> -> vector<16x32xf32>
    %c0_4 = arith.constant 0 : index
    %c0_5 = arith.constant 0 : index
    %5 = vector.load %arg3[%c0_4, %c0_5] : memref<1x32xf32, #tpu.memory_space<vmem>>, vector<1x32xf32>
    %6 = vector.broadcast %5 : vector<1x32xf32> to vector<16x32xf32>
    %7 = arith.addf %4, %6 : vector<16x32xf32>
    %cst_6 = arith.constant 0.000000e+00 : f32
    %8 = vector.broadcast %cst_6 : f32 to vector<16x32xf32>
    %9 = arith.maximumf %7, %8 : vector<16x32xf32>
    %c0_7 = arith.constant 0 : index
    %c0_8 = arith.constant 0 : index
    %10 = vector.load %arg4[%c0_7, %c0_8] : memref<32x256xbf16, #tpu.memory_space<vmem>>, vector<32x256xbf16>
    %c0_9 = arith.constant 0 : index
    %c0_10 = arith.constant 0 : index
    %11 = vector.load %arg5[%c0_9, %c0_10] : memref<64x256xbf16, #tpu.memory_space<vmem>>, vector<64x256xbf16>
    %c0_11 = arith.constant 0 : index
    %c0_12 = arith.constant 0 : index
    %12 = vector.load %arg6[%c0_11, %c0_12] : memref<1x256xf32, #tpu.memory_space<vmem>>, vector<1x256xf32>
    %13 = arith.truncf %9 : vector<16x32xf32> to vector<16x32xbf16>
    %cst_13 = arith.constant dense<0.000000e+00> : vector<16x256xf32>
    %14 = tpu.matmul %13, %10, %cst_13 {dimension_numbers = #tpu.dot_dimension_numbers<[1], [0], [0], [1], [0, 0, 1, 1], [], []>} : vector<16x32xbf16>, vector<32x256xbf16>, vector<16x256xf32> -> vector<16x256xf32>
    %15 = vector.broadcast %12 : vector<1x256xf32> to vector<16x256xf32>
    %16 = arith.addf %14, %15 : vector<16x256xf32>
    %17 = vector.shape_cast %16 : vector<16x256xf32> to vector<8x2x256xf32>
    %c0_14 = arith.constant 0 : index
    %c0_15 = arith.constant 0 : index
    %c0_16 = arith.constant 0 : index
    %18 = vector.load %arg15[%c0_14, %c0_15, %c0_16] : memref<8x2x256xf32, #tpu.memory_space<vmem>>, vector<8x2x256xf32>
    tpu.vector_store %arg15[%c0_14, %c0_15, %c0_16], %17 {strides = array<i32>} : memref<8x2x256xf32, #tpu.memory_space<vmem>>, vector<8x2x256xf32>,
    %cst_17 = arith.constant 0.000000e+00 : f32
    %19 = vector.broadcast %cst_17 : f32 to vector<2x32xf32>
    %c0_i32 = arith.constant 0 : i32
    %c7_i32 = arith.constant 7 : i32
    %20 = arith.subi %c7_i32, %c0_i32 : i32
    %21 = tpu.concatenate %19, %19 in 1 : vector<2x32xf32>, vector<2x32xf32> -> vector<2x64xf32>
    %22 = arith.truncf %21 : vector<2x64xf32> to vector<2x64xbf16>
    %cst_18 = arith.constant dense<0.000000e+00> : vector<2x256xf32>
    %23 = tpu.matmul %22, %11, %cst_18 {dimension_numbers = #tpu.dot_dimension_numbers<[1], [0], [0], [1], [0, 0, 1, 1], [], []>} : vector<2x64xbf16>, vector<64x256xbf16>, vector<2x256xf32> -> vector<2x256xf32>
    %24 = arith.index_cast %c0_i32 : i32 to index
    %c0_19 = arith.constant 0 : index
    %c0_20 = arith.constant 0 : index
    %25 = vector.load %arg15[%24, %c0_19, %c0_20] : memref<8x2x256xf32, #tpu.memory_space<vmem>>, vector<1x2x256xf32>
    %26 = vector.shape_cast %25 : vector<1x2x256xf32> to vector<2x256xf32>
    %27 = arith.index_cast %20 : i32 to index
    %c0_21 = arith.constant 0 : index
    %c0_22 = arith.constant 0 : index
    %28 = vector.load %arg15[%27, %c0_21, %c0_22] : memref<8x2x256xf32, #tpu.memory_space<vmem>>, vector<1x2x256xf32>
    %29 = vector.shape_cast %28 : vector<1x2x256xf32> to vector<2x256xf32>
    %30 = vector.extract_strided_slice %26 {offsets = [0, 0], sizes = [2, 128], strides = [1, 1]} : vector<2x256xf32> to vector<2x128xf32>
    %31 = vector.extract_strided_slice %23 {offsets = [0, 0], sizes = [2, 128], strides = [1, 1]} : vector<2x256xf32> to vector<2x128xf32>
    %32 = arith.addf %30, %31 : vector<2x128xf32>
    %33 = vector.extract_strided_slice %29 {offsets = [0, 128], sizes = [2, 128], strides = [1, 1]} : vector<2x256xf32> to vector<2x128xf32>
    %34 = vector.extract_strided_slice %23 {offsets = [0, 128], sizes = [2, 128], strides = [1, 1]} : vector<2x256xf32> to vector<2x128xf32>
    %35 = arith.addf %33, %34 : vector<2x128xf32>
    %36 = vector.extract_strided_slice %32 {offsets = [0, 0], sizes = [2, 32], strides = [1, 1]} : vector<2x128xf32> to vector<2x32xf32>
    %cst_23 = arith.constant 5.000000e-01 : f32
    %37 = vector.broadcast %cst_23 : f32 to vector<2x32xf32>
    %38 = arith.mulf %37, %36 : vector<2x32xf32>
    %39 = math.tanh %38 : vector<2x32xf32>
    %cst_24 = arith.constant 5.000000e-01 : f32
    %40 = vector.broadcast %cst_24 : f32 to vector<2x32xf32>
    %41 = arith.mulf %40, %39 : vector<2x32xf32>
    %cst_25 = arith.constant 5.000000e-01 : f32
    %42 = vector.broadcast %cst_25 : f32 to vector<2x32xf32>
    %43 = arith.addf %41, %42 : vector<2x32xf32>
    %44 = vector.extract_strided_slice %32 {offsets = [0, 32], sizes = [2, 32], strides = [1, 1]} : vector<2x128xf32> to vector<2x32xf32>
    %cst_26 = arith.constant 5.000000e-01 : f32
    %45 = vector.broadcast %cst_26 : f32 to vector<2x32xf32>
    %46 = arith.mulf %45, %44 : vector<2x32xf32>
    %47 = math.tanh %46 : vector<2x32xf32>
    %cst_27 = arith.constant 5.000000e-01 : f32
    %48 = vector.broadcast %cst_27 : f32 to vector<2x32xf32>
    %49 = arith.mulf %48, %47 : vector<2x32xf32>
    %cst_28 = arith.constant 5.000000e-01 : f32
    %50 = vector.broadcast %cst_28 : f32 to vector<2x32xf32>
    %51 = arith.addf %49, %50 : vector<2x32xf32>
    %52 = vector.extract_strided_slice %32 {offsets = [0, 64], sizes = [2, 32], strides = [1, 1]} : vector<2x128xf32> to vector<2x32xf32>
    %53 = math.tanh %52 : vector<2x32xf32>
    %54 = vector.extract_strided_slice %32 {offsets = [0, 96], sizes = [2, 32], strides = [1, 1]} : vector<2x128xf32> to vector<2x32xf32>
    %cst_29 = arith.constant 5.000000e-01 : f32
    %55 = vector.broadcast %cst_29 : f32 to vector<2x32xf32>
    %56 = arith.mulf %55, %54 : vector<2x32xf32>
    %57 = math.tanh %56 : vector<2x32xf32>
    %cst_30 = arith.constant 5.000000e-01 : f32
    %58 = vector.broadcast %cst_30 : f32 to vector<2x32xf32>
    %59 = arith.mulf %58, %57 : vector<2x32xf32>
    %cst_31 = arith.constant 5.000000e-01 : f32
    %60 = vector.broadcast %cst_31 : f32 to vector<2x32xf32>
    %61 = arith.addf %59, %60 : vector<2x32xf32>
    %62 = arith.mulf %51, %19 : vector<2x32xf32>
    %63 = arith.mulf %43, %53 : vector<2x32xf32>
    %64 = arith.addf %62, %63 : vector<2x32xf32>
    %65 = math.tanh %64 : vector<2x32xf32>
    %66 = arith.mulf %61, %65 : vector<2x32xf32>
    %67 = vector.extract_strided_slice %35 {offsets = [0, 0], sizes = [2, 32], strides = [1, 1]} : vector<2x128xf32> to vector<2x32xf32>
    %cst_32 = arith.constant 5.000000e-01 : f32
    %68 = vector.broadcast %cst_32 : f32 to vector<2x32xf32>
    %69 = arith.mulf %68, %67 : vector<2x32xf32>
    %70 = math.tanh %69 : vector<2x32xf32>
    %cst_33 = arith.constant 5.000000e-01 : f32
    %71 = vector.broadcast %cst_33 : f32 to vector<2x32xf32>
    %72 = arith.mulf %71, %70 : vector<2x32xf32>
    %cst_34 = arith.constant 5.000000e-01 : f32
    %73 = vector.broadcast %cst_34 : f32 to vector<2x32xf32>
    %74 = arith.addf %72, %73 : vector<2x32xf32>
    %75 = vector.extract_strided_slice %35 {offsets = [0, 32], sizes = [2, 32], strides = [1, 1]} : vector<2x128xf32> to vector<2x32xf32>
    %cst_35 = arith.constant 5.000000e-01 : f32
    %76 = vector.broadcast %cst_35 : f32 to vector<2x32xf32>
    %77 = arith.mulf %76, %75 : vector<2x32xf32>
    %78 = math.tanh %77 : vector<2x32xf32>
    %cst_36 = arith.constant 5.000000e-01 : f32
    %79 = vector.broadcast %cst_36 : f32 to vector<2x32xf32>
    %80 = arith.mulf %79, %78 : vector<2x32xf32>
    %cst_37 = arith.constant 5.000000e-01 : f32
    %81 = vector.broadcast %cst_37 : f32 to vector<2x32xf32>
    %82 = arith.addf %80, %81 : vector<2x32xf32>
    %83 = vector.extract_strided_slice %35 {offsets = [0, 64], sizes = [2, 32], strides = [1, 1]} : vector<2x128xf32> to vector<2x32xf32>
    %84 = math.tanh %83 : vector<2x32xf32>
    %85 = vector.extract_strided_slice %35 {offsets = [0, 96], sizes = [2, 32], strides = [1, 1]} : vector<2x128xf32> to vector<2x32xf32>
    %cst_38 = arith.constant 5.000000e-01 : f32
    %86 = vector.broadcast %cst_38 : f32 to vector<2x32xf32>
    %87 = arith.mulf %86, %85 : vector<2x32xf32>
    %88 = math.tanh %87 : vector<2x32xf32>
    %cst_39 = arith.constant 5.000000e-01 : f32
    %89 = vector.broadcast %cst_39 : f32 to vector<2x32xf32>
    %90 = arith.mulf %89, %88 : vector<2x32xf32>
    %cst_40 = arith.constant 5.000000e-01 : f32
    %91 = vector.broadcast %cst_40 : f32 to vector<2x32xf32>
    %92 = arith.addf %90, %91 : vector<2x32xf32>
    %93 = arith.mulf %82, %19 : vector<2x32xf32>
    %94 = arith.mulf %74, %84 : vector<2x32xf32>
    %95 = arith.addf %93, %94 : vector<2x32xf32>
    %96 = math.tanh %95 : vector<2x32xf32>
    %97 = arith.mulf %92, %96 : vector<2x32xf32>
    %98 = arith.index_cast %c0_i32 : i32 to index
    %c0_41 = arith.constant 0 : index
    %c0_42 = arith.constant 0 : index
    %99 = vector.load %arg16[%98, %c0_41, %c0_42] : memref<8x2x32xf32, #tpu.memory_space<vmem>>, vector<1x2x32xf32>
    %100 = vector.shape_cast %99 : vector<1x2x32xf32> to vector<2x32xf32>
    %101 = vector.shape_cast %66 : vector<2x32xf32> to vector<1x2x32xf32>
    tpu.vector_store %arg16[%98, %c0_41, %c0_42], %101 {strides = array<i32>} : memref<8x2x32xf32, #tpu.memory_space<vmem>>, vector<1x2x32xf32>,
    %102 = arith.index_cast %20 : i32 to index
    %c0_43 = arith.constant 0 : index
    %c0_44 = arith.constant 0 : index
    %103 = vector.load %arg17[%102, %c0_43, %c0_44] : memref<8x2x32xf32, #tpu.memory_space<vmem>>, vector<1x2x32xf32>
    %104 = vector.shape_cast %103 : vector<1x2x32xf32> to vector<2x32xf32>
    %105 = vector.shape_cast %97 : vector<2x32xf32> to vector<1x2x32xf32>
    tpu.vector_store %arg17[%102, %c0_43, %c0_44], %105 {strides = array<i32>} : memref<8x2x32xf32, #tpu.memory_space<vmem>>, vector<1x2x32xf32>,
    %c1_i32 = arith.constant 1 : i32
    %c7_i32_45 = arith.constant 7 : i32
    %106 = arith.subi %c7_i32_45, %c1_i32 : i32
    %107 = tpu.concatenate %66, %97 in 1 : vector<2x32xf32>, vector<2x32xf32> -> vector<2x64xf32>
    %108 = arith.truncf %107 : vector<2x64xf32> to vector<2x64xbf16>
    %cst_46 = arith.constant dense<0.000000e+00> : vector<2x256xf32>
    %109 = tpu.matmul %108, %11, %cst_46 {dimension_numbers = #tpu.dot_dimension_numbers<[1], [0], [0], [1], [0, 0, 1, 1], [], []>} : vector<2x64xbf16>, vector<64x256xbf16>, vector<2x256xf32> -> vector<2x256xf32>
    %110 = arith.index_cast %c1_i32 : i32 to index
    %c0_47 = arith.constant 0 : index
    %c0_48 = arith.constant 0 : index
    %111 = vector.load %arg15[%110, %c0_47, %c0_48] : memref<8x2x256xf32, #tpu.memory_space<vmem>>, vector<1x2x256xf32>
    %112 = vector.shape_cast %111 : vector<1x2x256xf32> to vector<2x256xf32>
    %113 = arith.index_cast %106 : i32 to index
    %c0_49 = arith.constant 0 : index
    %c0_50 = arith.constant 0 : index
    %114 = vector.load %arg15[%113, %c0_49, %c0_50] : memref<8x2x256xf32, #tpu.memory_space<vmem>>, vector<1x2x256xf32>
    %115 = vector.shape_cast %114 : vector<1x2x256xf32> to vector<2x256xf32>
    %116 = vector.extract_strided_slice %112 {offsets = [0, 0], sizes = [2, 128], strides = [1, 1]} : vector<2x256xf32> to vector<2x128xf32>
    %117 = vector.extract_strided_slice %109 {offsets = [0, 0], sizes = [2, 128], strides = [1, 1]} : vector<2x256xf32> to vector<2x128xf32>
    %118 = arith.addf %116, %117 : vector<2x128xf32>
    %119 = vector.extract_strided_slice %115 {offsets = [0, 128], sizes = [2, 128], strides = [1, 1]} : vector<2x256xf32> to vector<2x128xf32>
    %120 = vector.extract_strided_slice %109 {offsets = [0, 128], sizes = [2, 128], strides = [1, 1]} : vector<2x256xf32> to vector<2x128xf32>
    %121 = arith.addf %119, %120 : vector<2x128xf32>
    %122 = vector.extract_strided_slice %118 {offsets = [0, 0], sizes = [2, 32], strides = [1, 1]} : vector<2x128xf32> to vector<2x32xf32>
    %cst_51 = arith.constant 5.000000e-01 : f32
    %123 = vector.broadcast %cst_51 : f32 to vector<2x32xf32>
    %124 = arith.mulf %123, %122 : vector<2x32xf32>
    %125 = math.tanh %124 : vector<2x32xf32>
    %cst_52 = arith.constant 5.000000e-01 : f32
    %126 = vector.broadcast %cst_52 : f32 to vector<2x32xf32>
    %127 = arith.mulf %126, %125 : vector<2x32xf32>
    %cst_53 = arith.constant 5.000000e-01 : f32
    %128 = vector.broadcast %cst_53 : f32 to vector<2x32xf32>
    %129 = arith.addf %127, %128 : vector<2x32xf32>
    %130 = vector.extract_strided_slice %118 {offsets = [0, 32], sizes = [2, 32], strides = [1, 1]} : vector<2x128xf32> to vector<2x32xf32>
    %cst_54 = arith.constant 5.000000e-01 : f32
    %131 = vector.broadcast %cst_54 : f32 to vector<2x32xf32>
    %132 = arith.mulf %131, %130 : vector<2x32xf32>
    %133 = math.tanh %132 : vector<2x32xf32>
    %cst_55 = arith.constant 5.000000e-01 : f32
    %134 = vector.broadcast %cst_55 : f32 to vector<2x32xf32>
    %135 = arith.mulf %134, %133 : vector<2x32xf32>
    %cst_56 = arith.constant 5.000000e-01 : f32
    %136 = vector.broadcast %cst_56 : f32 to vector<2x32xf32>
    %137 = arith.addf %135, %136 : vector<2x32xf32>
    %138 = vector.extract_strided_slice %118 {offsets = [0, 64], sizes = [2, 32], strides = [1, 1]} : vector<2x128xf32> to vector<2x32xf32>
    %139 = math.tanh %138 : vector<2x32xf32>
    %140 = vector.extract_strided_slice %118 {offsets = [0, 96], sizes = [2, 32], strides = [1, 1]} : vector<2x128xf32> to vector<2x32xf32>
    %cst_57 = arith.constant 5.000000e-01 : f32
    %141 = vector.broadcast %cst_57 : f32 to vector<2x32xf32>
    %142 = arith.mulf %141, %140 : vector<2x32xf32>
    %143 = math.tanh %142 : vector<2x32xf32>
    %cst_58 = arith.constant 5.000000e-01 : f32
    %144 = vector.broadcast %cst_58 : f32 to vector<2x32xf32>
    %145 = arith.mulf %144, %143 : vector<2x32xf32>
    %cst_59 = arith.constant 5.000000e-01 : f32
    %146 = vector.broadcast %cst_59 : f32 to vector<2x32xf32>
    %147 = arith.addf %145, %146 : vector<2x32xf32>
    %148 = arith.mulf %137, %64 : vector<2x32xf32>
    %149 = arith.mulf %129, %139 : vector<2x32xf32>
    %150 = arith.addf %148, %149 : vector<2x32xf32>
    %151 = math.tanh %150 : vector<2x32xf32>
    %152 = arith.mulf %147, %151 : vector<2x32xf32>
    %153 = vector.extract_strided_slice %121 {offsets = [0, 0], sizes = [2, 32], strides = [1, 1]} : vector<2x128xf32> to vector<2x32xf32>
    %cst_60 = arith.constant 5.000000e-01 : f32
    %154 = vector.broadcast %cst_60 : f32 to vector<2x32xf32>
    %155 = arith.mulf %154, %153 : vector<2x32xf32>
    %156 = math.tanh %155 : vector<2x32xf32>
    %cst_61 = arith.constant 5.000000e-01 : f32
    %157 = vector.broadcast %cst_61 : f32 to vector<2x32xf32>
    %158 = arith.mulf %157, %156 : vector<2x32xf32>
    %cst_62 = arith.constant 5.000000e-01 : f32
    %159 = vector.broadcast %cst_62 : f32 to vector<2x32xf32>
    %160 = arith.addf %158, %159 : vector<2x32xf32>
    %161 = vector.extract_strided_slice %121 {offsets = [0, 32], sizes = [2, 32], strides = [1, 1]} : vector<2x128xf32> to vector<2x32xf32>
    %cst_63 = arith.constant 5.000000e-01 : f32
    %162 = vector.broadcast %cst_63 : f32 to vector<2x32xf32>
    %163 = arith.mulf %162, %161 : vector<2x32xf32>
    %164 = math.tanh %163 : vector<2x32xf32>
    %cst_64 = arith.constant 5.000000e-01 : f32
    %165 = vector.broadcast %cst_64 : f32 to vector<2x32xf32>
    %166 = arith.mulf %165, %164 : vector<2x32xf32>
    %cst_65 = arith.constant 5.000000e-01 : f32
    %167 = vector.broadcast %cst_65 : f32 to vector<2x32xf32>
    %168 = arith.addf %166, %167 : vector<2x32xf32>
    %169 = vector.extract_strided_slice %121 {offsets = [0, 64], sizes = [2, 32], strides = [1, 1]} : vector<2x128xf32> to vector<2x32xf32>
    %170 = math.tanh %169 : vector<2x32xf32>
    %171 = vector.extract_strided_slice %121 {offsets = [0, 96], sizes = [2, 32], strides = [1, 1]} : vector<2x128xf32> to vector<2x32xf32>
    %cst_66 = arith.constant 5.000000e-01 : f32
    %172 = vector.broadcast %cst_66 : f32 to vector<2x32xf32>
    %173 = arith.mulf %172, %171 : vector<2x32xf32>
    %174 = math.tanh %173 : vector<2x32xf32>
    %cst_67 = arith.constant 5.000000e-01 : f32
    %175 = vector.broadcast %cst_67 : f32 to vector<2x32xf32>
    %176 = arith.mulf %175, %174 : vector<2x32xf32>
    %cst_68 = arith.constant 5.000000e-01 : f32
    %177 = vector.broadcast %cst_68 : f32 to vector<2x32xf32>
    %178 = arith.addf %176, %177 : vector<2x32xf32>
    %179 = arith.mulf %168, %95 : vector<2x32xf32>
    %180 = arith.mulf %160, %170 : vector<2x32xf32>
    %181 = arith.addf %179, %180 : vector<2x32xf32>
    %182 = math.tanh %181 : vector<2x32xf32>
    %183 = arith.mulf %178, %182 : vector<2x32xf32>
    %184 = arith.index_cast %c1_i32 : i32 to index
    %c0_69 = arith.constant 0 : index
    %c0_70 = arith.constant 0 : index
    %185 = vector.load %arg16[%184, %c0_69, %c0_70] : memref<8x2x32xf32, #tpu.memory_space<vmem>>, vector<1x2x32xf32>
    %186 = vector.shape_cast %185 : vector<1x2x32xf32> to vector<2x32xf32>
    %187 = vector.shape_cast %152 : vector<2x32xf32> to vector<1x2x32xf32>
    tpu.vector_store %arg16[%184, %c0_69, %c0_70], %187 {strides = array<i32>} : memref<8x2x32xf32, #tpu.memory_space<vmem>>, vector<1x2x32xf32>,
    %188 = arith.index_cast %106 : i32 to index
    %c0_71 = arith.constant 0 : index
    %c0_72 = arith.constant 0 : index
    %189 = vector.load %arg17[%188, %c0_71, %c0_72] : memref<8x2x32xf32, #tpu.memory_space<vmem>>, vector<1x2x32xf32>
    %190 = vector.shape_cast %189 : vector<1x2x32xf32> to vector<2x32xf32>
    %191 = vector.shape_cast %183 : vector<2x32xf32> to vector<1x2x32xf32>
    tpu.vector_store %arg17[%188, %c0_71, %c0_72], %191 {strides = array<i32>} : memref<8x2x32xf32, #tpu.memory_space<vmem>>, vector<1x2x32xf32>,
    %c2_i32 = arith.constant 2 : i32
    %c7_i32_73 = arith.constant 7 : i32
    %192 = arith.subi %c7_i32_73, %c2_i32 : i32
    %193 = tpu.concatenate %152, %183 in 1 : vector<2x32xf32>, vector<2x32xf32> -> vector<2x64xf32>
    %194 = arith.truncf %193 : vector<2x64xf32> to vector<2x64xbf16>
    %cst_74 = arith.constant dense<0.000000e+00> : vector<2x256xf32>
    %195 = tpu.matmul %194, %11, %cst_74 {dimension_numbers = #tpu.dot_dimension_numbers<[1], [0], [0], [1], [0, 0, 1, 1], [], []>} : vector<2x64xbf16>, vector<64x256xbf16>, vector<2x256xf32> -> vector<2x256xf32>
    %196 = arith.index_cast %c2_i32 : i32 to index
    %c0_75 = arith.constant 0 : index
    %c0_76 = arith.constant 0 : index
    %197 = vector.load %arg15[%196, %c0_75, %c0_76] : memref<8x2x256xf32, #tpu.memory_space<vmem>>, vector<1x2x256xf32>
    %198 = vector.shape_cast %197 : vector<1x2x256xf32> to vector<2x256xf32>
    %199 = arith.index_cast %192 : i32 to index
    %c0_77 = arith.constant 0 : index
    %c0_78 = arith.constant 0 : index
    %200 = vector.load %arg15[%199, %c0_77, %c0_78] : memref<8x2x256xf32, #tpu.memory_space<vmem>>, vector<1x2x256xf32>
    %201 = vector.shape_cast %200 : vector<1x2x256xf32> to vector<2x256xf32>
    %202 = vector.extract_strided_slice %198 {offsets = [0, 0], sizes = [2, 128], strides = [1, 1]} : vector<2x256xf32> to vector<2x128xf32>
    %203 = vector.extract_strided_slice %195 {offsets = [0, 0], sizes = [2, 128], strides = [1, 1]} : vector<2x256xf32> to vector<2x128xf32>
    %204 = arith.addf %202, %203 : vector<2x128xf32>
    %205 = vector.extract_strided_slice %201 {offsets = [0, 128], sizes = [2, 128], strides = [1, 1]} : vector<2x256xf32> to vector<2x128xf32>
    %206 = vector.extract_strided_slice %195 {offsets = [0, 128], sizes = [2, 128], strides = [1, 1]} : vector<2x256xf32> to vector<2x128xf32>
    %207 = arith.addf %205, %206 : vector<2x128xf32>
    %208 = vector.extract_strided_slice %204 {offsets = [0, 0], sizes = [2, 32], strides = [1, 1]} : vector<2x128xf32> to vector<2x32xf32>
    %cst_79 = arith.constant 5.000000e-01 : f32
    %209 = vector.broadcast %cst_79 : f32 to vector<2x32xf32>
    %210 = arith.mulf %209, %208 : vector<2x32xf32>
    %211 = math.tanh %210 : vector<2x32xf32>
    %cst_80 = arith.constant 5.000000e-01 : f32
    %212 = vector.broadcast %cst_80 : f32 to vector<2x32xf32>
    %213 = arith.mulf %212, %211 : vector<2x32xf32>
    %cst_81 = arith.constant 5.000000e-01 : f32
    %214 = vector.broadcast %cst_81 : f32 to vector<2x32xf32>
    %215 = arith.addf %213, %214 : vector<2x32xf32>
    %216 = vector.extract_strided_slice %204 {offsets = [0, 32], sizes = [2, 32], strides = [1, 1]} : vector<2x128xf32> to vector<2x32xf32>
    %cst_82 = arith.constant 5.000000e-01 : f32
    %217 = vector.broadcast %cst_82 : f32 to vector<2x32xf32>
    %218 = arith.mulf %217, %216 : vector<2x32xf32>
    %219 = math.tanh %218 : vector<2x32xf32>
    %cst_83 = arith.constant 5.000000e-01 : f32
    %220 = vector.broadcast %cst_83 : f32 to vector<2x32xf32>
    %221 = arith.mulf %220, %219 : vector<2x32xf32>
    %cst_84 = arith.constant 5.000000e-01 : f32
    %222 = vector.broadcast %cst_84 : f32 to vector<2x32xf32>
    %223 = arith.addf %221, %222 : vector<2x32xf32>
    %224 = vector.extract_strided_slice %204 {offsets = [0, 64], sizes = [2, 32], strides = [1, 1]} : vector<2x128xf32> to vector<2x32xf32>
    %225 = math.tanh %224 : vector<2x32xf32>
    %226 = vector.extract_strided_slice %204 {offsets = [0, 96], sizes = [2, 32], strides = [1, 1]} : vector<2x128xf32> to vector<2x32xf32>
    %cst_85 = arith.constant 5.000000e-01 : f32
    %227 = vector.broadcast %cst_85 : f32 to vector<2x32xf32>
    %228 = arith.mulf %227, %226 : vector<2x32xf32>
    %229 = math.tanh %228 : vector<2x32xf32>
    %cst_86 = arith.constant 5.000000e-01 : f32
    %230 = vector.broadcast %cst_86 : f32 to vector<2x32xf32>
    %231 = arith.mulf %230, %229 : vector<2x32xf32>
    %cst_87 = arith.constant 5.000000e-01 : f32
    %232 = vector.broadcast %cst_87 : f32 to vector<2x32xf32>
    %233 = arith.addf %231, %232 : vector<2x32xf32>
    %234 = arith.mulf %223, %150 : vector<2x32xf32>
    %235 = arith.mulf %215, %225 : vector<2x32xf32>
    %236 = arith.addf %234, %235 : vector<2x32xf32>
    %237 = math.tanh %236 : vector<2x32xf32>
    %238 = arith.mulf %233, %237 : vector<2x32xf32>
    %239 = vector.extract_strided_slice %207 {offsets = [0, 0], sizes = [2, 32], strides = [1, 1]} : vector<2x128xf32> to vector<2x32xf32>
    %cst_88 = arith.constant 5.000000e-01 : f32
    %240 = vector.broadcast %cst_88 : f32 to vector<2x32xf32>
    %241 = arith.mulf %240, %239 : vector<2x32xf32>
    %242 = math.tanh %241 : vector<2x32xf32>
    %cst_89 = arith.constant 5.000000e-01 : f32
    %243 = vector.broadcast %cst_89 : f32 to vector<2x32xf32>
    %244 = arith.mulf %243, %242 : vector<2x32xf32>
    %cst_90 = arith.constant 5.000000e-01 : f32
    %245 = vector.broadcast %cst_90 : f32 to vector<2x32xf32>
    %246 = arith.addf %244, %245 : vector<2x32xf32>
    %247 = vector.extract_strided_slice %207 {offsets = [0, 32], sizes = [2, 32], strides = [1, 1]} : vector<2x128xf32> to vector<2x32xf32>
    %cst_91 = arith.constant 5.000000e-01 : f32
    %248 = vector.broadcast %cst_91 : f32 to vector<2x32xf32>
    %249 = arith.mulf %248, %247 : vector<2x32xf32>
    %250 = math.tanh %249 : vector<2x32xf32>
    %cst_92 = arith.constant 5.000000e-01 : f32
    %251 = vector.broadcast %cst_92 : f32 to vector<2x32xf32>
    %252 = arith.mulf %251, %250 : vector<2x32xf32>
    %cst_93 = arith.constant 5.000000e-01 : f32
    %253 = vector.broadcast %cst_93 : f32 to vector<2x32xf32>
    %254 = arith.addf %252, %253 : vector<2x32xf32>
    %255 = vector.extract_strided_slice %207 {offsets = [0, 64], sizes = [2, 32], strides = [1, 1]} : vector<2x128xf32> to vector<2x32xf32>
    %256 = math.tanh %255 : vector<2x32xf32>
    %257 = vector.extract_strided_slice %207 {offsets = [0, 96], sizes = [2, 32], strides = [1, 1]} : vector<2x128xf32> to vector<2x32xf32>
    %cst_94 = arith.constant 5.000000e-01 : f32
    %258 = vector.broadcast %cst_94 : f32 to vector<2x32xf32>
    %259 = arith.mulf %258, %257 : vector<2x32xf32>
    %260 = math.tanh %259 : vector<2x32xf32>
    %cst_95 = arith.constant 5.000000e-01 : f32
    %261 = vector.broadcast %cst_95 : f32 to vector<2x32xf32>
    %262 = arith.mulf %261, %260 : vector<2x32xf32>
    %cst_96 = arith.constant 5.000000e-01 : f32
    %263 = vector.broadcast %cst_96 : f32 to vector<2x32xf32>
    %264 = arith.addf %262, %263 : vector<2x32xf32>
    %265 = arith.mulf %254, %181 : vector<2x32xf32>
    %266 = arith.mulf %246, %256 : vector<2x32xf32>
    %267 = arith.addf %265, %266 : vector<2x32xf32>
    %268 = math.tanh %267 : vector<2x32xf32>
    %269 = arith.mulf %264, %268 : vector<2x32xf32>
    %270 = arith.index_cast %c2_i32 : i32 to index
    %c0_97 = arith.constant 0 : index
    %c0_98 = arith.constant 0 : index
    %271 = vector.load %arg16[%270, %c0_97, %c0_98] : memref<8x2x32xf32, #tpu.memory_space<vmem>>, vector<1x2x32xf32>
    %272 = vector.shape_cast %271 : vector<1x2x32xf32> to vector<2x32xf32>
    %273 = vector.shape_cast %238 : vector<2x32xf32> to vector<1x2x32xf32>
    tpu.vector_store %arg16[%270, %c0_97, %c0_98], %273 {strides = array<i32>} : memref<8x2x32xf32, #tpu.memory_space<vmem>>, vector<1x2x32xf32>,
    %274 = arith.index_cast %192 : i32 to index
    %c0_99 = arith.constant 0 : index
    %c0_100 = arith.constant 0 : index
    %275 = vector.load %arg17[%274, %c0_99, %c0_100] : memref<8x2x32xf32, #tpu.memory_space<vmem>>, vector<1x2x32xf32>
    %276 = vector.shape_cast %275 : vector<1x2x32xf32> to vector<2x32xf32>
    %277 = vector.shape_cast %269 : vector<2x32xf32> to vector<1x2x32xf32>
    tpu.vector_store %arg17[%274, %c0_99, %c0_100], %277 {strides = array<i32>} : memref<8x2x32xf32, #tpu.memory_space<vmem>>, vector<1x2x32xf32>,
    %c3_i32 = arith.constant 3 : i32
    %c7_i32_101 = arith.constant 7 : i32
    %278 = arith.subi %c7_i32_101, %c3_i32 : i32
    %279 = tpu.concatenate %238, %269 in 1 : vector<2x32xf32>, vector<2x32xf32> -> vector<2x64xf32>
    %280 = arith.truncf %279 : vector<2x64xf32> to vector<2x64xbf16>
    %cst_102 = arith.constant dense<0.000000e+00> : vector<2x256xf32>
    %281 = tpu.matmul %280, %11, %cst_102 {dimension_numbers = #tpu.dot_dimension_numbers<[1], [0], [0], [1], [0, 0, 1, 1], [], []>} : vector<2x64xbf16>, vector<64x256xbf16>, vector<2x256xf32> -> vector<2x256xf32>
    %282 = arith.index_cast %c3_i32 : i32 to index
    %c0_103 = arith.constant 0 : index
    %c0_104 = arith.constant 0 : index
    %283 = vector.load %arg15[%282, %c0_103, %c0_104] : memref<8x2x256xf32, #tpu.memory_space<vmem>>, vector<1x2x256xf32>
    %284 = vector.shape_cast %283 : vector<1x2x256xf32> to vector<2x256xf32>
    %285 = arith.index_cast %278 : i32 to index
    %c0_105 = arith.constant 0 : index
    %c0_106 = arith.constant 0 : index
    %286 = vector.load %arg15[%285, %c0_105, %c0_106] : memref<8x2x256xf32, #tpu.memory_space<vmem>>, vector<1x2x256xf32>
    %287 = vector.shape_cast %286 : vector<1x2x256xf32> to vector<2x256xf32>
    %288 = vector.extract_strided_slice %284 {offsets = [0, 0], sizes = [2, 128], strides = [1, 1]} : vector<2x256xf32> to vector<2x128xf32>
    %289 = vector.extract_strided_slice %281 {offsets = [0, 0], sizes = [2, 128], strides = [1, 1]} : vector<2x256xf32> to vector<2x128xf32>
    %290 = arith.addf %288, %289 : vector<2x128xf32>
    %291 = vector.extract_strided_slice %287 {offsets = [0, 128], sizes = [2, 128], strides = [1, 1]} : vector<2x256xf32> to vector<2x128xf32>
    %292 = vector.extract_strided_slice %281 {offsets = [0, 128], sizes = [2, 128], strides = [1, 1]} : vector<2x256xf32> to vector<2x128xf32>
    %293 = arith.addf %291, %292 : vector<2x128xf32>
    %294 = vector.extract_strided_slice %290 {offsets = [0, 0], sizes = [2, 32], strides = [1, 1]} : vector<2x128xf32> to vector<2x32xf32>
    %cst_107 = arith.constant 5.000000e-01 : f32
    %295 = vector.broadcast %cst_107 : f32 to vector<2x32xf32>
    %296 = arith.mulf %295, %294 : vector<2x32xf32>
    %297 = math.tanh %296 : vector<2x32xf32>
    %cst_108 = arith.constant 5.000000e-01 : f32
    %298 = vector.broadcast %cst_108 : f32 to vector<2x32xf32>
    %299 = arith.mulf %298, %297 : vector<2x32xf32>
    %cst_109 = arith.constant 5.000000e-01 : f32
    %300 = vector.broadcast %cst_109 : f32 to vector<2x32xf32>
    %301 = arith.addf %299, %300 : vector<2x32xf32>
    %302 = vector.extract_strided_slice %290 {offsets = [0, 32], sizes = [2, 32], strides = [1, 1]} : vector<2x128xf32> to vector<2x32xf32>
    %cst_110 = arith.constant 5.000000e-01 : f32
    %303 = vector.broadcast %cst_110 : f32 to vector<2x32xf32>
    %304 = arith.mulf %303, %302 : vector<2x32xf32>
    %305 = math.tanh %304 : vector<2x32xf32>
    %cst_111 = arith.constant 5.000000e-01 : f32
    %306 = vector.broadcast %cst_111 : f32 to vector<2x32xf32>
    %307 = arith.mulf %306, %305 : vector<2x32xf32>
    %cst_112 = arith.constant 5.000000e-01 : f32
    %308 = vector.broadcast %cst_112 : f32 to vector<2x32xf32>
    %309 = arith.addf %307, %308 : vector<2x32xf32>
    %310 = vector.extract_strided_slice %290 {offsets = [0, 64], sizes = [2, 32], strides = [1, 1]} : vector<2x128xf32> to vector<2x32xf32>
    %311 = math.tanh %310 : vector<2x32xf32>
    %312 = vector.extract_strided_slice %290 {offsets = [0, 96], sizes = [2, 32], strides = [1, 1]} : vector<2x128xf32> to vector<2x32xf32>
    %cst_113 = arith.constant 5.000000e-01 : f32
    %313 = vector.broadcast %cst_113 : f32 to vector<2x32xf32>
    %314 = arith.mulf %313, %312 : vector<2x32xf32>
    %315 = math.tanh %314 : vector<2x32xf32>
    %cst_114 = arith.constant 5.000000e-01 : f32
    %316 = vector.broadcast %cst_114 : f32 to vector<2x32xf32>
    %317 = arith.mulf %316, %315 : vector<2x32xf32>
    %cst_115 = arith.constant 5.000000e-01 : f32
    %318 = vector.broadcast %cst_115 : f32 to vector<2x32xf32>
    %319 = arith.addf %317, %318 : vector<2x32xf32>
    %320 = arith.mulf %309, %236 : vector<2x32xf32>
    %321 = arith.mulf %301, %311 : vector<2x32xf32>
    %322 = arith.addf %320, %321 : vector<2x32xf32>
    %323 = math.tanh %322 : vector<2x32xf32>
    %324 = arith.mulf %319, %323 : vector<2x32xf32>
    %325 = vector.extract_strided_slice %293 {offsets = [0, 0], sizes = [2, 32], strides = [1, 1]} : vector<2x128xf32> to vector<2x32xf32>
    %cst_116 = arith.constant 5.000000e-01 : f32
    %326 = vector.broadcast %cst_116 : f32 to vector<2x32xf32>
    %327 = arith.mulf %326, %325 : vector<2x32xf32>
    %328 = math.tanh %327 : vector<2x32xf32>
    %cst_117 = arith.constant 5.000000e-01 : f32
    %329 = vector.broadcast %cst_117 : f32 to vector<2x32xf32>
    %330 = arith.mulf %329, %328 : vector<2x32xf32>
    %cst_118 = arith.constant 5.000000e-01 : f32
    %331 = vector.broadcast %cst_118 : f32 to vector<2x32xf32>
    %332 = arith.addf %330, %331 : vector<2x32xf32>
    %333 = vector.extract_strided_slice %293 {offsets = [0, 32], sizes = [2, 32], strides = [1, 1]} : vector<2x128xf32> to vector<2x32xf32>
    %cst_119 = arith.constant 5.000000e-01 : f32
    %334 = vector.broadcast %cst_119 : f32 to vector<2x32xf32>
    %335 = arith.mulf %334, %333 : vector<2x32xf32>
    %336 = math.tanh %335 : vector<2x32xf32>
    %cst_120 = arith.constant 5.000000e-01 : f32
    %337 = vector.broadcast %cst_120 : f32 to vector<2x32xf32>
    %338 = arith.mulf %337, %336 : vector<2x32xf32>
    %cst_121 = arith.constant 5.000000e-01 : f32
    %339 = vector.broadcast %cst_121 : f32 to vector<2x32xf32>
    %340 = arith.addf %338, %339 : vector<2x32xf32>
    %341 = vector.extract_strided_slice %293 {offsets = [0, 64], sizes = [2, 32], strides = [1, 1]} : vector<2x128xf32> to vector<2x32xf32>
    %342 = math.tanh %341 : vector<2x32xf32>
    %343 = vector.extract_strided_slice %293 {offsets = [0, 96], sizes = [2, 32], strides = [1, 1]} : vector<2x128xf32> to vector<2x32xf32>
    %cst_122 = arith.constant 5.000000e-01 : f32
    %344 = vector.broadcast %cst_122 : f32 to vector<2x32xf32>
    %345 = arith.mulf %344, %343 : vector<2x32xf32>
    %346 = math.tanh %345 : vector<2x32xf32>
    %cst_123 = arith.constant 5.000000e-01 : f32
    %347 = vector.broadcast %cst_123 : f32 to vector<2x32xf32>
    %348 = arith.mulf %347, %346 : vector<2x32xf32>
    %cst_124 = arith.constant 5.000000e-01 : f32
    %349 = vector.broadcast %cst_124 : f32 to vector<2x32xf32>
    %350 = arith.addf %348, %349 : vector<2x32xf32>
    %351 = arith.mulf %340, %267 : vector<2x32xf32>
    %352 = arith.mulf %332, %342 : vector<2x32xf32>
    %353 = arith.addf %351, %352 : vector<2x32xf32>
    %354 = math.tanh %353 : vector<2x32xf32>
    %355 = arith.mulf %350, %354 : vector<2x32xf32>
    %356 = arith.index_cast %c3_i32 : i32 to index
    %c0_125 = arith.constant 0 : index
    %c0_126 = arith.constant 0 : index
    %357 = vector.load %arg16[%356, %c0_125, %c0_126] : memref<8x2x32xf32, #tpu.memory_space<vmem>>, vector<1x2x32xf32>
    %358 = vector.shape_cast %357 : vector<1x2x32xf32> to vector<2x32xf32>
    %359 = vector.shape_cast %324 : vector<2x32xf32> to vector<1x2x32xf32>
    tpu.vector_store %arg16[%356, %c0_125, %c0_126], %359 {strides = array<i32>} : memref<8x2x32xf32, #tpu.memory_space<vmem>>, vector<1x2x32xf32>,
    %360 = arith.index_cast %278 : i32 to index
    %c0_127 = arith.constant 0 : index
    %c0_128 = arith.constant 0 : index
    %361 = vector.load %arg17[%360, %c0_127, %c0_128] : memref<8x2x32xf32, #tpu.memory_space<vmem>>, vector<1x2x32xf32>
    %362 = vector.shape_cast %361 : vector<1x2x32xf32> to vector<2x32xf32>
    %363 = vector.shape_cast %355 : vector<2x32xf32> to vector<1x2x32xf32>
    tpu.vector_store %arg17[%360, %c0_127, %c0_128], %363 {strides = array<i32>} : memref<8x2x32xf32, #tpu.memory_space<vmem>>, vector<1x2x32xf32>,
    %c4_i32 = arith.constant 4 : i32
    %c7_i32_129 = arith.constant 7 : i32
    %364 = arith.subi %c7_i32_129, %c4_i32 : i32
    %365 = tpu.concatenate %324, %355 in 1 : vector<2x32xf32>, vector<2x32xf32> -> vector<2x64xf32>
    %366 = arith.truncf %365 : vector<2x64xf32> to vector<2x64xbf16>
    %cst_130 = arith.constant dense<0.000000e+00> : vector<2x256xf32>
    %367 = tpu.matmul %366, %11, %cst_130 {dimension_numbers = #tpu.dot_dimension_numbers<[1], [0], [0], [1], [0, 0, 1, 1], [], []>} : vector<2x64xbf16>, vector<64x256xbf16>, vector<2x256xf32> -> vector<2x256xf32>
    %368 = arith.index_cast %c4_i32 : i32 to index
    %c0_131 = arith.constant 0 : index
    %c0_132 = arith.constant 0 : index
    %369 = vector.load %arg15[%368, %c0_131, %c0_132] : memref<8x2x256xf32, #tpu.memory_space<vmem>>, vector<1x2x256xf32>
    %370 = vector.shape_cast %369 : vector<1x2x256xf32> to vector<2x256xf32>
    %371 = arith.index_cast %364 : i32 to index
    %c0_133 = arith.constant 0 : index
    %c0_134 = arith.constant 0 : index
    %372 = vector.load %arg15[%371, %c0_133, %c0_134] : memref<8x2x256xf32, #tpu.memory_space<vmem>>, vector<1x2x256xf32>
    %373 = vector.shape_cast %372 : vector<1x2x256xf32> to vector<2x256xf32>
    %374 = vector.extract_strided_slice %370 {offsets = [0, 0], sizes = [2, 128], strides = [1, 1]} : vector<2x256xf32> to vector<2x128xf32>
    %375 = vector.extract_strided_slice %367 {offsets = [0, 0], sizes = [2, 128], strides = [1, 1]} : vector<2x256xf32> to vector<2x128xf32>
    %376 = arith.addf %374, %375 : vector<2x128xf32>
    %377 = vector.extract_strided_slice %373 {offsets = [0, 128], sizes = [2, 128], strides = [1, 1]} : vector<2x256xf32> to vector<2x128xf32>
    %378 = vector.extract_strided_slice %367 {offsets = [0, 128], sizes = [2, 128], strides = [1, 1]} : vector<2x256xf32> to vector<2x128xf32>
    %379 = arith.addf %377, %378 : vector<2x128xf32>
    %380 = vector.extract_strided_slice %376 {offsets = [0, 0], sizes = [2, 32], strides = [1, 1]} : vector<2x128xf32> to vector<2x32xf32>
    %cst_135 = arith.constant 5.000000e-01 : f32
    %381 = vector.broadcast %cst_135 : f32 to vector<2x32xf32>
    %382 = arith.mulf %381, %380 : vector<2x32xf32>
    %383 = math.tanh %382 : vector<2x32xf32>
    %cst_136 = arith.constant 5.000000e-01 : f32
    %384 = vector.broadcast %cst_136 : f32 to vector<2x32xf32>
    %385 = arith.mulf %384, %383 : vector<2x32xf32>
    %cst_137 = arith.constant 5.000000e-01 : f32
    %386 = vector.broadcast %cst_137 : f32 to vector<2x32xf32>
    %387 = arith.addf %385, %386 : vector<2x32xf32>
    %388 = vector.extract_strided_slice %376 {offsets = [0, 32], sizes = [2, 32], strides = [1, 1]} : vector<2x128xf32> to vector<2x32xf32>
    %cst_138 = arith.constant 5.000000e-01 : f32
    %389 = vector.broadcast %cst_138 : f32 to vector<2x32xf32>
    %390 = arith.mulf %389, %388 : vector<2x32xf32>
    %391 = math.tanh %390 : vector<2x32xf32>
    %cst_139 = arith.constant 5.000000e-01 : f32
    %392 = vector.broadcast %cst_139 : f32 to vector<2x32xf32>
    %393 = arith.mulf %392, %391 : vector<2x32xf32>
    %cst_140 = arith.constant 5.000000e-01 : f32
    %394 = vector.broadcast %cst_140 : f32 to vector<2x32xf32>
    %395 = arith.addf %393, %394 : vector<2x32xf32>
    %396 = vector.extract_strided_slice %376 {offsets = [0, 64], sizes = [2, 32], strides = [1, 1]} : vector<2x128xf32> to vector<2x32xf32>
    %397 = math.tanh %396 : vector<2x32xf32>
    %398 = vector.extract_strided_slice %376 {offsets = [0, 96], sizes = [2, 32], strides = [1, 1]} : vector<2x128xf32> to vector<2x32xf32>
    %cst_141 = arith.constant 5.000000e-01 : f32
    %399 = vector.broadcast %cst_141 : f32 to vector<2x32xf32>
    %400 = arith.mulf %399, %398 : vector<2x32xf32>
    %401 = math.tanh %400 : vector<2x32xf32>
    %cst_142 = arith.constant 5.000000e-01 : f32
    %402 = vector.broadcast %cst_142 : f32 to vector<2x32xf32>
    %403 = arith.mulf %402, %401 : vector<2x32xf32>
    %cst_143 = arith.constant 5.000000e-01 : f32
    %404 = vector.broadcast %cst_143 : f32 to vector<2x32xf32>
    %405 = arith.addf %403, %404 : vector<2x32xf32>
    %406 = arith.mulf %395, %322 : vector<2x32xf32>
    %407 = arith.mulf %387, %397 : vector<2x32xf32>
    %408 = arith.addf %406, %407 : vector<2x32xf32>
    %409 = math.tanh %408 : vector<2x32xf32>
    %410 = arith.mulf %405, %409 : vector<2x32xf32>
    %411 = vector.extract_strided_slice %379 {offsets = [0, 0], sizes = [2, 32], strides = [1, 1]} : vector<2x128xf32> to vector<2x32xf32>
    %cst_144 = arith.constant 5.000000e-01 : f32
    %412 = vector.broadcast %cst_144 : f32 to vector<2x32xf32>
    %413 = arith.mulf %412, %411 : vector<2x32xf32>
    %414 = math.tanh %413 : vector<2x32xf32>
    %cst_145 = arith.constant 5.000000e-01 : f32
    %415 = vector.broadcast %cst_145 : f32 to vector<2x32xf32>
    %416 = arith.mulf %415, %414 : vector<2x32xf32>
    %cst_146 = arith.constant 5.000000e-01 : f32
    %417 = vector.broadcast %cst_146 : f32 to vector<2x32xf32>
    %418 = arith.addf %416, %417 : vector<2x32xf32>
    %419 = vector.extract_strided_slice %379 {offsets = [0, 32], sizes = [2, 32], strides = [1, 1]} : vector<2x128xf32> to vector<2x32xf32>
    %cst_147 = arith.constant 5.000000e-01 : f32
    %420 = vector.broadcast %cst_147 : f32 to vector<2x32xf32>
    %421 = arith.mulf %420, %419 : vector<2x32xf32>
    %422 = math.tanh %421 : vector<2x32xf32>
    %cst_148 = arith.constant 5.000000e-01 : f32
    %423 = vector.broadcast %cst_148 : f32 to vector<2x32xf32>
    %424 = arith.mulf %423, %422 : vector<2x32xf32>
    %cst_149 = arith.constant 5.000000e-01 : f32
    %425 = vector.broadcast %cst_149 : f32 to vector<2x32xf32>
    %426 = arith.addf %424, %425 : vector<2x32xf32>
    %427 = vector.extract_strided_slice %379 {offsets = [0, 64], sizes = [2, 32], strides = [1, 1]} : vector<2x128xf32> to vector<2x32xf32>
    %428 = math.tanh %427 : vector<2x32xf32>
    %429 = vector.extract_strided_slice %379 {offsets = [0, 96], sizes = [2, 32], strides = [1, 1]} : vector<2x128xf32> to vector<2x32xf32>
    %cst_150 = arith.constant 5.000000e-01 : f32
    %430 = vector.broadcast %cst_150 : f32 to vector<2x32xf32>
    %431 = arith.mulf %430, %429 : vector<2x32xf32>
    %432 = math.tanh %431 : vector<2x32xf32>
    %cst_151 = arith.constant 5.000000e-01 : f32
    %433 = vector.broadcast %cst_151 : f32 to vector<2x32xf32>
    %434 = arith.mulf %433, %432 : vector<2x32xf32>
    %cst_152 = arith.constant 5.000000e-01 : f32
    %435 = vector.broadcast %cst_152 : f32 to vector<2x32xf32>
    %436 = arith.addf %434, %435 : vector<2x32xf32>
    %437 = arith.mulf %426, %353 : vector<2x32xf32>
    %438 = arith.mulf %418, %428 : vector<2x32xf32>
    %439 = arith.addf %437, %438 : vector<2x32xf32>
    %440 = math.tanh %439 : vector<2x32xf32>
    %441 = arith.mulf %436, %440 : vector<2x32xf32>
    %442 = arith.index_cast %c4_i32 : i32 to index
    %c0_153 = arith.constant 0 : index
    %c0_154 = arith.constant 0 : index
    %443 = vector.load %arg16[%442, %c0_153, %c0_154] : memref<8x2x32xf32, #tpu.memory_space<vmem>>, vector<1x2x32xf32>
    %444 = vector.shape_cast %443 : vector<1x2x32xf32> to vector<2x32xf32>
    %445 = vector.shape_cast %410 : vector<2x32xf32> to vector<1x2x32xf32>
    tpu.vector_store %arg16[%442, %c0_153, %c0_154], %445 {strides = array<i32>} : memref<8x2x32xf32, #tpu.memory_space<vmem>>, vector<1x2x32xf32>,
    %446 = arith.index_cast %364 : i32 to index
    %c0_155 = arith.constant 0 : index
    %c0_156 = arith.constant 0 : index
    %447 = vector.load %arg17[%446, %c0_155, %c0_156] : memref<8x2x32xf32, #tpu.memory_space<vmem>>, vector<1x2x32xf32>
    %448 = vector.shape_cast %447 : vector<1x2x32xf32> to vector<2x32xf32>
    %449 = vector.shape_cast %441 : vector<2x32xf32> to vector<1x2x32xf32>
    tpu.vector_store %arg17[%446, %c0_155, %c0_156], %449 {strides = array<i32>} : memref<8x2x32xf32, #tpu.memory_space<vmem>>, vector<1x2x32xf32>,
    %c5_i32 = arith.constant 5 : i32
    %c7_i32_157 = arith.constant 7 : i32
    %450 = arith.subi %c7_i32_157, %c5_i32 : i32
    %451 = tpu.concatenate %410, %441 in 1 : vector<2x32xf32>, vector<2x32xf32> -> vector<2x64xf32>
    %452 = arith.truncf %451 : vector<2x64xf32> to vector<2x64xbf16>
    %cst_158 = arith.constant dense<0.000000e+00> : vector<2x256xf32>
    %453 = tpu.matmul %452, %11, %cst_158 {dimension_numbers = #tpu.dot_dimension_numbers<[1], [0], [0], [1], [0, 0, 1, 1], [], []>} : vector<2x64xbf16>, vector<64x256xbf16>, vector<2x256xf32> -> vector<2x256xf32>
    %454 = arith.index_cast %c5_i32 : i32 to index
    %c0_159 = arith.constant 0 : index
    %c0_160 = arith.constant 0 : index
    %455 = vector.load %arg15[%454, %c0_159, %c0_160] : memref<8x2x256xf32, #tpu.memory_space<vmem>>, vector<1x2x256xf32>
    %456 = vector.shape_cast %455 : vector<1x2x256xf32> to vector<2x256xf32>
    %457 = arith.index_cast %450 : i32 to index
    %c0_161 = arith.constant 0 : index
    %c0_162 = arith.constant 0 : index
    %458 = vector.load %arg15[%457, %c0_161, %c0_162] : memref<8x2x256xf32, #tpu.memory_space<vmem>>, vector<1x2x256xf32>
    %459 = vector.shape_cast %458 : vector<1x2x256xf32> to vector<2x256xf32>
    %460 = vector.extract_strided_slice %456 {offsets = [0, 0], sizes = [2, 128], strides = [1, 1]} : vector<2x256xf32> to vector<2x128xf32>
    %461 = vector.extract_strided_slice %453 {offsets = [0, 0], sizes = [2, 128], strides = [1, 1]} : vector<2x256xf32> to vector<2x128xf32>
    %462 = arith.addf %460, %461 : vector<2x128xf32>
    %463 = vector.extract_strided_slice %459 {offsets = [0, 128], sizes = [2, 128], strides = [1, 1]} : vector<2x256xf32> to vector<2x128xf32>
    %464 = vector.extract_strided_slice %453 {offsets = [0, 128], sizes = [2, 128], strides = [1, 1]} : vector<2x256xf32> to vector<2x128xf32>
    %465 = arith.addf %463, %464 : vector<2x128xf32>
    %466 = vector.extract_strided_slice %462 {offsets = [0, 0], sizes = [2, 32], strides = [1, 1]} : vector<2x128xf32> to vector<2x32xf32>
    %cst_163 = arith.constant 5.000000e-01 : f32
    %467 = vector.broadcast %cst_163 : f32 to vector<2x32xf32>
    %468 = arith.mulf %467, %466 : vector<2x32xf32>
    %469 = math.tanh %468 : vector<2x32xf32>
    %cst_164 = arith.constant 5.000000e-01 : f32
    %470 = vector.broadcast %cst_164 : f32 to vector<2x32xf32>
    %471 = arith.mulf %470, %469 : vector<2x32xf32>
    %cst_165 = arith.constant 5.000000e-01 : f32
    %472 = vector.broadcast %cst_165 : f32 to vector<2x32xf32>
    %473 = arith.addf %471, %472 : vector<2x32xf32>
    %474 = vector.extract_strided_slice %462 {offsets = [0, 32], sizes = [2, 32], strides = [1, 1]} : vector<2x128xf32> to vector<2x32xf32>
    %cst_166 = arith.constant 5.000000e-01 : f32
    %475 = vector.broadcast %cst_166 : f32 to vector<2x32xf32>
    %476 = arith.mulf %475, %474 : vector<2x32xf32>
    %477 = math.tanh %476 : vector<2x32xf32>
    %cst_167 = arith.constant 5.000000e-01 : f32
    %478 = vector.broadcast %cst_167 : f32 to vector<2x32xf32>
    %479 = arith.mulf %478, %477 : vector<2x32xf32>
    %cst_168 = arith.constant 5.000000e-01 : f32
    %480 = vector.broadcast %cst_168 : f32 to vector<2x32xf32>
    %481 = arith.addf %479, %480 : vector<2x32xf32>
    %482 = vector.extract_strided_slice %462 {offsets = [0, 64], sizes = [2, 32], strides = [1, 1]} : vector<2x128xf32> to vector<2x32xf32>
    %483 = math.tanh %482 : vector<2x32xf32>
    %484 = vector.extract_strided_slice %462 {offsets = [0, 96], sizes = [2, 32], strides = [1, 1]} : vector<2x128xf32> to vector<2x32xf32>
    %cst_169 = arith.constant 5.000000e-01 : f32
    %485 = vector.broadcast %cst_169 : f32 to vector<2x32xf32>
    %486 = arith.mulf %485, %484 : vector<2x32xf32>
    %487 = math.tanh %486 : vector<2x32xf32>
    %cst_170 = arith.constant 5.000000e-01 : f32
    %488 = vector.broadcast %cst_170 : f32 to vector<2x32xf32>
    %489 = arith.mulf %488, %487 : vector<2x32xf32>
    %cst_171 = arith.constant 5.000000e-01 : f32
    %490 = vector.broadcast %cst_171 : f32 to vector<2x32xf32>
    %491 = arith.addf %489, %490 : vector<2x32xf32>
    %492 = arith.mulf %481, %408 : vector<2x32xf32>
    %493 = arith.mulf %473, %483 : vector<2x32xf32>
    %494 = arith.addf %492, %493 : vector<2x32xf32>
    %495 = math.tanh %494 : vector<2x32xf32>
    %496 = arith.mulf %491, %495 : vector<2x32xf32>
    %497 = vector.extract_strided_slice %465 {offsets = [0, 0], sizes = [2, 32], strides = [1, 1]} : vector<2x128xf32> to vector<2x32xf32>
    %cst_172 = arith.constant 5.000000e-01 : f32
    %498 = vector.broadcast %cst_172 : f32 to vector<2x32xf32>
    %499 = arith.mulf %498, %497 : vector<2x32xf32>
    %500 = math.tanh %499 : vector<2x32xf32>
    %cst_173 = arith.constant 5.000000e-01 : f32
    %501 = vector.broadcast %cst_173 : f32 to vector<2x32xf32>
    %502 = arith.mulf %501, %500 : vector<2x32xf32>
    %cst_174 = arith.constant 5.000000e-01 : f32
    %503 = vector.broadcast %cst_174 : f32 to vector<2x32xf32>
    %504 = arith.addf %502, %503 : vector<2x32xf32>
    %505 = vector.extract_strided_slice %465 {offsets = [0, 32], sizes = [2, 32], strides = [1, 1]} : vector<2x128xf32> to vector<2x32xf32>
    %cst_175 = arith.constant 5.000000e-01 : f32
    %506 = vector.broadcast %cst_175 : f32 to vector<2x32xf32>
    %507 = arith.mulf %506, %505 : vector<2x32xf32>
    %508 = math.tanh %507 : vector<2x32xf32>
    %cst_176 = arith.constant 5.000000e-01 : f32
    %509 = vector.broadcast %cst_176 : f32 to vector<2x32xf32>
    %510 = arith.mulf %509, %508 : vector<2x32xf32>
    %cst_177 = arith.constant 5.000000e-01 : f32
    %511 = vector.broadcast %cst_177 : f32 to vector<2x32xf32>
    %512 = arith.addf %510, %511 : vector<2x32xf32>
    %513 = vector.extract_strided_slice %465 {offsets = [0, 64], sizes = [2, 32], strides = [1, 1]} : vector<2x128xf32> to vector<2x32xf32>
    %514 = math.tanh %513 : vector<2x32xf32>
    %515 = vector.extract_strided_slice %465 {offsets = [0, 96], sizes = [2, 32], strides = [1, 1]} : vector<2x128xf32> to vector<2x32xf32>
    %cst_178 = arith.constant 5.000000e-01 : f32
    %516 = vector.broadcast %cst_178 : f32 to vector<2x32xf32>
    %517 = arith.mulf %516, %515 : vector<2x32xf32>
    %518 = math.tanh %517 : vector<2x32xf32>
    %cst_179 = arith.constant 5.000000e-01 : f32
    %519 = vector.broadcast %cst_179 : f32 to vector<2x32xf32>
    %520 = arith.mulf %519, %518 : vector<2x32xf32>
    %cst_180 = arith.constant 5.000000e-01 : f32
    %521 = vector.broadcast %cst_180 : f32 to vector<2x32xf32>
    %522 = arith.addf %520, %521 : vector<2x32xf32>
    %523 = arith.mulf %512, %439 : vector<2x32xf32>
    %524 = arith.mulf %504, %514 : vector<2x32xf32>
    %525 = arith.addf %523, %524 : vector<2x32xf32>
    %526 = math.tanh %525 : vector<2x32xf32>
    %527 = arith.mulf %522, %526 : vector<2x32xf32>
    %528 = arith.index_cast %c5_i32 : i32 to index
    %c0_181 = arith.constant 0 : index
    %c0_182 = arith.constant 0 : index
    %529 = vector.load %arg16[%528, %c0_181, %c0_182] : memref<8x2x32xf32, #tpu.memory_space<vmem>>, vector<1x2x32xf32>
    %530 = vector.shape_cast %529 : vector<1x2x32xf32> to vector<2x32xf32>
    %531 = vector.shape_cast %496 : vector<2x32xf32> to vector<1x2x32xf32>
    tpu.vector_store %arg16[%528, %c0_181, %c0_182], %531 {strides = array<i32>} : memref<8x2x32xf32, #tpu.memory_space<vmem>>, vector<1x2x32xf32>,
    %532 = arith.index_cast %450 : i32 to index
    %c0_183 = arith.constant 0 : index
    %c0_184 = arith.constant 0 : index
    %533 = vector.load %arg17[%532, %c0_183, %c0_184] : memref<8x2x32xf32, #tpu.memory_space<vmem>>, vector<1x2x32xf32>
    %534 = vector.shape_cast %533 : vector<1x2x32xf32> to vector<2x32xf32>
    %535 = vector.shape_cast %527 : vector<2x32xf32> to vector<1x2x32xf32>
    tpu.vector_store %arg17[%532, %c0_183, %c0_184], %535 {strides = array<i32>} : memref<8x2x32xf32, #tpu.memory_space<vmem>>, vector<1x2x32xf32>,
    %c6_i32 = arith.constant 6 : i32
    %c7_i32_185 = arith.constant 7 : i32
    %536 = arith.subi %c7_i32_185, %c6_i32 : i32
    %537 = tpu.concatenate %496, %527 in 1 : vector<2x32xf32>, vector<2x32xf32> -> vector<2x64xf32>
    %538 = arith.truncf %537 : vector<2x64xf32> to vector<2x64xbf16>
    %cst_186 = arith.constant dense<0.000000e+00> : vector<2x256xf32>
    %539 = tpu.matmul %538, %11, %cst_186 {dimension_numbers = #tpu.dot_dimension_numbers<[1], [0], [0], [1], [0, 0, 1, 1], [], []>} : vector<2x64xbf16>, vector<64x256xbf16>, vector<2x256xf32> -> vector<2x256xf32>
    %540 = arith.index_cast %c6_i32 : i32 to index
    %c0_187 = arith.constant 0 : index
    %c0_188 = arith.constant 0 : index
    %541 = vector.load %arg15[%540, %c0_187, %c0_188] : memref<8x2x256xf32, #tpu.memory_space<vmem>>, vector<1x2x256xf32>
    %542 = vector.shape_cast %541 : vector<1x2x256xf32> to vector<2x256xf32>
    %543 = arith.index_cast %536 : i32 to index
    %c0_189 = arith.constant 0 : index
    %c0_190 = arith.constant 0 : index
    %544 = vector.load %arg15[%543, %c0_189, %c0_190] : memref<8x2x256xf32, #tpu.memory_space<vmem>>, vector<1x2x256xf32>
    %545 = vector.shape_cast %544 : vector<1x2x256xf32> to vector<2x256xf32>
    %546 = vector.extract_strided_slice %542 {offsets = [0, 0], sizes = [2, 128], strides = [1, 1]} : vector<2x256xf32> to vector<2x128xf32>
    %547 = vector.extract_strided_slice %539 {offsets = [0, 0], sizes = [2, 128], strides = [1, 1]} : vector<2x256xf32> to vector<2x128xf32>
    %548 = arith.addf %546, %547 : vector<2x128xf32>
    %549 = vector.extract_strided_slice %545 {offsets = [0, 128], sizes = [2, 128], strides = [1, 1]} : vector<2x256xf32> to vector<2x128xf32>
    %550 = vector.extract_strided_slice %539 {offsets = [0, 128], sizes = [2, 128], strides = [1, 1]} : vector<2x256xf32> to vector<2x128xf32>
    %551 = arith.addf %549, %550 : vector<2x128xf32>
    %552 = vector.extract_strided_slice %548 {offsets = [0, 0], sizes = [2, 32], strides = [1, 1]} : vector<2x128xf32> to vector<2x32xf32>
    %cst_191 = arith.constant 5.000000e-01 : f32
    %553 = vector.broadcast %cst_191 : f32 to vector<2x32xf32>
    %554 = arith.mulf %553, %552 : vector<2x32xf32>
    %555 = math.tanh %554 : vector<2x32xf32>
    %cst_192 = arith.constant 5.000000e-01 : f32
    %556 = vector.broadcast %cst_192 : f32 to vector<2x32xf32>
    %557 = arith.mulf %556, %555 : vector<2x32xf32>
    %cst_193 = arith.constant 5.000000e-01 : f32
    %558 = vector.broadcast %cst_193 : f32 to vector<2x32xf32>
    %559 = arith.addf %557, %558 : vector<2x32xf32>
    %560 = vector.extract_strided_slice %548 {offsets = [0, 32], sizes = [2, 32], strides = [1, 1]} : vector<2x128xf32> to vector<2x32xf32>
    %cst_194 = arith.constant 5.000000e-01 : f32
    %561 = vector.broadcast %cst_194 : f32 to vector<2x32xf32>
    %562 = arith.mulf %561, %560 : vector<2x32xf32>
    %563 = math.tanh %562 : vector<2x32xf32>
    %cst_195 = arith.constant 5.000000e-01 : f32
    %564 = vector.broadcast %cst_195 : f32 to vector<2x32xf32>
    %565 = arith.mulf %564, %563 : vector<2x32xf32>
    %cst_196 = arith.constant 5.000000e-01 : f32
    %566 = vector.broadcast %cst_196 : f32 to vector<2x32xf32>
    %567 = arith.addf %565, %566 : vector<2x32xf32>
    %568 = vector.extract_strided_slice %548 {offsets = [0, 64], sizes = [2, 32], strides = [1, 1]} : vector<2x128xf32> to vector<2x32xf32>
    %569 = math.tanh %568 : vector<2x32xf32>
    %570 = vector.extract_strided_slice %548 {offsets = [0, 96], sizes = [2, 32], strides = [1, 1]} : vector<2x128xf32> to vector<2x32xf32>
    %cst_197 = arith.constant 5.000000e-01 : f32
    %571 = vector.broadcast %cst_197 : f32 to vector<2x32xf32>
    %572 = arith.mulf %571, %570 : vector<2x32xf32>
    %573 = math.tanh %572 : vector<2x32xf32>
    %cst_198 = arith.constant 5.000000e-01 : f32
    %574 = vector.broadcast %cst_198 : f32 to vector<2x32xf32>
    %575 = arith.mulf %574, %573 : vector<2x32xf32>
    %cst_199 = arith.constant 5.000000e-01 : f32
    %576 = vector.broadcast %cst_199 : f32 to vector<2x32xf32>
    %577 = arith.addf %575, %576 : vector<2x32xf32>
    %578 = arith.mulf %567, %494 : vector<2x32xf32>
    %579 = arith.mulf %559, %569 : vector<2x32xf32>
    %580 = arith.addf %578, %579 : vector<2x32xf32>
    %581 = math.tanh %580 : vector<2x32xf32>
    %582 = arith.mulf %577, %581 : vector<2x32xf32>
    %583 = vector.extract_strided_slice %551 {offsets = [0, 0], sizes = [2, 32], strides = [1, 1]} : vector<2x128xf32> to vector<2x32xf32>
    %cst_200 = arith.constant 5.000000e-01 : f32
    %584 = vector.broadcast %cst_200 : f32 to vector<2x32xf32>
    %585 = arith.mulf %584, %583 : vector<2x32xf32>
    %586 = math.tanh %585 : vector<2x32xf32>
    %cst_201 = arith.constant 5.000000e-01 : f32
    %587 = vector.broadcast %cst_201 : f32 to vector<2x32xf32>
    %588 = arith.mulf %587, %586 : vector<2x32xf32>
    %cst_202 = arith.constant 5.000000e-01 : f32
    %589 = vector.broadcast %cst_202 : f32 to vector<2x32xf32>
    %590 = arith.addf %588, %589 : vector<2x32xf32>
    %591 = vector.extract_strided_slice %551 {offsets = [0, 32], sizes = [2, 32], strides = [1, 1]} : vector<2x128xf32> to vector<2x32xf32>
    %cst_203 = arith.constant 5.000000e-01 : f32
    %592 = vector.broadcast %cst_203 : f32 to vector<2x32xf32>
    %593 = arith.mulf %592, %591 : vector<2x32xf32>
    %594 = math.tanh %593 : vector<2x32xf32>
    %cst_204 = arith.constant 5.000000e-01 : f32
    %595 = vector.broadcast %cst_204 : f32 to vector<2x32xf32>
    %596 = arith.mulf %595, %594 : vector<2x32xf32>
    %cst_205 = arith.constant 5.000000e-01 : f32
    %597 = vector.broadcast %cst_205 : f32 to vector<2x32xf32>
    %598 = arith.addf %596, %597 : vector<2x32xf32>
    %599 = vector.extract_strided_slice %551 {offsets = [0, 64], sizes = [2, 32], strides = [1, 1]} : vector<2x128xf32> to vector<2x32xf32>
    %600 = math.tanh %599 : vector<2x32xf32>
    %601 = vector.extract_strided_slice %551 {offsets = [0, 96], sizes = [2, 32], strides = [1, 1]} : vector<2x128xf32> to vector<2x32xf32>
    %cst_206 = arith.constant 5.000000e-01 : f32
    %602 = vector.broadcast %cst_206 : f32 to vector<2x32xf32>
    %603 = arith.mulf %602, %601 : vector<2x32xf32>
    %604 = math.tanh %603 : vector<2x32xf32>
    %cst_207 = arith.constant 5.000000e-01 : f32
    %605 = vector.broadcast %cst_207 : f32 to vector<2x32xf32>
    %606 = arith.mulf %605, %604 : vector<2x32xf32>
    %cst_208 = arith.constant 5.000000e-01 : f32
    %607 = vector.broadcast %cst_208 : f32 to vector<2x32xf32>
    %608 = arith.addf %606, %607 : vector<2x32xf32>
    %609 = arith.mulf %598, %525 : vector<2x32xf32>
    %610 = arith.mulf %590, %600 : vector<2x32xf32>
    %611 = arith.addf %609, %610 : vector<2x32xf32>
    %612 = math.tanh %611 : vector<2x32xf32>
    %613 = arith.mulf %608, %612 : vector<2x32xf32>
    %614 = arith.index_cast %c6_i32 : i32 to index
    %c0_209 = arith.constant 0 : index
    %c0_210 = arith.constant 0 : index
    %615 = vector.load %arg16[%614, %c0_209, %c0_210] : memref<8x2x32xf32, #tpu.memory_space<vmem>>, vector<1x2x32xf32>
    %616 = vector.shape_cast %615 : vector<1x2x32xf32> to vector<2x32xf32>
    %617 = vector.shape_cast %582 : vector<2x32xf32> to vector<1x2x32xf32>
    tpu.vector_store %arg16[%614, %c0_209, %c0_210], %617 {strides = array<i32>} : memref<8x2x32xf32, #tpu.memory_space<vmem>>, vector<1x2x32xf32>,
    %618 = arith.index_cast %536 : i32 to index
    %c0_211 = arith.constant 0 : index
    %c0_212 = arith.constant 0 : index
    %619 = vector.load %arg17[%618, %c0_211, %c0_212] : memref<8x2x32xf32, #tpu.memory_space<vmem>>, vector<1x2x32xf32>
    %620 = vector.shape_cast %619 : vector<1x2x32xf32> to vector<2x32xf32>
    %621 = vector.shape_cast %613 : vector<2x32xf32> to vector<1x2x32xf32>
    tpu.vector_store %arg17[%618, %c0_211, %c0_212], %621 {strides = array<i32>} : memref<8x2x32xf32, #tpu.memory_space<vmem>>, vector<1x2x32xf32>,
    %c7_i32_213 = arith.constant 7 : i32
    %c7_i32_214 = arith.constant 7 : i32
    %622 = arith.subi %c7_i32_214, %c7_i32_213 : i32
    %623 = tpu.concatenate %582, %613 in 1 : vector<2x32xf32>, vector<2x32xf32> -> vector<2x64xf32>
    %624 = arith.truncf %623 : vector<2x64xf32> to vector<2x64xbf16>
    %cst_215 = arith.constant dense<0.000000e+00> : vector<2x256xf32>
    %625 = tpu.matmul %624, %11, %cst_215 {dimension_numbers = #tpu.dot_dimension_numbers<[1], [0], [0], [1], [0, 0, 1, 1], [], []>} : vector<2x64xbf16>, vector<64x256xbf16>, vector<2x256xf32> -> vector<2x256xf32>
    %626 = arith.index_cast %c7_i32_213 : i32 to index
    %c0_216 = arith.constant 0 : index
    %c0_217 = arith.constant 0 : index
    %627 = vector.load %arg15[%626, %c0_216, %c0_217] : memref<8x2x256xf32, #tpu.memory_space<vmem>>, vector<1x2x256xf32>
    %628 = vector.shape_cast %627 : vector<1x2x256xf32> to vector<2x256xf32>
    %629 = arith.index_cast %622 : i32 to index
    %c0_218 = arith.constant 0 : index
    %c0_219 = arith.constant 0 : index
    %630 = vector.load %arg15[%629, %c0_218, %c0_219] : memref<8x2x256xf32, #tpu.memory_space<vmem>>, vector<1x2x256xf32>
    %631 = vector.shape_cast %630 : vector<1x2x256xf32> to vector<2x256xf32>
    %632 = vector.extract_strided_slice %628 {offsets = [0, 0], sizes = [2, 128], strides = [1, 1]} : vector<2x256xf32> to vector<2x128xf32>
    %633 = vector.extract_strided_slice %625 {offsets = [0, 0], sizes = [2, 128], strides = [1, 1]} : vector<2x256xf32> to vector<2x128xf32>
    %634 = arith.addf %632, %633 : vector<2x128xf32>
    %635 = vector.extract_strided_slice %631 {offsets = [0, 128], sizes = [2, 128], strides = [1, 1]} : vector<2x256xf32> to vector<2x128xf32>
    %636 = vector.extract_strided_slice %625 {offsets = [0, 128], sizes = [2, 128], strides = [1, 1]} : vector<2x256xf32> to vector<2x128xf32>
    %637 = arith.addf %635, %636 : vector<2x128xf32>
    %638 = vector.extract_strided_slice %634 {offsets = [0, 0], sizes = [2, 32], strides = [1, 1]} : vector<2x128xf32> to vector<2x32xf32>
    %cst_220 = arith.constant 5.000000e-01 : f32
    %639 = vector.broadcast %cst_220 : f32 to vector<2x32xf32>
    %640 = arith.mulf %639, %638 : vector<2x32xf32>
    %641 = math.tanh %640 : vector<2x32xf32>
    %cst_221 = arith.constant 5.000000e-01 : f32
    %642 = vector.broadcast %cst_221 : f32 to vector<2x32xf32>
    %643 = arith.mulf %642, %641 : vector<2x32xf32>
    %cst_222 = arith.constant 5.000000e-01 : f32
    %644 = vector.broadcast %cst_222 : f32 to vector<2x32xf32>
    %645 = arith.addf %643, %644 : vector<2x32xf32>
    %646 = vector.extract_strided_slice %634 {offsets = [0, 32], sizes = [2, 32], strides = [1, 1]} : vector<2x128xf32> to vector<2x32xf32>
    %cst_223 = arith.constant 5.000000e-01 : f32
    %647 = vector.broadcast %cst_223 : f32 to vector<2x32xf32>
    %648 = arith.mulf %647, %646 : vector<2x32xf32>
    %649 = math.tanh %648 : vector<2x32xf32>
    %cst_224 = arith.constant 5.000000e-01 : f32
    %650 = vector.broadcast %cst_224 : f32 to vector<2x32xf32>
    %651 = arith.mulf %650, %649 : vector<2x32xf32>
    %cst_225 = arith.constant 5.000000e-01 : f32
    %652 = vector.broadcast %cst_225 : f32 to vector<2x32xf32>
    %653 = arith.addf %651, %652 : vector<2x32xf32>
    %654 = vector.extract_strided_slice %634 {offsets = [0, 64], sizes = [2, 32], strides = [1, 1]} : vector<2x128xf32> to vector<2x32xf32>
    %655 = math.tanh %654 : vector<2x32xf32>
    %656 = vector.extract_strided_slice %634 {offsets = [0, 96], sizes = [2, 32], strides = [1, 1]} : vector<2x128xf32> to vector<2x32xf32>
    %cst_226 = arith.constant 5.000000e-01 : f32
    %657 = vector.broadcast %cst_226 : f32 to vector<2x32xf32>
    %658 = arith.mulf %657, %656 : vector<2x32xf32>
    %659 = math.tanh %658 : vector<2x32xf32>
    %cst_227 = arith.constant 5.000000e-01 : f32
    %660 = vector.broadcast %cst_227 : f32 to vector<2x32xf32>
    %661 = arith.mulf %660, %659 : vector<2x32xf32>
    %cst_228 = arith.constant 5.000000e-01 : f32
    %662 = vector.broadcast %cst_228 : f32 to vector<2x32xf32>
    %663 = arith.addf %661, %662 : vector<2x32xf32>
    %664 = arith.mulf %653, %580 : vector<2x32xf32>
    %665 = arith.mulf %645, %655 : vector<2x32xf32>
    %666 = arith.addf %664, %665 : vector<2x32xf32>
    %667 = math.tanh %666 : vector<2x32xf32>
    %668 = arith.mulf %663, %667 : vector<2x32xf32>
    %669 = vector.extract_strided_slice %637 {offsets = [0, 0], sizes = [2, 32], strides = [1, 1]} : vector<2x128xf32> to vector<2x32xf32>
    %cst_229 = arith.constant 5.000000e-01 : f32
    %670 = vector.broadcast %cst_229 : f32 to vector<2x32xf32>
    %671 = arith.mulf %670, %669 : vector<2x32xf32>
    %672 = math.tanh %671 : vector<2x32xf32>
    %cst_230 = arith.constant 5.000000e-01 : f32
    %673 = vector.broadcast %cst_230 : f32 to vector<2x32xf32>
    %674 = arith.mulf %673, %672 : vector<2x32xf32>
    %cst_231 = arith.constant 5.000000e-01 : f32
    %675 = vector.broadcast %cst_231 : f32 to vector<2x32xf32>
    %676 = arith.addf %674, %675 : vector<2x32xf32>
    %677 = vector.extract_strided_slice %637 {offsets = [0, 32], sizes = [2, 32], strides = [1, 1]} : vector<2x128xf32> to vector<2x32xf32>
    %cst_232 = arith.constant 5.000000e-01 : f32
    %678 = vector.broadcast %cst_232 : f32 to vector<2x32xf32>
    %679 = arith.mulf %678, %677 : vector<2x32xf32>
    %680 = math.tanh %679 : vector<2x32xf32>
    %cst_233 = arith.constant 5.000000e-01 : f32
    %681 = vector.broadcast %cst_233 : f32 to vector<2x32xf32>
    %682 = arith.mulf %681, %680 : vector<2x32xf32>
    %cst_234 = arith.constant 5.000000e-01 : f32
    %683 = vector.broadcast %cst_234 : f32 to vector<2x32xf32>
    %684 = arith.addf %682, %683 : vector<2x32xf32>
    %685 = vector.extract_strided_slice %637 {offsets = [0, 64], sizes = [2, 32], strides = [1, 1]} : vector<2x128xf32> to vector<2x32xf32>
    %686 = math.tanh %685 : vector<2x32xf32>
    %687 = vector.extract_strided_slice %637 {offsets = [0, 96], sizes = [2, 32], strides = [1, 1]} : vector<2x128xf32> to vector<2x32xf32>
    %cst_235 = arith.constant 5.000000e-01 : f32
    %688 = vector.broadcast %cst_235 : f32 to vector<2x32xf32>
    %689 = arith.mulf %688, %687 : vector<2x32xf32>
    %690 = math.tanh %689 : vector<2x32xf32>
    %cst_236 = arith.constant 5.000000e-01 : f32
    %691 = vector.broadcast %cst_236 : f32 to vector<2x32xf32>
    %692 = arith.mulf %691, %690 : vector<2x32xf32>
    %cst_237 = arith.constant 5.000000e-01 : f32
    %693 = vector.broadcast %cst_237 : f32 to vector<2x32xf32>
    %694 = arith.addf %692, %693 : vector<2x32xf32>
    %695 = arith.mulf %684, %611 : vector<2x32xf32>
    %696 = arith.mulf %676, %686 : vector<2x32xf32>
    %697 = arith.addf %695, %696 : vector<2x32xf32>
    %698 = math.tanh %697 : vector<2x32xf32>
    %699 = arith.mulf %694, %698 : vector<2x32xf32>
    %700 = arith.index_cast %c7_i32_213 : i32 to index
    %c0_238 = arith.constant 0 : index
    %c0_239 = arith.constant 0 : index
    %701 = vector.load %arg16[%700, %c0_238, %c0_239] : memref<8x2x32xf32, #tpu.memory_space<vmem>>, vector<1x2x32xf32>
    %702 = vector.shape_cast %701 : vector<1x2x32xf32> to vector<2x32xf32>
    %703 = vector.shape_cast %668 : vector<2x32xf32> to vector<1x2x32xf32>
    tpu.vector_store %arg16[%700, %c0_238, %c0_239], %703 {strides = array<i32>} : memref<8x2x32xf32, #tpu.memory_space<vmem>>, vector<1x2x32xf32>,
    %704 = arith.index_cast %622 : i32 to index
    %c0_240 = arith.constant 0 : index
    %c0_241 = arith.constant 0 : index
    %705 = vector.load %arg17[%704, %c0_240, %c0_241] : memref<8x2x32xf32, #tpu.memory_space<vmem>>, vector<1x2x32xf32>
    %706 = vector.shape_cast %705 : vector<1x2x32xf32> to vector<2x32xf32>
    %707 = vector.shape_cast %699 : vector<2x32xf32> to vector<1x2x32xf32>
    tpu.vector_store %arg17[%704, %c0_240, %c0_241], %707 {strides = array<i32>} : memref<8x2x32xf32, #tpu.memory_space<vmem>>, vector<1x2x32xf32>,
    %c8_i32 = arith.constant 8 : i32
    %c0_242 = arith.constant 0 : index
    %c0_243 = arith.constant 0 : index
    %c0_244 = arith.constant 0 : index
    %708 = vector.load %arg16[%c0_242, %c0_243, %c0_244] : memref<8x2x32xf32, #tpu.memory_space<vmem>>, vector<8x2x32xf32>
    %c0_245 = arith.constant 0 : index
    %c0_246 = arith.constant 0 : index
    %c0_247 = arith.constant 0 : index
    %709 = vector.load %arg17[%c0_245, %c0_246, %c0_247] : memref<8x2x32xf32, #tpu.memory_space<vmem>>, vector<8x2x32xf32>
    %710 = tpu.concatenate %708, %709 in 2 : vector<8x2x32xf32>, vector<8x2x32xf32> -> vector<8x2x64xf32>
    %711 = vector.shape_cast %710 : vector<8x2x64xf32> to vector<16x64xf32>
    %c0_248 = arith.constant 0 : index
    %c0_249 = arith.constant 0 : index
    %712 = vector.load %arg7[%c0_248, %c0_249] : memref<64x256xbf16, #tpu.memory_space<vmem>>, vector<64x256xbf16>
    %c0_250 = arith.constant 0 : index
    %c0_251 = arith.constant 0 : index
    %713 = vector.load %arg8[%c0_250, %c0_251] : memref<64x256xbf16, #tpu.memory_space<vmem>>, vector<64x256xbf16>
    %c0_252 = arith.constant 0 : index
    %c0_253 = arith.constant 0 : index
    %714 = vector.load %arg9[%c0_252, %c0_253] : memref<1x256xf32, #tpu.memory_space<vmem>>, vector<1x256xf32>
    %715 = arith.truncf %711 : vector<16x64xf32> to vector<16x64xbf16>
    %cst_254 = arith.constant dense<0.000000e+00> : vector<16x256xf32>
    %716 = tpu.matmul %715, %712, %cst_254 {dimension_numbers = #tpu.dot_dimension_numbers<[1], [0], [0], [1], [0, 0, 1, 1], [], []>} : vector<16x64xbf16>, vector<64x256xbf16>, vector<16x256xf32> -> vector<16x256xf32>
    %717 = vector.broadcast %714 : vector<1x256xf32> to vector<16x256xf32>
    %718 = arith.addf %716, %717 : vector<16x256xf32>
    %719 = vector.shape_cast %718 : vector<16x256xf32> to vector<8x2x256xf32>
    %c0_255 = arith.constant 0 : index
    %c0_256 = arith.constant 0 : index
    %c0_257 = arith.constant 0 : index
    %720 = vector.load %arg15[%c0_255, %c0_256, %c0_257] : memref<8x2x256xf32, #tpu.memory_space<vmem>>, vector<8x2x256xf32>
    tpu.vector_store %arg15[%c0_255, %c0_256, %c0_257], %719 {strides = array<i32>} : memref<8x2x256xf32, #tpu.memory_space<vmem>>, vector<8x2x256xf32>,
    %cst_258 = arith.constant 0.000000e+00 : f32
    %721 = vector.broadcast %cst_258 : f32 to vector<2x32xf32>
    %c0_i32_259 = arith.constant 0 : i32
    %c7_i32_260 = arith.constant 7 : i32
    %722 = arith.subi %c7_i32_260, %c0_i32_259 : i32
    %723 = tpu.concatenate %721, %721 in 1 : vector<2x32xf32>, vector<2x32xf32> -> vector<2x64xf32>
    %724 = arith.truncf %723 : vector<2x64xf32> to vector<2x64xbf16>
    %cst_261 = arith.constant dense<0.000000e+00> : vector<2x256xf32>
    %725 = tpu.matmul %724, %713, %cst_261 {dimension_numbers = #tpu.dot_dimension_numbers<[1], [0], [0], [1], [0, 0, 1, 1], [], []>} : vector<2x64xbf16>, vector<64x256xbf16>, vector<2x256xf32> -> vector<2x256xf32>
    %726 = arith.index_cast %c0_i32_259 : i32 to index
    %c0_262 = arith.constant 0 : index
    %c0_263 = arith.constant 0 : index
    %727 = vector.load %arg15[%726, %c0_262, %c0_263] : memref<8x2x256xf32, #tpu.memory_space<vmem>>, vector<1x2x256xf32>
    %728 = vector.shape_cast %727 : vector<1x2x256xf32> to vector<2x256xf32>
    %729 = arith.index_cast %722 : i32 to index
    %c0_264 = arith.constant 0 : index
    %c0_265 = arith.constant 0 : index
    %730 = vector.load %arg15[%729, %c0_264, %c0_265] : memref<8x2x256xf32, #tpu.memory_space<vmem>>, vector<1x2x256xf32>
    %731 = vector.shape_cast %730 : vector<1x2x256xf32> to vector<2x256xf32>
    %732 = vector.extract_strided_slice %728 {offsets = [0, 0], sizes = [2, 128], strides = [1, 1]} : vector<2x256xf32> to vector<2x128xf32>
    %733 = vector.extract_strided_slice %725 {offsets = [0, 0], sizes = [2, 128], strides = [1, 1]} : vector<2x256xf32> to vector<2x128xf32>
    %734 = arith.addf %732, %733 : vector<2x128xf32>
    %735 = vector.extract_strided_slice %731 {offsets = [0, 128], sizes = [2, 128], strides = [1, 1]} : vector<2x256xf32> to vector<2x128xf32>
    %736 = vector.extract_strided_slice %725 {offsets = [0, 128], sizes = [2, 128], strides = [1, 1]} : vector<2x256xf32> to vector<2x128xf32>
    %737 = arith.addf %735, %736 : vector<2x128xf32>
    %738 = vector.extract_strided_slice %734 {offsets = [0, 0], sizes = [2, 32], strides = [1, 1]} : vector<2x128xf32> to vector<2x32xf32>
    %cst_266 = arith.constant 5.000000e-01 : f32
    %739 = vector.broadcast %cst_266 : f32 to vector<2x32xf32>
    %740 = arith.mulf %739, %738 : vector<2x32xf32>
    %741 = math.tanh %740 : vector<2x32xf32>
    %cst_267 = arith.constant 5.000000e-01 : f32
    %742 = vector.broadcast %cst_267 : f32 to vector<2x32xf32>
    %743 = arith.mulf %742, %741 : vector<2x32xf32>
    %cst_268 = arith.constant 5.000000e-01 : f32
    %744 = vector.broadcast %cst_268 : f32 to vector<2x32xf32>
    %745 = arith.addf %743, %744 : vector<2x32xf32>
    %746 = vector.extract_strided_slice %734 {offsets = [0, 32], sizes = [2, 32], strides = [1, 1]} : vector<2x128xf32> to vector<2x32xf32>
    %cst_269 = arith.constant 5.000000e-01 : f32
    %747 = vector.broadcast %cst_269 : f32 to vector<2x32xf32>
    %748 = arith.mulf %747, %746 : vector<2x32xf32>
    %749 = math.tanh %748 : vector<2x32xf32>
    %cst_270 = arith.constant 5.000000e-01 : f32
    %750 = vector.broadcast %cst_270 : f32 to vector<2x32xf32>
    %751 = arith.mulf %750, %749 : vector<2x32xf32>
    %cst_271 = arith.constant 5.000000e-01 : f32
    %752 = vector.broadcast %cst_271 : f32 to vector<2x32xf32>
    %753 = arith.addf %751, %752 : vector<2x32xf32>
    %754 = vector.extract_strided_slice %734 {offsets = [0, 64], sizes = [2, 32], strides = [1, 1]} : vector<2x128xf32> to vector<2x32xf32>
    %755 = math.tanh %754 : vector<2x32xf32>
    %756 = vector.extract_strided_slice %734 {offsets = [0, 96], sizes = [2, 32], strides = [1, 1]} : vector<2x128xf32> to vector<2x32xf32>
    %cst_272 = arith.constant 5.000000e-01 : f32
    %757 = vector.broadcast %cst_272 : f32 to vector<2x32xf32>
    %758 = arith.mulf %757, %756 : vector<2x32xf32>
    %759 = math.tanh %758 : vector<2x32xf32>
    %cst_273 = arith.constant 5.000000e-01 : f32
    %760 = vector.broadcast %cst_273 : f32 to vector<2x32xf32>
    %761 = arith.mulf %760, %759 : vector<2x32xf32>
    %cst_274 = arith.constant 5.000000e-01 : f32
    %762 = vector.broadcast %cst_274 : f32 to vector<2x32xf32>
    %763 = arith.addf %761, %762 : vector<2x32xf32>
    %764 = arith.mulf %753, %721 : vector<2x32xf32>
    %765 = arith.mulf %745, %755 : vector<2x32xf32>
    %766 = arith.addf %764, %765 : vector<2x32xf32>
    %767 = math.tanh %766 : vector<2x32xf32>
    %768 = arith.mulf %763, %767 : vector<2x32xf32>
    %769 = vector.extract_strided_slice %737 {offsets = [0, 0], sizes = [2, 32], strides = [1, 1]} : vector<2x128xf32> to vector<2x32xf32>
    %cst_275 = arith.constant 5.000000e-01 : f32
    %770 = vector.broadcast %cst_275 : f32 to vector<2x32xf32>
    %771 = arith.mulf %770, %769 : vector<2x32xf32>
    %772 = math.tanh %771 : vector<2x32xf32>
    %cst_276 = arith.constant 5.000000e-01 : f32
    %773 = vector.broadcast %cst_276 : f32 to vector<2x32xf32>
    %774 = arith.mulf %773, %772 : vector<2x32xf32>
    %cst_277 = arith.constant 5.000000e-01 : f32
    %775 = vector.broadcast %cst_277 : f32 to vector<2x32xf32>
    %776 = arith.addf %774, %775 : vector<2x32xf32>
    %777 = vector.extract_strided_slice %737 {offsets = [0, 32], sizes = [2, 32], strides = [1, 1]} : vector<2x128xf32> to vector<2x32xf32>
    %cst_278 = arith.constant 5.000000e-01 : f32
    %778 = vector.broadcast %cst_278 : f32 to vector<2x32xf32>
    %779 = arith.mulf %778, %777 : vector<2x32xf32>
    %780 = math.tanh %779 : vector<2x32xf32>
    %cst_279 = arith.constant 5.000000e-01 : f32
    %781 = vector.broadcast %cst_279 : f32 to vector<2x32xf32>
    %782 = arith.mulf %781, %780 : vector<2x32xf32>
    %cst_280 = arith.constant 5.000000e-01 : f32
    %783 = vector.broadcast %cst_280 : f32 to vector<2x32xf32>
    %784 = arith.addf %782, %783 : vector<2x32xf32>
    %785 = vector.extract_strided_slice %737 {offsets = [0, 64], sizes = [2, 32], strides = [1, 1]} : vector<2x128xf32> to vector<2x32xf32>
    %786 = math.tanh %785 : vector<2x32xf32>
    %787 = vector.extract_strided_slice %737 {offsets = [0, 96], sizes = [2, 32], strides = [1, 1]} : vector<2x128xf32> to vector<2x32xf32>
    %cst_281 = arith.constant 5.000000e-01 : f32
    %788 = vector.broadcast %cst_281 : f32 to vector<2x32xf32>
    %789 = arith.mulf %788, %787 : vector<2x32xf32>
    %790 = math.tanh %789 : vector<2x32xf32>
    %cst_282 = arith.constant 5.000000e-01 : f32
    %791 = vector.broadcast %cst_282 : f32 to vector<2x32xf32>
    %792 = arith.mulf %791, %790 : vector<2x32xf32>
    %cst_283 = arith.constant 5.000000e-01 : f32
    %793 = vector.broadcast %cst_283 : f32 to vector<2x32xf32>
    %794 = arith.addf %792, %793 : vector<2x32xf32>
    %795 = arith.mulf %784, %721 : vector<2x32xf32>
    %796 = arith.mulf %776, %786 : vector<2x32xf32>
    %797 = arith.addf %795, %796 : vector<2x32xf32>
    %798 = math.tanh %797 : vector<2x32xf32>
    %799 = arith.mulf %794, %798 : vector<2x32xf32>
    %800 = arith.index_cast %c0_i32_259 : i32 to index
    %c0_284 = arith.constant 0 : index
    %c0_285 = arith.constant 0 : index
    %801 = vector.load %arg16[%800, %c0_284, %c0_285] : memref<8x2x32xf32, #tpu.memory_space<vmem>>, vector<1x2x32xf32>
    %802 = vector.shape_cast %801 : vector<1x2x32xf32> to vector<2x32xf32>
    %803 = vector.shape_cast %768 : vector<2x32xf32> to vector<1x2x32xf32>
    tpu.vector_store %arg16[%800, %c0_284, %c0_285], %803 {strides = array<i32>} : memref<8x2x32xf32, #tpu.memory_space<vmem>>, vector<1x2x32xf32>,
    %804 = arith.index_cast %722 : i32 to index
    %c0_286 = arith.constant 0 : index
    %c0_287 = arith.constant 0 : index
    %805 = vector.load %arg17[%804, %c0_286, %c0_287] : memref<8x2x32xf32, #tpu.memory_space<vmem>>, vector<1x2x32xf32>
    %806 = vector.shape_cast %805 : vector<1x2x32xf32> to vector<2x32xf32>
    %807 = vector.shape_cast %799 : vector<2x32xf32> to vector<1x2x32xf32>
    tpu.vector_store %arg17[%804, %c0_286, %c0_287], %807 {strides = array<i32>} : memref<8x2x32xf32, #tpu.memory_space<vmem>>, vector<1x2x32xf32>,
    %c1_i32_288 = arith.constant 1 : i32
    %c7_i32_289 = arith.constant 7 : i32
    %808 = arith.subi %c7_i32_289, %c1_i32_288 : i32
    %809 = tpu.concatenate %768, %799 in 1 : vector<2x32xf32>, vector<2x32xf32> -> vector<2x64xf32>
    %810 = arith.truncf %809 : vector<2x64xf32> to vector<2x64xbf16>
    %cst_290 = arith.constant dense<0.000000e+00> : vector<2x256xf32>
    %811 = tpu.matmul %810, %713, %cst_290 {dimension_numbers = #tpu.dot_dimension_numbers<[1], [0], [0], [1], [0, 0, 1, 1], [], []>} : vector<2x64xbf16>, vector<64x256xbf16>, vector<2x256xf32> -> vector<2x256xf32>
    %812 = arith.index_cast %c1_i32_288 : i32 to index
    %c0_291 = arith.constant 0 : index
    %c0_292 = arith.constant 0 : index
    %813 = vector.load %arg15[%812, %c0_291, %c0_292] : memref<8x2x256xf32, #tpu.memory_space<vmem>>, vector<1x2x256xf32>
    %814 = vector.shape_cast %813 : vector<1x2x256xf32> to vector<2x256xf32>
    %815 = arith.index_cast %808 : i32 to index
    %c0_293 = arith.constant 0 : index
    %c0_294 = arith.constant 0 : index
    %816 = vector.load %arg15[%815, %c0_293, %c0_294] : memref<8x2x256xf32, #tpu.memory_space<vmem>>, vector<1x2x256xf32>
    %817 = vector.shape_cast %816 : vector<1x2x256xf32> to vector<2x256xf32>
    %818 = vector.extract_strided_slice %814 {offsets = [0, 0], sizes = [2, 128], strides = [1, 1]} : vector<2x256xf32> to vector<2x128xf32>
    %819 = vector.extract_strided_slice %811 {offsets = [0, 0], sizes = [2, 128], strides = [1, 1]} : vector<2x256xf32> to vector<2x128xf32>
    %820 = arith.addf %818, %819 : vector<2x128xf32>
    %821 = vector.extract_strided_slice %817 {offsets = [0, 128], sizes = [2, 128], strides = [1, 1]} : vector<2x256xf32> to vector<2x128xf32>
    %822 = vector.extract_strided_slice %811 {offsets = [0, 128], sizes = [2, 128], strides = [1, 1]} : vector<2x256xf32> to vector<2x128xf32>
    %823 = arith.addf %821, %822 : vector<2x128xf32>
    %824 = vector.extract_strided_slice %820 {offsets = [0, 0], sizes = [2, 32], strides = [1, 1]} : vector<2x128xf32> to vector<2x32xf32>
    %cst_295 = arith.constant 5.000000e-01 : f32
    %825 = vector.broadcast %cst_295 : f32 to vector<2x32xf32>
    %826 = arith.mulf %825, %824 : vector<2x32xf32>
    %827 = math.tanh %826 : vector<2x32xf32>
    %cst_296 = arith.constant 5.000000e-01 : f32
    %828 = vector.broadcast %cst_296 : f32 to vector<2x32xf32>
    %829 = arith.mulf %828, %827 : vector<2x32xf32>
    %cst_297 = arith.constant 5.000000e-01 : f32
    %830 = vector.broadcast %cst_297 : f32 to vector<2x32xf32>
    %831 = arith.addf %829, %830 : vector<2x32xf32>
    %832 = vector.extract_strided_slice %820 {offsets = [0, 32], sizes = [2, 32], strides = [1, 1]} : vector<2x128xf32> to vector<2x32xf32>
    %cst_298 = arith.constant 5.000000e-01 : f32
    %833 = vector.broadcast %cst_298 : f32 to vector<2x32xf32>
    %834 = arith.mulf %833, %832 : vector<2x32xf32>
    %835 = math.tanh %834 : vector<2x32xf32>
    %cst_299 = arith.constant 5.000000e-01 : f32
    %836 = vector.broadcast %cst_299 : f32 to vector<2x32xf32>
    %837 = arith.mulf %836, %835 : vector<2x32xf32>
    %cst_300 = arith.constant 5.000000e-01 : f32
    %838 = vector.broadcast %cst_300 : f32 to vector<2x32xf32>
    %839 = arith.addf %837, %838 : vector<2x32xf32>
    %840 = vector.extract_strided_slice %820 {offsets = [0, 64], sizes = [2, 32], strides = [1, 1]} : vector<2x128xf32> to vector<2x32xf32>
    %841 = math.tanh %840 : vector<2x32xf32>
    %842 = vector.extract_strided_slice %820 {offsets = [0, 96], sizes = [2, 32], strides = [1, 1]} : vector<2x128xf32> to vector<2x32xf32>
    %cst_301 = arith.constant 5.000000e-01 : f32
    %843 = vector.broadcast %cst_301 : f32 to vector<2x32xf32>
    %844 = arith.mulf %843, %842 : vector<2x32xf32>
    %845 = math.tanh %844 : vector<2x32xf32>
    %cst_302 = arith.constant 5.000000e-01 : f32
    %846 = vector.broadcast %cst_302 : f32 to vector<2x32xf32>
    %847 = arith.mulf %846, %845 : vector<2x32xf32>
    %cst_303 = arith.constant 5.000000e-01 : f32
    %848 = vector.broadcast %cst_303 : f32 to vector<2x32xf32>
    %849 = arith.addf %847, %848 : vector<2x32xf32>
    %850 = arith.mulf %839, %766 : vector<2x32xf32>
    %851 = arith.mulf %831, %841 : vector<2x32xf32>
    %852 = arith.addf %850, %851 : vector<2x32xf32>
    %853 = math.tanh %852 : vector<2x32xf32>
    %854 = arith.mulf %849, %853 : vector<2x32xf32>
    %855 = vector.extract_strided_slice %823 {offsets = [0, 0], sizes = [2, 32], strides = [1, 1]} : vector<2x128xf32> to vector<2x32xf32>
    %cst_304 = arith.constant 5.000000e-01 : f32
    %856 = vector.broadcast %cst_304 : f32 to vector<2x32xf32>
    %857 = arith.mulf %856, %855 : vector<2x32xf32>
    %858 = math.tanh %857 : vector<2x32xf32>
    %cst_305 = arith.constant 5.000000e-01 : f32
    %859 = vector.broadcast %cst_305 : f32 to vector<2x32xf32>
    %860 = arith.mulf %859, %858 : vector<2x32xf32>
    %cst_306 = arith.constant 5.000000e-01 : f32
    %861 = vector.broadcast %cst_306 : f32 to vector<2x32xf32>
    %862 = arith.addf %860, %861 : vector<2x32xf32>
    %863 = vector.extract_strided_slice %823 {offsets = [0, 32], sizes = [2, 32], strides = [1, 1]} : vector<2x128xf32> to vector<2x32xf32>
    %cst_307 = arith.constant 5.000000e-01 : f32
    %864 = vector.broadcast %cst_307 : f32 to vector<2x32xf32>
    %865 = arith.mulf %864, %863 : vector<2x32xf32>
    %866 = math.tanh %865 : vector<2x32xf32>
    %cst_308 = arith.constant 5.000000e-01 : f32
    %867 = vector.broadcast %cst_308 : f32 to vector<2x32xf32>
    %868 = arith.mulf %867, %866 : vector<2x32xf32>
    %cst_309 = arith.constant 5.000000e-01 : f32
    %869 = vector.broadcast %cst_309 : f32 to vector<2x32xf32>
    %870 = arith.addf %868, %869 : vector<2x32xf32>
    %871 = vector.extract_strided_slice %823 {offsets = [0, 64], sizes = [2, 32], strides = [1, 1]} : vector<2x128xf32> to vector<2x32xf32>
    %872 = math.tanh %871 : vector<2x32xf32>
    %873 = vector.extract_strided_slice %823 {offsets = [0, 96], sizes = [2, 32], strides = [1, 1]} : vector<2x128xf32> to vector<2x32xf32>
    %cst_310 = arith.constant 5.000000e-01 : f32
    %874 = vector.broadcast %cst_310 : f32 to vector<2x32xf32>
    %875 = arith.mulf %874, %873 : vector<2x32xf32>
    %876 = math.tanh %875 : vector<2x32xf32>
    %cst_311 = arith.constant 5.000000e-01 : f32
    %877 = vector.broadcast %cst_311 : f32 to vector<2x32xf32>
    %878 = arith.mulf %877, %876 : vector<2x32xf32>
    %cst_312 = arith.constant 5.000000e-01 : f32
    %879 = vector.broadcast %cst_312 : f32 to vector<2x32xf32>
    %880 = arith.addf %878, %879 : vector<2x32xf32>
    %881 = arith.mulf %870, %797 : vector<2x32xf32>
    %882 = arith.mulf %862, %872 : vector<2x32xf32>
    %883 = arith.addf %881, %882 : vector<2x32xf32>
    %884 = math.tanh %883 : vector<2x32xf32>
    %885 = arith.mulf %880, %884 : vector<2x32xf32>
    %886 = arith.index_cast %c1_i32_288 : i32 to index
    %c0_313 = arith.constant 0 : index
    %c0_314 = arith.constant 0 : index
    %887 = vector.load %arg16[%886, %c0_313, %c0_314] : memref<8x2x32xf32, #tpu.memory_space<vmem>>, vector<1x2x32xf32>
    %888 = vector.shape_cast %887 : vector<1x2x32xf32> to vector<2x32xf32>
    %889 = vector.shape_cast %854 : vector<2x32xf32> to vector<1x2x32xf32>
    tpu.vector_store %arg16[%886, %c0_313, %c0_314], %889 {strides = array<i32>} : memref<8x2x32xf32, #tpu.memory_space<vmem>>, vector<1x2x32xf32>,
    %890 = arith.index_cast %808 : i32 to index
    %c0_315 = arith.constant 0 : index
    %c0_316 = arith.constant 0 : index
    %891 = vector.load %arg17[%890, %c0_315, %c0_316] : memref<8x2x32xf32, #tpu.memory_space<vmem>>, vector<1x2x32xf32>
    %892 = vector.shape_cast %891 : vector<1x2x32xf32> to vector<2x32xf32>
    %893 = vector.shape_cast %885 : vector<2x32xf32> to vector<1x2x32xf32>
    tpu.vector_store %arg17[%890, %c0_315, %c0_316], %893 {strides = array<i32>} : memref<8x2x32xf32, #tpu.memory_space<vmem>>, vector<1x2x32xf32>,
    %c2_i32_317 = arith.constant 2 : i32
    %c7_i32_318 = arith.constant 7 : i32
    %894 = arith.subi %c7_i32_318, %c2_i32_317 : i32
    %895 = tpu.concatenate %854, %885 in 1 : vector<2x32xf32>, vector<2x32xf32> -> vector<2x64xf32>
    %896 = arith.truncf %895 : vector<2x64xf32> to vector<2x64xbf16>
    %cst_319 = arith.constant dense<0.000000e+00> : vector<2x256xf32>
    %897 = tpu.matmul %896, %713, %cst_319 {dimension_numbers = #tpu.dot_dimension_numbers<[1], [0], [0], [1], [0, 0, 1, 1], [], []>} : vector<2x64xbf16>, vector<64x256xbf16>, vector<2x256xf32> -> vector<2x256xf32>
    %898 = arith.index_cast %c2_i32_317 : i32 to index
    %c0_320 = arith.constant 0 : index
    %c0_321 = arith.constant 0 : index
    %899 = vector.load %arg15[%898, %c0_320, %c0_321] : memref<8x2x256xf32, #tpu.memory_space<vmem>>, vector<1x2x256xf32>
    %900 = vector.shape_cast %899 : vector<1x2x256xf32> to vector<2x256xf32>
    %901 = arith.index_cast %894 : i32 to index
    %c0_322 = arith.constant 0 : index
    %c0_323 = arith.constant 0 : index
    %902 = vector.load %arg15[%901, %c0_322, %c0_323] : memref<8x2x256xf32, #tpu.memory_space<vmem>>, vector<1x2x256xf32>
    %903 = vector.shape_cast %902 : vector<1x2x256xf32> to vector<2x256xf32>
    %904 = vector.extract_strided_slice %900 {offsets = [0, 0], sizes = [2, 128], strides = [1, 1]} : vector<2x256xf32> to vector<2x128xf32>
    %905 = vector.extract_strided_slice %897 {offsets = [0, 0], sizes = [2, 128], strides = [1, 1]} : vector<2x256xf32> to vector<2x128xf32>
    %906 = arith.addf %904, %905 : vector<2x128xf32>
    %907 = vector.extract_strided_slice %903 {offsets = [0, 128], sizes = [2, 128], strides = [1, 1]} : vector<2x256xf32> to vector<2x128xf32>
    %908 = vector.extract_strided_slice %897 {offsets = [0, 128], sizes = [2, 128], strides = [1, 1]} : vector<2x256xf32> to vector<2x128xf32>
    %909 = arith.addf %907, %908 : vector<2x128xf32>
    %910 = vector.extract_strided_slice %906 {offsets = [0, 0], sizes = [2, 32], strides = [1, 1]} : vector<2x128xf32> to vector<2x32xf32>
    %cst_324 = arith.constant 5.000000e-01 : f32
    %911 = vector.broadcast %cst_324 : f32 to vector<2x32xf32>
    %912 = arith.mulf %911, %910 : vector<2x32xf32>
    %913 = math.tanh %912 : vector<2x32xf32>
    %cst_325 = arith.constant 5.000000e-01 : f32
    %914 = vector.broadcast %cst_325 : f32 to vector<2x32xf32>
    %915 = arith.mulf %914, %913 : vector<2x32xf32>
    %cst_326 = arith.constant 5.000000e-01 : f32
    %916 = vector.broadcast %cst_326 : f32 to vector<2x32xf32>
    %917 = arith.addf %915, %916 : vector<2x32xf32>
    %918 = vector.extract_strided_slice %906 {offsets = [0, 32], sizes = [2, 32], strides = [1, 1]} : vector<2x128xf32> to vector<2x32xf32>
    %cst_327 = arith.constant 5.000000e-01 : f32
    %919 = vector.broadcast %cst_327 : f32 to vector<2x32xf32>
    %920 = arith.mulf %919, %918 : vector<2x32xf32>
    %921 = math.tanh %920 : vector<2x32xf32>
    %cst_328 = arith.constant 5.000000e-01 : f32
    %922 = vector.broadcast %cst_328 : f32 to vector<2x32xf32>
    %923 = arith.mulf %922, %921 : vector<2x32xf32>
    %cst_329 = arith.constant 5.000000e-01 : f32
    %924 = vector.broadcast %cst_329 : f32 to vector<2x32xf32>
    %925 = arith.addf %923, %924 : vector<2x32xf32>
    %926 = vector.extract_strided_slice %906 {offsets = [0, 64], sizes = [2, 32], strides = [1, 1]} : vector<2x128xf32> to vector<2x32xf32>
    %927 = math.tanh %926 : vector<2x32xf32>
    %928 = vector.extract_strided_slice %906 {offsets = [0, 96], sizes = [2, 32], strides = [1, 1]} : vector<2x128xf32> to vector<2x32xf32>
    %cst_330 = arith.constant 5.000000e-01 : f32
    %929 = vector.broadcast %cst_330 : f32 to vector<2x32xf32>
    %930 = arith.mulf %929, %928 : vector<2x32xf32>
    %931 = math.tanh %930 : vector<2x32xf32>
    %cst_331 = arith.constant 5.000000e-01 : f32
    %932 = vector.broadcast %cst_331 : f32 to vector<2x32xf32>
    %933 = arith.mulf %932, %931 : vector<2x32xf32>
    %cst_332 = arith.constant 5.000000e-01 : f32
    %934 = vector.broadcast %cst_332 : f32 to vector<2x32xf32>
    %935 = arith.addf %933, %934 : vector<2x32xf32>
    %936 = arith.mulf %925, %852 : vector<2x32xf32>
    %937 = arith.mulf %917, %927 : vector<2x32xf32>
    %938 = arith.addf %936, %937 : vector<2x32xf32>
    %939 = math.tanh %938 : vector<2x32xf32>
    %940 = arith.mulf %935, %939 : vector<2x32xf32>
    %941 = vector.extract_strided_slice %909 {offsets = [0, 0], sizes = [2, 32], strides = [1, 1]} : vector<2x128xf32> to vector<2x32xf32>
    %cst_333 = arith.constant 5.000000e-01 : f32
    %942 = vector.broadcast %cst_333 : f32 to vector<2x32xf32>
    %943 = arith.mulf %942, %941 : vector<2x32xf32>
    %944 = math.tanh %943 : vector<2x32xf32>
    %cst_334 = arith.constant 5.000000e-01 : f32
    %945 = vector.broadcast %cst_334 : f32 to vector<2x32xf32>
    %946 = arith.mulf %945, %944 : vector<2x32xf32>
    %cst_335 = arith.constant 5.000000e-01 : f32
    %947 = vector.broadcast %cst_335 : f32 to vector<2x32xf32>
    %948 = arith.addf %946, %947 : vector<2x32xf32>
    %949 = vector.extract_strided_slice %909 {offsets = [0, 32], sizes = [2, 32], strides = [1, 1]} : vector<2x128xf32> to vector<2x32xf32>
    %cst_336 = arith.constant 5.000000e-01 : f32
    %950 = vector.broadcast %cst_336 : f32 to vector<2x32xf32>
    %951 = arith.mulf %950, %949 : vector<2x32xf32>
    %952 = math.tanh %951 : vector<2x32xf32>
    %cst_337 = arith.constant 5.000000e-01 : f32
    %953 = vector.broadcast %cst_337 : f32 to vector<2x32xf32>
    %954 = arith.mulf %953, %952 : vector<2x32xf32>
    %cst_338 = arith.constant 5.000000e-01 : f32
    %955 = vector.broadcast %cst_338 : f32 to vector<2x32xf32>
    %956 = arith.addf %954, %955 : vector<2x32xf32>
    %957 = vector.extract_strided_slice %909 {offsets = [0, 64], sizes = [2, 32], strides = [1, 1]} : vector<2x128xf32> to vector<2x32xf32>
    %958 = math.tanh %957 : vector<2x32xf32>
    %959 = vector.extract_strided_slice %909 {offsets = [0, 96], sizes = [2, 32], strides = [1, 1]} : vector<2x128xf32> to vector<2x32xf32>
    %cst_339 = arith.constant 5.000000e-01 : f32
    %960 = vector.broadcast %cst_339 : f32 to vector<2x32xf32>
    %961 = arith.mulf %960, %959 : vector<2x32xf32>
    %962 = math.tanh %961 : vector<2x32xf32>
    %cst_340 = arith.constant 5.000000e-01 : f32
    %963 = vector.broadcast %cst_340 : f32 to vector<2x32xf32>
    %964 = arith.mulf %963, %962 : vector<2x32xf32>
    %cst_341 = arith.constant 5.000000e-01 : f32
    %965 = vector.broadcast %cst_341 : f32 to vector<2x32xf32>
    %966 = arith.addf %964, %965 : vector<2x32xf32>
    %967 = arith.mulf %956, %883 : vector<2x32xf32>
    %968 = arith.mulf %948, %958 : vector<2x32xf32>
    %969 = arith.addf %967, %968 : vector<2x32xf32>
    %970 = math.tanh %969 : vector<2x32xf32>
    %971 = arith.mulf %966, %970 : vector<2x32xf32>
    %972 = arith.index_cast %c2_i32_317 : i32 to index
    %c0_342 = arith.constant 0 : index
    %c0_343 = arith.constant 0 : index
    %973 = vector.load %arg16[%972, %c0_342, %c0_343] : memref<8x2x32xf32, #tpu.memory_space<vmem>>, vector<1x2x32xf32>
    %974 = vector.shape_cast %973 : vector<1x2x32xf32> to vector<2x32xf32>
    %975 = vector.shape_cast %940 : vector<2x32xf32> to vector<1x2x32xf32>
    tpu.vector_store %arg16[%972, %c0_342, %c0_343], %975 {strides = array<i32>} : memref<8x2x32xf32, #tpu.memory_space<vmem>>, vector<1x2x32xf32>,
    %976 = arith.index_cast %894 : i32 to index
    %c0_344 = arith.constant 0 : index
    %c0_345 = arith.constant 0 : index
    %977 = vector.load %arg17[%976, %c0_344, %c0_345] : memref<8x2x32xf32, #tpu.memory_space<vmem>>, vector<1x2x32xf32>
    %978 = vector.shape_cast %977 : vector<1x2x32xf32> to vector<2x32xf32>
    %979 = vector.shape_cast %971 : vector<2x32xf32> to vector<1x2x32xf32>
    tpu.vector_store %arg17[%976, %c0_344, %c0_345], %979 {strides = array<i32>} : memref<8x2x32xf32, #tpu.memory_space<vmem>>, vector<1x2x32xf32>,
    %c3_i32_346 = arith.constant 3 : i32
    %c7_i32_347 = arith.constant 7 : i32
    %980 = arith.subi %c7_i32_347, %c3_i32_346 : i32
    %981 = tpu.concatenate %940, %971 in 1 : vector<2x32xf32>, vector<2x32xf32> -> vector<2x64xf32>
    %982 = arith.truncf %981 : vector<2x64xf32> to vector<2x64xbf16>
    %cst_348 = arith.constant dense<0.000000e+00> : vector<2x256xf32>
    %983 = tpu.matmul %982, %713, %cst_348 {dimension_numbers = #tpu.dot_dimension_numbers<[1], [0], [0], [1], [0, 0, 1, 1], [], []>} : vector<2x64xbf16>, vector<64x256xbf16>, vector<2x256xf32> -> vector<2x256xf32>
    %984 = arith.index_cast %c3_i32_346 : i32 to index
    %c0_349 = arith.constant 0 : index
    %c0_350 = arith.constant 0 : index
    %985 = vector.load %arg15[%984, %c0_349, %c0_350] : memref<8x2x256xf32, #tpu.memory_space<vmem>>, vector<1x2x256xf32>
    %986 = vector.shape_cast %985 : vector<1x2x256xf32> to vector<2x256xf32>
    %987 = arith.index_cast %980 : i32 to index
    %c0_351 = arith.constant 0 : index
    %c0_352 = arith.constant 0 : index
    %988 = vector.load %arg15[%987, %c0_351, %c0_352] : memref<8x2x256xf32, #tpu.memory_space<vmem>>, vector<1x2x256xf32>
    %989 = vector.shape_cast %988 : vector<1x2x256xf32> to vector<2x256xf32>
    %990 = vector.extract_strided_slice %986 {offsets = [0, 0], sizes = [2, 128], strides = [1, 1]} : vector<2x256xf32> to vector<2x128xf32>
    %991 = vector.extract_strided_slice %983 {offsets = [0, 0], sizes = [2, 128], strides = [1, 1]} : vector<2x256xf32> to vector<2x128xf32>
    %992 = arith.addf %990, %991 : vector<2x128xf32>
    %993 = vector.extract_strided_slice %989 {offsets = [0, 128], sizes = [2, 128], strides = [1, 1]} : vector<2x256xf32> to vector<2x128xf32>
    %994 = vector.extract_strided_slice %983 {offsets = [0, 128], sizes = [2, 128], strides = [1, 1]} : vector<2x256xf32> to vector<2x128xf32>
    %995 = arith.addf %993, %994 : vector<2x128xf32>
    %996 = vector.extract_strided_slice %992 {offsets = [0, 0], sizes = [2, 32], strides = [1, 1]} : vector<2x128xf32> to vector<2x32xf32>
    %cst_353 = arith.constant 5.000000e-01 : f32
    %997 = vector.broadcast %cst_353 : f32 to vector<2x32xf32>
    %998 = arith.mulf %997, %996 : vector<2x32xf32>
    %999 = math.tanh %998 : vector<2x32xf32>
    %cst_354 = arith.constant 5.000000e-01 : f32
    %1000 = vector.broadcast %cst_354 : f32 to vector<2x32xf32>
    %1001 = arith.mulf %1000, %999 : vector<2x32xf32>
    %cst_355 = arith.constant 5.000000e-01 : f32
    %1002 = vector.broadcast %cst_355 : f32 to vector<2x32xf32>
    %1003 = arith.addf %1001, %1002 : vector<2x32xf32>
    %1004 = vector.extract_strided_slice %992 {offsets = [0, 32], sizes = [2, 32], strides = [1, 1]} : vector<2x128xf32> to vector<2x32xf32>
    %cst_356 = arith.constant 5.000000e-01 : f32
    %1005 = vector.broadcast %cst_356 : f32 to vector<2x32xf32>
    %1006 = arith.mulf %1005, %1004 : vector<2x32xf32>
    %1007 = math.tanh %1006 : vector<2x32xf32>
    %cst_357 = arith.constant 5.000000e-01 : f32
    %1008 = vector.broadcast %cst_357 : f32 to vector<2x32xf32>
    %1009 = arith.mulf %1008, %1007 : vector<2x32xf32>
    %cst_358 = arith.constant 5.000000e-01 : f32
    %1010 = vector.broadcast %cst_358 : f32 to vector<2x32xf32>
    %1011 = arith.addf %1009, %1010 : vector<2x32xf32>
    %1012 = vector.extract_strided_slice %992 {offsets = [0, 64], sizes = [2, 32], strides = [1, 1]} : vector<2x128xf32> to vector<2x32xf32>
    %1013 = math.tanh %1012 : vector<2x32xf32>
    %1014 = vector.extract_strided_slice %992 {offsets = [0, 96], sizes = [2, 32], strides = [1, 1]} : vector<2x128xf32> to vector<2x32xf32>
    %cst_359 = arith.constant 5.000000e-01 : f32
    %1015 = vector.broadcast %cst_359 : f32 to vector<2x32xf32>
    %1016 = arith.mulf %1015, %1014 : vector<2x32xf32>
    %1017 = math.tanh %1016 : vector<2x32xf32>
    %cst_360 = arith.constant 5.000000e-01 : f32
    %1018 = vector.broadcast %cst_360 : f32 to vector<2x32xf32>
    %1019 = arith.mulf %1018, %1017 : vector<2x32xf32>
    %cst_361 = arith.constant 5.000000e-01 : f32
    %1020 = vector.broadcast %cst_361 : f32 to vector<2x32xf32>
    %1021 = arith.addf %1019, %1020 : vector<2x32xf32>
    %1022 = arith.mulf %1011, %938 : vector<2x32xf32>
    %1023 = arith.mulf %1003, %1013 : vector<2x32xf32>
    %1024 = arith.addf %1022, %1023 : vector<2x32xf32>
    %1025 = math.tanh %1024 : vector<2x32xf32>
    %1026 = arith.mulf %1021, %1025 : vector<2x32xf32>
    %1027 = vector.extract_strided_slice %995 {offsets = [0, 0], sizes = [2, 32], strides = [1, 1]} : vector<2x128xf32> to vector<2x32xf32>
    %cst_362 = arith.constant 5.000000e-01 : f32
    %1028 = vector.broadcast %cst_362 : f32 to vector<2x32xf32>
    %1029 = arith.mulf %1028, %1027 : vector<2x32xf32>
    %1030 = math.tanh %1029 : vector<2x32xf32>
    %cst_363 = arith.constant 5.000000e-01 : f32
    %1031 = vector.broadcast %cst_363 : f32 to vector<2x32xf32>
    %1032 = arith.mulf %1031, %1030 : vector<2x32xf32>
    %cst_364 = arith.constant 5.000000e-01 : f32
    %1033 = vector.broadcast %cst_364 : f32 to vector<2x32xf32>
    %1034 = arith.addf %1032, %1033 : vector<2x32xf32>
    %1035 = vector.extract_strided_slice %995 {offsets = [0, 32], sizes = [2, 32], strides = [1, 1]} : vector<2x128xf32> to vector<2x32xf32>
    %cst_365 = arith.constant 5.000000e-01 : f32
    %1036 = vector.broadcast %cst_365 : f32 to vector<2x32xf32>
    %1037 = arith.mulf %1036, %1035 : vector<2x32xf32>
    %1038 = math.tanh %1037 : vector<2x32xf32>
    %cst_366 = arith.constant 5.000000e-01 : f32
    %1039 = vector.broadcast %cst_366 : f32 to vector<2x32xf32>
    %1040 = arith.mulf %1039, %1038 : vector<2x32xf32>
    %cst_367 = arith.constant 5.000000e-01 : f32
    %1041 = vector.broadcast %cst_367 : f32 to vector<2x32xf32>
    %1042 = arith.addf %1040, %1041 : vector<2x32xf32>
    %1043 = vector.extract_strided_slice %995 {offsets = [0, 64], sizes = [2, 32], strides = [1, 1]} : vector<2x128xf32> to vector<2x32xf32>
    %1044 = math.tanh %1043 : vector<2x32xf32>
    %1045 = vector.extract_strided_slice %995 {offsets = [0, 96], sizes = [2, 32], strides = [1, 1]} : vector<2x128xf32> to vector<2x32xf32>
    %cst_368 = arith.constant 5.000000e-01 : f32
    %1046 = vector.broadcast %cst_368 : f32 to vector<2x32xf32>
    %1047 = arith.mulf %1046, %1045 : vector<2x32xf32>
    %1048 = math.tanh %1047 : vector<2x32xf32>
    %cst_369 = arith.constant 5.000000e-01 : f32
    %1049 = vector.broadcast %cst_369 : f32 to vector<2x32xf32>
    %1050 = arith.mulf %1049, %1048 : vector<2x32xf32>
    %cst_370 = arith.constant 5.000000e-01 : f32
    %1051 = vector.broadcast %cst_370 : f32 to vector<2x32xf32>
    %1052 = arith.addf %1050, %1051 : vector<2x32xf32>
    %1053 = arith.mulf %1042, %969 : vector<2x32xf32>
    %1054 = arith.mulf %1034, %1044 : vector<2x32xf32>
    %1055 = arith.addf %1053, %1054 : vector<2x32xf32>
    %1056 = math.tanh %1055 : vector<2x32xf32>
    %1057 = arith.mulf %1052, %1056 : vector<2x32xf32>
    %1058 = arith.index_cast %c3_i32_346 : i32 to index
    %c0_371 = arith.constant 0 : index
    %c0_372 = arith.constant 0 : index
    %1059 = vector.load %arg16[%1058, %c0_371, %c0_372] : memref<8x2x32xf32, #tpu.memory_space<vmem>>, vector<1x2x32xf32>
    %1060 = vector.shape_cast %1059 : vector<1x2x32xf32> to vector<2x32xf32>
    %1061 = vector.shape_cast %1026 : vector<2x32xf32> to vector<1x2x32xf32>
    tpu.vector_store %arg16[%1058, %c0_371, %c0_372], %1061 {strides = array<i32>} : memref<8x2x32xf32, #tpu.memory_space<vmem>>, vector<1x2x32xf32>,
    %1062 = arith.index_cast %980 : i32 to index
    %c0_373 = arith.constant 0 : index
    %c0_374 = arith.constant 0 : index
    %1063 = vector.load %arg17[%1062, %c0_373, %c0_374] : memref<8x2x32xf32, #tpu.memory_space<vmem>>, vector<1x2x32xf32>
    %1064 = vector.shape_cast %1063 : vector<1x2x32xf32> to vector<2x32xf32>
    %1065 = vector.shape_cast %1057 : vector<2x32xf32> to vector<1x2x32xf32>
    tpu.vector_store %arg17[%1062, %c0_373, %c0_374], %1065 {strides = array<i32>} : memref<8x2x32xf32, #tpu.memory_space<vmem>>, vector<1x2x32xf32>,
    %c4_i32_375 = arith.constant 4 : i32
    %c7_i32_376 = arith.constant 7 : i32
    %1066 = arith.subi %c7_i32_376, %c4_i32_375 : i32
    %1067 = tpu.concatenate %1026, %1057 in 1 : vector<2x32xf32>, vector<2x32xf32> -> vector<2x64xf32>
    %1068 = arith.truncf %1067 : vector<2x64xf32> to vector<2x64xbf16>
    %cst_377 = arith.constant dense<0.000000e+00> : vector<2x256xf32>
    %1069 = tpu.matmul %1068, %713, %cst_377 {dimension_numbers = #tpu.dot_dimension_numbers<[1], [0], [0], [1], [0, 0, 1, 1], [], []>} : vector<2x64xbf16>, vector<64x256xbf16>, vector<2x256xf32> -> vector<2x256xf32>
    %1070 = arith.index_cast %c4_i32_375 : i32 to index
    %c0_378 = arith.constant 0 : index
    %c0_379 = arith.constant 0 : index
    %1071 = vector.load %arg15[%1070, %c0_378, %c0_379] : memref<8x2x256xf32, #tpu.memory_space<vmem>>, vector<1x2x256xf32>
    %1072 = vector.shape_cast %1071 : vector<1x2x256xf32> to vector<2x256xf32>
    %1073 = arith.index_cast %1066 : i32 to index
    %c0_380 = arith.constant 0 : index
    %c0_381 = arith.constant 0 : index
    %1074 = vector.load %arg15[%1073, %c0_380, %c0_381] : memref<8x2x256xf32, #tpu.memory_space<vmem>>, vector<1x2x256xf32>
    %1075 = vector.shape_cast %1074 : vector<1x2x256xf32> to vector<2x256xf32>
    %1076 = vector.extract_strided_slice %1072 {offsets = [0, 0], sizes = [2, 128], strides = [1, 1]} : vector<2x256xf32> to vector<2x128xf32>
    %1077 = vector.extract_strided_slice %1069 {offsets = [0, 0], sizes = [2, 128], strides = [1, 1]} : vector<2x256xf32> to vector<2x128xf32>
    %1078 = arith.addf %1076, %1077 : vector<2x128xf32>
    %1079 = vector.extract_strided_slice %1075 {offsets = [0, 128], sizes = [2, 128], strides = [1, 1]} : vector<2x256xf32> to vector<2x128xf32>
    %1080 = vector.extract_strided_slice %1069 {offsets = [0, 128], sizes = [2, 128], strides = [1, 1]} : vector<2x256xf32> to vector<2x128xf32>
    %1081 = arith.addf %1079, %1080 : vector<2x128xf32>
    %1082 = vector.extract_strided_slice %1078 {offsets = [0, 0], sizes = [2, 32], strides = [1, 1]} : vector<2x128xf32> to vector<2x32xf32>
    %cst_382 = arith.constant 5.000000e-01 : f32
    %1083 = vector.broadcast %cst_382 : f32 to vector<2x32xf32>
    %1084 = arith.mulf %1083, %1082 : vector<2x32xf32>
    %1085 = math.tanh %1084 : vector<2x32xf32>
    %cst_383 = arith.constant 5.000000e-01 : f32
    %1086 = vector.broadcast %cst_383 : f32 to vector<2x32xf32>
    %1087 = arith.mulf %1086, %1085 : vector<2x32xf32>
    %cst_384 = arith.constant 5.000000e-01 : f32
    %1088 = vector.broadcast %cst_384 : f32 to vector<2x32xf32>
    %1089 = arith.addf %1087, %1088 : vector<2x32xf32>
    %1090 = vector.extract_strided_slice %1078 {offsets = [0, 32], sizes = [2, 32], strides = [1, 1]} : vector<2x128xf32> to vector<2x32xf32>
    %cst_385 = arith.constant 5.000000e-01 : f32
    %1091 = vector.broadcast %cst_385 : f32 to vector<2x32xf32>
    %1092 = arith.mulf %1091, %1090 : vector<2x32xf32>
    %1093 = math.tanh %1092 : vector<2x32xf32>
    %cst_386 = arith.constant 5.000000e-01 : f32
    %1094 = vector.broadcast %cst_386 : f32 to vector<2x32xf32>
    %1095 = arith.mulf %1094, %1093 : vector<2x32xf32>
    %cst_387 = arith.constant 5.000000e-01 : f32
    %1096 = vector.broadcast %cst_387 : f32 to vector<2x32xf32>
    %1097 = arith.addf %1095, %1096 : vector<2x32xf32>
    %1098 = vector.extract_strided_slice %1078 {offsets = [0, 64], sizes = [2, 32], strides = [1, 1]} : vector<2x128xf32> to vector<2x32xf32>
    %1099 = math.tanh %1098 : vector<2x32xf32>
    %1100 = vector.extract_strided_slice %1078 {offsets = [0, 96], sizes = [2, 32], strides = [1, 1]} : vector<2x128xf32> to vector<2x32xf32>
    %cst_388 = arith.constant 5.000000e-01 : f32
    %1101 = vector.broadcast %cst_388 : f32 to vector<2x32xf32>
    %1102 = arith.mulf %1101, %1100 : vector<2x32xf32>
    %1103 = math.tanh %1102 : vector<2x32xf32>
    %cst_389 = arith.constant 5.000000e-01 : f32
    %1104 = vector.broadcast %cst_389 : f32 to vector<2x32xf32>
    %1105 = arith.mulf %1104, %1103 : vector<2x32xf32>
    %cst_390 = arith.constant 5.000000e-01 : f32
    %1106 = vector.broadcast %cst_390 : f32 to vector<2x32xf32>
    %1107 = arith.addf %1105, %1106 : vector<2x32xf32>
    %1108 = arith.mulf %1097, %1024 : vector<2x32xf32>
    %1109 = arith.mulf %1089, %1099 : vector<2x32xf32>
    %1110 = arith.addf %1108, %1109 : vector<2x32xf32>
    %1111 = math.tanh %1110 : vector<2x32xf32>
    %1112 = arith.mulf %1107, %1111 : vector<2x32xf32>
    %1113 = vector.extract_strided_slice %1081 {offsets = [0, 0], sizes = [2, 32], strides = [1, 1]} : vector<2x128xf32> to vector<2x32xf32>
    %cst_391 = arith.constant 5.000000e-01 : f32
    %1114 = vector.broadcast %cst_391 : f32 to vector<2x32xf32>
    %1115 = arith.mulf %1114, %1113 : vector<2x32xf32>
    %1116 = math.tanh %1115 : vector<2x32xf32>
    %cst_392 = arith.constant 5.000000e-01 : f32
    %1117 = vector.broadcast %cst_392 : f32 to vector<2x32xf32>
    %1118 = arith.mulf %1117, %1116 : vector<2x32xf32>
    %cst_393 = arith.constant 5.000000e-01 : f32
    %1119 = vector.broadcast %cst_393 : f32 to vector<2x32xf32>
    %1120 = arith.addf %1118, %1119 : vector<2x32xf32>
    %1121 = vector.extract_strided_slice %1081 {offsets = [0, 32], sizes = [2, 32], strides = [1, 1]} : vector<2x128xf32> to vector<2x32xf32>
    %cst_394 = arith.constant 5.000000e-01 : f32
    %1122 = vector.broadcast %cst_394 : f32 to vector<2x32xf32>
    %1123 = arith.mulf %1122, %1121 : vector<2x32xf32>
    %1124 = math.tanh %1123 : vector<2x32xf32>
    %cst_395 = arith.constant 5.000000e-01 : f32
    %1125 = vector.broadcast %cst_395 : f32 to vector<2x32xf32>
    %1126 = arith.mulf %1125, %1124 : vector<2x32xf32>
    %cst_396 = arith.constant 5.000000e-01 : f32
    %1127 = vector.broadcast %cst_396 : f32 to vector<2x32xf32>
    %1128 = arith.addf %1126, %1127 : vector<2x32xf32>
    %1129 = vector.extract_strided_slice %1081 {offsets = [0, 64], sizes = [2, 32], strides = [1, 1]} : vector<2x128xf32> to vector<2x32xf32>
    %1130 = math.tanh %1129 : vector<2x32xf32>
    %1131 = vector.extract_strided_slice %1081 {offsets = [0, 96], sizes = [2, 32], strides = [1, 1]} : vector<2x128xf32> to vector<2x32xf32>
    %cst_397 = arith.constant 5.000000e-01 : f32
    %1132 = vector.broadcast %cst_397 : f32 to vector<2x32xf32>
    %1133 = arith.mulf %1132, %1131 : vector<2x32xf32>
    %1134 = math.tanh %1133 : vector<2x32xf32>
    %cst_398 = arith.constant 5.000000e-01 : f32
    %1135 = vector.broadcast %cst_398 : f32 to vector<2x32xf32>
    %1136 = arith.mulf %1135, %1134 : vector<2x32xf32>
    %cst_399 = arith.constant 5.000000e-01 : f32
    %1137 = vector.broadcast %cst_399 : f32 to vector<2x32xf32>
    %1138 = arith.addf %1136, %1137 : vector<2x32xf32>
    %1139 = arith.mulf %1128, %1055 : vector<2x32xf32>
    %1140 = arith.mulf %1120, %1130 : vector<2x32xf32>
    %1141 = arith.addf %1139, %1140 : vector<2x32xf32>
    %1142 = math.tanh %1141 : vector<2x32xf32>
    %1143 = arith.mulf %1138, %1142 : vector<2x32xf32>
    %1144 = arith.index_cast %c4_i32_375 : i32 to index
    %c0_400 = arith.constant 0 : index
    %c0_401 = arith.constant 0 : index
    %1145 = vector.load %arg16[%1144, %c0_400, %c0_401] : memref<8x2x32xf32, #tpu.memory_space<vmem>>, vector<1x2x32xf32>
    %1146 = vector.shape_cast %1145 : vector<1x2x32xf32> to vector<2x32xf32>
    %1147 = vector.shape_cast %1112 : vector<2x32xf32> to vector<1x2x32xf32>
    tpu.vector_store %arg16[%1144, %c0_400, %c0_401], %1147 {strides = array<i32>} : memref<8x2x32xf32, #tpu.memory_space<vmem>>, vector<1x2x32xf32>,
    %1148 = arith.index_cast %1066 : i32 to index
    %c0_402 = arith.constant 0 : index
    %c0_403 = arith.constant 0 : index
    %1149 = vector.load %arg17[%1148, %c0_402, %c0_403] : memref<8x2x32xf32, #tpu.memory_space<vmem>>, vector<1x2x32xf32>
    %1150 = vector.shape_cast %1149 : vector<1x2x32xf32> to vector<2x32xf32>
    %1151 = vector.shape_cast %1143 : vector<2x32xf32> to vector<1x2x32xf32>
    tpu.vector_store %arg17[%1148, %c0_402, %c0_403], %1151 {strides = array<i32>} : memref<8x2x32xf32, #tpu.memory_space<vmem>>, vector<1x2x32xf32>,
    %c5_i32_404 = arith.constant 5 : i32
    %c7_i32_405 = arith.constant 7 : i32
    %1152 = arith.subi %c7_i32_405, %c5_i32_404 : i32
    %1153 = tpu.concatenate %1112, %1143 in 1 : vector<2x32xf32>, vector<2x32xf32> -> vector<2x64xf32>
    %1154 = arith.truncf %1153 : vector<2x64xf32> to vector<2x64xbf16>
    %cst_406 = arith.constant dense<0.000000e+00> : vector<2x256xf32>
    %1155 = tpu.matmul %1154, %713, %cst_406 {dimension_numbers = #tpu.dot_dimension_numbers<[1], [0], [0], [1], [0, 0, 1, 1], [], []>} : vector<2x64xbf16>, vector<64x256xbf16>, vector<2x256xf32> -> vector<2x256xf32>
    %1156 = arith.index_cast %c5_i32_404 : i32 to index
    %c0_407 = arith.constant 0 : index
    %c0_408 = arith.constant 0 : index
    %1157 = vector.load %arg15[%1156, %c0_407, %c0_408] : memref<8x2x256xf32, #tpu.memory_space<vmem>>, vector<1x2x256xf32>
    %1158 = vector.shape_cast %1157 : vector<1x2x256xf32> to vector<2x256xf32>
    %1159 = arith.index_cast %1152 : i32 to index
    %c0_409 = arith.constant 0 : index
    %c0_410 = arith.constant 0 : index
    %1160 = vector.load %arg15[%1159, %c0_409, %c0_410] : memref<8x2x256xf32, #tpu.memory_space<vmem>>, vector<1x2x256xf32>
    %1161 = vector.shape_cast %1160 : vector<1x2x256xf32> to vector<2x256xf32>
    %1162 = vector.extract_strided_slice %1158 {offsets = [0, 0], sizes = [2, 128], strides = [1, 1]} : vector<2x256xf32> to vector<2x128xf32>
    %1163 = vector.extract_strided_slice %1155 {offsets = [0, 0], sizes = [2, 128], strides = [1, 1]} : vector<2x256xf32> to vector<2x128xf32>
    %1164 = arith.addf %1162, %1163 : vector<2x128xf32>
    %1165 = vector.extract_strided_slice %1161 {offsets = [0, 128], sizes = [2, 128], strides = [1, 1]} : vector<2x256xf32> to vector<2x128xf32>
    %1166 = vector.extract_strided_slice %1155 {offsets = [0, 128], sizes = [2, 128], strides = [1, 1]} : vector<2x256xf32> to vector<2x128xf32>
    %1167 = arith.addf %1165, %1166 : vector<2x128xf32>
    %1168 = vector.extract_strided_slice %1164 {offsets = [0, 0], sizes = [2, 32], strides = [1, 1]} : vector<2x128xf32> to vector<2x32xf32>
    %cst_411 = arith.constant 5.000000e-01 : f32
    %1169 = vector.broadcast %cst_411 : f32 to vector<2x32xf32>
    %1170 = arith.mulf %1169, %1168 : vector<2x32xf32>
    %1171 = math.tanh %1170 : vector<2x32xf32>
    %cst_412 = arith.constant 5.000000e-01 : f32
    %1172 = vector.broadcast %cst_412 : f32 to vector<2x32xf32>
    %1173 = arith.mulf %1172, %1171 : vector<2x32xf32>
    %cst_413 = arith.constant 5.000000e-01 : f32
    %1174 = vector.broadcast %cst_413 : f32 to vector<2x32xf32>
    %1175 = arith.addf %1173, %1174 : vector<2x32xf32>
    %1176 = vector.extract_strided_slice %1164 {offsets = [0, 32], sizes = [2, 32], strides = [1, 1]} : vector<2x128xf32> to vector<2x32xf32>
    %cst_414 = arith.constant 5.000000e-01 : f32
    %1177 = vector.broadcast %cst_414 : f32 to vector<2x32xf32>
    %1178 = arith.mulf %1177, %1176 : vector<2x32xf32>
    %1179 = math.tanh %1178 : vector<2x32xf32>
    %cst_415 = arith.constant 5.000000e-01 : f32
    %1180 = vector.broadcast %cst_415 : f32 to vector<2x32xf32>
    %1181 = arith.mulf %1180, %1179 : vector<2x32xf32>
    %cst_416 = arith.constant 5.000000e-01 : f32
    %1182 = vector.broadcast %cst_416 : f32 to vector<2x32xf32>
    %1183 = arith.addf %1181, %1182 : vector<2x32xf32>
    %1184 = vector.extract_strided_slice %1164 {offsets = [0, 64], sizes = [2, 32], strides = [1, 1]} : vector<2x128xf32> to vector<2x32xf32>
    %1185 = math.tanh %1184 : vector<2x32xf32>
    %1186 = vector.extract_strided_slice %1164 {offsets = [0, 96], sizes = [2, 32], strides = [1, 1]} : vector<2x128xf32> to vector<2x32xf32>
    %cst_417 = arith.constant 5.000000e-01 : f32
    %1187 = vector.broadcast %cst_417 : f32 to vector<2x32xf32>
    %1188 = arith.mulf %1187, %1186 : vector<2x32xf32>
    %1189 = math.tanh %1188 : vector<2x32xf32>
    %cst_418 = arith.constant 5.000000e-01 : f32
    %1190 = vector.broadcast %cst_418 : f32 to vector<2x32xf32>
    %1191 = arith.mulf %1190, %1189 : vector<2x32xf32>
    %cst_419 = arith.constant 5.000000e-01 : f32
    %1192 = vector.broadcast %cst_419 : f32 to vector<2x32xf32>
    %1193 = arith.addf %1191, %1192 : vector<2x32xf32>
    %1194 = arith.mulf %1183, %1110 : vector<2x32xf32>
    %1195 = arith.mulf %1175, %1185 : vector<2x32xf32>
    %1196 = arith.addf %1194, %1195 : vector<2x32xf32>
    %1197 = math.tanh %1196 : vector<2x32xf32>
    %1198 = arith.mulf %1193, %1197 : vector<2x32xf32>
    %1199 = vector.extract_strided_slice %1167 {offsets = [0, 0], sizes = [2, 32], strides = [1, 1]} : vector<2x128xf32> to vector<2x32xf32>
    %cst_420 = arith.constant 5.000000e-01 : f32
    %1200 = vector.broadcast %cst_420 : f32 to vector<2x32xf32>
    %1201 = arith.mulf %1200, %1199 : vector<2x32xf32>
    %1202 = math.tanh %1201 : vector<2x32xf32>
    %cst_421 = arith.constant 5.000000e-01 : f32
    %1203 = vector.broadcast %cst_421 : f32 to vector<2x32xf32>
    %1204 = arith.mulf %1203, %1202 : vector<2x32xf32>
    %cst_422 = arith.constant 5.000000e-01 : f32
    %1205 = vector.broadcast %cst_422 : f32 to vector<2x32xf32>
    %1206 = arith.addf %1204, %1205 : vector<2x32xf32>
    %1207 = vector.extract_strided_slice %1167 {offsets = [0, 32], sizes = [2, 32], strides = [1, 1]} : vector<2x128xf32> to vector<2x32xf32>
    %cst_423 = arith.constant 5.000000e-01 : f32
    %1208 = vector.broadcast %cst_423 : f32 to vector<2x32xf32>
    %1209 = arith.mulf %1208, %1207 : vector<2x32xf32>
    %1210 = math.tanh %1209 : vector<2x32xf32>
    %cst_424 = arith.constant 5.000000e-01 : f32
    %1211 = vector.broadcast %cst_424 : f32 to vector<2x32xf32>
    %1212 = arith.mulf %1211, %1210 : vector<2x32xf32>
    %cst_425 = arith.constant 5.000000e-01 : f32
    %1213 = vector.broadcast %cst_425 : f32 to vector<2x32xf32>
    %1214 = arith.addf %1212, %1213 : vector<2x32xf32>
    %1215 = vector.extract_strided_slice %1167 {offsets = [0, 64], sizes = [2, 32], strides = [1, 1]} : vector<2x128xf32> to vector<2x32xf32>
    %1216 = math.tanh %1215 : vector<2x32xf32>
    %1217 = vector.extract_strided_slice %1167 {offsets = [0, 96], sizes = [2, 32], strides = [1, 1]} : vector<2x128xf32> to vector<2x32xf32>
    %cst_426 = arith.constant 5.000000e-01 : f32
    %1218 = vector.broadcast %cst_426 : f32 to vector<2x32xf32>
    %1219 = arith.mulf %1218, %1217 : vector<2x32xf32>
    %1220 = math.tanh %1219 : vector<2x32xf32>
    %cst_427 = arith.constant 5.000000e-01 : f32
    %1221 = vector.broadcast %cst_427 : f32 to vector<2x32xf32>
    %1222 = arith.mulf %1221, %1220 : vector<2x32xf32>
    %cst_428 = arith.constant 5.000000e-01 : f32
    %1223 = vector.broadcast %cst_428 : f32 to vector<2x32xf32>
    %1224 = arith.addf %1222, %1223 : vector<2x32xf32>
    %1225 = arith.mulf %1214, %1141 : vector<2x32xf32>
    %1226 = arith.mulf %1206, %1216 : vector<2x32xf32>
    %1227 = arith.addf %1225, %1226 : vector<2x32xf32>
    %1228 = math.tanh %1227 : vector<2x32xf32>
    %1229 = arith.mulf %1224, %1228 : vector<2x32xf32>
    %1230 = arith.index_cast %c5_i32_404 : i32 to index
    %c0_429 = arith.constant 0 : index
    %c0_430 = arith.constant 0 : index
    %1231 = vector.load %arg16[%1230, %c0_429, %c0_430] : memref<8x2x32xf32, #tpu.memory_space<vmem>>, vector<1x2x32xf32>
    %1232 = vector.shape_cast %1231 : vector<1x2x32xf32> to vector<2x32xf32>
    %1233 = vector.shape_cast %1198 : vector<2x32xf32> to vector<1x2x32xf32>
    tpu.vector_store %arg16[%1230, %c0_429, %c0_430], %1233 {strides = array<i32>} : memref<8x2x32xf32, #tpu.memory_space<vmem>>, vector<1x2x32xf32>,
    %1234 = arith.index_cast %1152 : i32 to index
    %c0_431 = arith.constant 0 : index
    %c0_432 = arith.constant 0 : index
    %1235 = vector.load %arg17[%1234, %c0_431, %c0_432] : memref<8x2x32xf32, #tpu.memory_space<vmem>>, vector<1x2x32xf32>
    %1236 = vector.shape_cast %1235 : vector<1x2x32xf32> to vector<2x32xf32>
    %1237 = vector.shape_cast %1229 : vector<2x32xf32> to vector<1x2x32xf32>
    tpu.vector_store %arg17[%1234, %c0_431, %c0_432], %1237 {strides = array<i32>} : memref<8x2x32xf32, #tpu.memory_space<vmem>>, vector<1x2x32xf32>,
    %c6_i32_433 = arith.constant 6 : i32
    %c7_i32_434 = arith.constant 7 : i32
    %1238 = arith.subi %c7_i32_434, %c6_i32_433 : i32
    %1239 = tpu.concatenate %1198, %1229 in 1 : vector<2x32xf32>, vector<2x32xf32> -> vector<2x64xf32>
    %1240 = arith.truncf %1239 : vector<2x64xf32> to vector<2x64xbf16>
    %cst_435 = arith.constant dense<0.000000e+00> : vector<2x256xf32>
    %1241 = tpu.matmul %1240, %713, %cst_435 {dimension_numbers = #tpu.dot_dimension_numbers<[1], [0], [0], [1], [0, 0, 1, 1], [], []>} : vector<2x64xbf16>, vector<64x256xbf16>, vector<2x256xf32> -> vector<2x256xf32>
    %1242 = arith.index_cast %c6_i32_433 : i32 to index
    %c0_436 = arith.constant 0 : index
    %c0_437 = arith.constant 0 : index
    %1243 = vector.load %arg15[%1242, %c0_436, %c0_437] : memref<8x2x256xf32, #tpu.memory_space<vmem>>, vector<1x2x256xf32>
    %1244 = vector.shape_cast %1243 : vector<1x2x256xf32> to vector<2x256xf32>
    %1245 = arith.index_cast %1238 : i32 to index
    %c0_438 = arith.constant 0 : index
    %c0_439 = arith.constant 0 : index
    %1246 = vector.load %arg15[%1245, %c0_438, %c0_439] : memref<8x2x256xf32, #tpu.memory_space<vmem>>, vector<1x2x256xf32>
    %1247 = vector.shape_cast %1246 : vector<1x2x256xf32> to vector<2x256xf32>
    %1248 = vector.extract_strided_slice %1244 {offsets = [0, 0], sizes = [2, 128], strides = [1, 1]} : vector<2x256xf32> to vector<2x128xf32>
    %1249 = vector.extract_strided_slice %1241 {offsets = [0, 0], sizes = [2, 128], strides = [1, 1]} : vector<2x256xf32> to vector<2x128xf32>
    %1250 = arith.addf %1248, %1249 : vector<2x128xf32>
    %1251 = vector.extract_strided_slice %1247 {offsets = [0, 128], sizes = [2, 128], strides = [1, 1]} : vector<2x256xf32> to vector<2x128xf32>
    %1252 = vector.extract_strided_slice %1241 {offsets = [0, 128], sizes = [2, 128], strides = [1, 1]} : vector<2x256xf32> to vector<2x128xf32>
    %1253 = arith.addf %1251, %1252 : vector<2x128xf32>
    %1254 = vector.extract_strided_slice %1250 {offsets = [0, 0], sizes = [2, 32], strides = [1, 1]} : vector<2x128xf32> to vector<2x32xf32>
    %cst_440 = arith.constant 5.000000e-01 : f32
    %1255 = vector.broadcast %cst_440 : f32 to vector<2x32xf32>
    %1256 = arith.mulf %1255, %1254 : vector<2x32xf32>
    %1257 = math.tanh %1256 : vector<2x32xf32>
    %cst_441 = arith.constant 5.000000e-01 : f32
    %1258 = vector.broadcast %cst_441 : f32 to vector<2x32xf32>
    %1259 = arith.mulf %1258, %1257 : vector<2x32xf32>
    %cst_442 = arith.constant 5.000000e-01 : f32
    %1260 = vector.broadcast %cst_442 : f32 to vector<2x32xf32>
    %1261 = arith.addf %1259, %1260 : vector<2x32xf32>
    %1262 = vector.extract_strided_slice %1250 {offsets = [0, 32], sizes = [2, 32], strides = [1, 1]} : vector<2x128xf32> to vector<2x32xf32>
    %cst_443 = arith.constant 5.000000e-01 : f32
    %1263 = vector.broadcast %cst_443 : f32 to vector<2x32xf32>
    %1264 = arith.mulf %1263, %1262 : vector<2x32xf32>
    %1265 = math.tanh %1264 : vector<2x32xf32>
    %cst_444 = arith.constant 5.000000e-01 : f32
    %1266 = vector.broadcast %cst_444 : f32 to vector<2x32xf32>
    %1267 = arith.mulf %1266, %1265 : vector<2x32xf32>
    %cst_445 = arith.constant 5.000000e-01 : f32
    %1268 = vector.broadcast %cst_445 : f32 to vector<2x32xf32>
    %1269 = arith.addf %1267, %1268 : vector<2x32xf32>
    %1270 = vector.extract_strided_slice %1250 {offsets = [0, 64], sizes = [2, 32], strides = [1, 1]} : vector<2x128xf32> to vector<2x32xf32>
    %1271 = math.tanh %1270 : vector<2x32xf32>
    %1272 = vector.extract_strided_slice %1250 {offsets = [0, 96], sizes = [2, 32], strides = [1, 1]} : vector<2x128xf32> to vector<2x32xf32>
    %cst_446 = arith.constant 5.000000e-01 : f32
    %1273 = vector.broadcast %cst_446 : f32 to vector<2x32xf32>
    %1274 = arith.mulf %1273, %1272 : vector<2x32xf32>
    %1275 = math.tanh %1274 : vector<2x32xf32>
    %cst_447 = arith.constant 5.000000e-01 : f32
    %1276 = vector.broadcast %cst_447 : f32 to vector<2x32xf32>
    %1277 = arith.mulf %1276, %1275 : vector<2x32xf32>
    %cst_448 = arith.constant 5.000000e-01 : f32
    %1278 = vector.broadcast %cst_448 : f32 to vector<2x32xf32>
    %1279 = arith.addf %1277, %1278 : vector<2x32xf32>
    %1280 = arith.mulf %1269, %1196 : vector<2x32xf32>
    %1281 = arith.mulf %1261, %1271 : vector<2x32xf32>
    %1282 = arith.addf %1280, %1281 : vector<2x32xf32>
    %1283 = math.tanh %1282 : vector<2x32xf32>
    %1284 = arith.mulf %1279, %1283 : vector<2x32xf32>
    %1285 = vector.extract_strided_slice %1253 {offsets = [0, 0], sizes = [2, 32], strides = [1, 1]} : vector<2x128xf32> to vector<2x32xf32>
    %cst_449 = arith.constant 5.000000e-01 : f32
    %1286 = vector.broadcast %cst_449 : f32 to vector<2x32xf32>
    %1287 = arith.mulf %1286, %1285 : vector<2x32xf32>
    %1288 = math.tanh %1287 : vector<2x32xf32>
    %cst_450 = arith.constant 5.000000e-01 : f32
    %1289 = vector.broadcast %cst_450 : f32 to vector<2x32xf32>
    %1290 = arith.mulf %1289, %1288 : vector<2x32xf32>
    %cst_451 = arith.constant 5.000000e-01 : f32
    %1291 = vector.broadcast %cst_451 : f32 to vector<2x32xf32>
    %1292 = arith.addf %1290, %1291 : vector<2x32xf32>
    %1293 = vector.extract_strided_slice %1253 {offsets = [0, 32], sizes = [2, 32], strides = [1, 1]} : vector<2x128xf32> to vector<2x32xf32>
    %cst_452 = arith.constant 5.000000e-01 : f32
    %1294 = vector.broadcast %cst_452 : f32 to vector<2x32xf32>
    %1295 = arith.mulf %1294, %1293 : vector<2x32xf32>
    %1296 = math.tanh %1295 : vector<2x32xf32>
    %cst_453 = arith.constant 5.000000e-01 : f32
    %1297 = vector.broadcast %cst_453 : f32 to vector<2x32xf32>
    %1298 = arith.mulf %1297, %1296 : vector<2x32xf32>
    %cst_454 = arith.constant 5.000000e-01 : f32
    %1299 = vector.broadcast %cst_454 : f32 to vector<2x32xf32>
    %1300 = arith.addf %1298, %1299 : vector<2x32xf32>
    %1301 = vector.extract_strided_slice %1253 {offsets = [0, 64], sizes = [2, 32], strides = [1, 1]} : vector<2x128xf32> to vector<2x32xf32>
    %1302 = math.tanh %1301 : vector<2x32xf32>
    %1303 = vector.extract_strided_slice %1253 {offsets = [0, 96], sizes = [2, 32], strides = [1, 1]} : vector<2x128xf32> to vector<2x32xf32>
    %cst_455 = arith.constant 5.000000e-01 : f32
    %1304 = vector.broadcast %cst_455 : f32 to vector<2x32xf32>
    %1305 = arith.mulf %1304, %1303 : vector<2x32xf32>
    %1306 = math.tanh %1305 : vector<2x32xf32>
    %cst_456 = arith.constant 5.000000e-01 : f32
    %1307 = vector.broadcast %cst_456 : f32 to vector<2x32xf32>
    %1308 = arith.mulf %1307, %1306 : vector<2x32xf32>
    %cst_457 = arith.constant 5.000000e-01 : f32
    %1309 = vector.broadcast %cst_457 : f32 to vector<2x32xf32>
    %1310 = arith.addf %1308, %1309 : vector<2x32xf32>
    %1311 = arith.mulf %1300, %1227 : vector<2x32xf32>
    %1312 = arith.mulf %1292, %1302 : vector<2x32xf32>
    %1313 = arith.addf %1311, %1312 : vector<2x32xf32>
    %1314 = math.tanh %1313 : vector<2x32xf32>
    %1315 = arith.mulf %1310, %1314 : vector<2x32xf32>
    %1316 = arith.index_cast %c6_i32_433 : i32 to index
    %c0_458 = arith.constant 0 : index
    %c0_459 = arith.constant 0 : index
    %1317 = vector.load %arg16[%1316, %c0_458, %c0_459] : memref<8x2x32xf32, #tpu.memory_space<vmem>>, vector<1x2x32xf32>
    %1318 = vector.shape_cast %1317 : vector<1x2x32xf32> to vector<2x32xf32>
    %1319 = vector.shape_cast %1284 : vector<2x32xf32> to vector<1x2x32xf32>
    tpu.vector_store %arg16[%1316, %c0_458, %c0_459], %1319 {strides = array<i32>} : memref<8x2x32xf32, #tpu.memory_space<vmem>>, vector<1x2x32xf32>,
    %1320 = arith.index_cast %1238 : i32 to index
    %c0_460 = arith.constant 0 : index
    %c0_461 = arith.constant 0 : index
    %1321 = vector.load %arg17[%1320, %c0_460, %c0_461] : memref<8x2x32xf32, #tpu.memory_space<vmem>>, vector<1x2x32xf32>
    %1322 = vector.shape_cast %1321 : vector<1x2x32xf32> to vector<2x32xf32>
    %1323 = vector.shape_cast %1315 : vector<2x32xf32> to vector<1x2x32xf32>
    tpu.vector_store %arg17[%1320, %c0_460, %c0_461], %1323 {strides = array<i32>} : memref<8x2x32xf32, #tpu.memory_space<vmem>>, vector<1x2x32xf32>,
    %c7_i32_462 = arith.constant 7 : i32
    %c7_i32_463 = arith.constant 7 : i32
    %1324 = arith.subi %c7_i32_463, %c7_i32_462 : i32
    %1325 = tpu.concatenate %1284, %1315 in 1 : vector<2x32xf32>, vector<2x32xf32> -> vector<2x64xf32>
    %1326 = arith.truncf %1325 : vector<2x64xf32> to vector<2x64xbf16>
    %cst_464 = arith.constant dense<0.000000e+00> : vector<2x256xf32>
    %1327 = tpu.matmul %1326, %713, %cst_464 {dimension_numbers = #tpu.dot_dimension_numbers<[1], [0], [0], [1], [0, 0, 1, 1], [], []>} : vector<2x64xbf16>, vector<64x256xbf16>, vector<2x256xf32> -> vector<2x256xf32>
    %1328 = arith.index_cast %c7_i32_462 : i32 to index
    %c0_465 = arith.constant 0 : index
    %c0_466 = arith.constant 0 : index
    %1329 = vector.load %arg15[%1328, %c0_465, %c0_466] : memref<8x2x256xf32, #tpu.memory_space<vmem>>, vector<1x2x256xf32>
    %1330 = vector.shape_cast %1329 : vector<1x2x256xf32> to vector<2x256xf32>
    %1331 = arith.index_cast %1324 : i32 to index
    %c0_467 = arith.constant 0 : index
    %c0_468 = arith.constant 0 : index
    %1332 = vector.load %arg15[%1331, %c0_467, %c0_468] : memref<8x2x256xf32, #tpu.memory_space<vmem>>, vector<1x2x256xf32>
    %1333 = vector.shape_cast %1332 : vector<1x2x256xf32> to vector<2x256xf32>
    %1334 = vector.extract_strided_slice %1330 {offsets = [0, 0], sizes = [2, 128], strides = [1, 1]} : vector<2x256xf32> to vector<2x128xf32>
    %1335 = vector.extract_strided_slice %1327 {offsets = [0, 0], sizes = [2, 128], strides = [1, 1]} : vector<2x256xf32> to vector<2x128xf32>
    %1336 = arith.addf %1334, %1335 : vector<2x128xf32>
    %1337 = vector.extract_strided_slice %1333 {offsets = [0, 128], sizes = [2, 128], strides = [1, 1]} : vector<2x256xf32> to vector<2x128xf32>
    %1338 = vector.extract_strided_slice %1327 {offsets = [0, 128], sizes = [2, 128], strides = [1, 1]} : vector<2x256xf32> to vector<2x128xf32>
    %1339 = arith.addf %1337, %1338 : vector<2x128xf32>
    %1340 = vector.extract_strided_slice %1336 {offsets = [0, 0], sizes = [2, 32], strides = [1, 1]} : vector<2x128xf32> to vector<2x32xf32>
    %cst_469 = arith.constant 5.000000e-01 : f32
    %1341 = vector.broadcast %cst_469 : f32 to vector<2x32xf32>
    %1342 = arith.mulf %1341, %1340 : vector<2x32xf32>
    %1343 = math.tanh %1342 : vector<2x32xf32>
    %cst_470 = arith.constant 5.000000e-01 : f32
    %1344 = vector.broadcast %cst_470 : f32 to vector<2x32xf32>
    %1345 = arith.mulf %1344, %1343 : vector<2x32xf32>
    %cst_471 = arith.constant 5.000000e-01 : f32
    %1346 = vector.broadcast %cst_471 : f32 to vector<2x32xf32>
    %1347 = arith.addf %1345, %1346 : vector<2x32xf32>
    %1348 = vector.extract_strided_slice %1336 {offsets = [0, 32], sizes = [2, 32], strides = [1, 1]} : vector<2x128xf32> to vector<2x32xf32>
    %cst_472 = arith.constant 5.000000e-01 : f32
    %1349 = vector.broadcast %cst_472 : f32 to vector<2x32xf32>
    %1350 = arith.mulf %1349, %1348 : vector<2x32xf32>
    %1351 = math.tanh %1350 : vector<2x32xf32>
    %cst_473 = arith.constant 5.000000e-01 : f32
    %1352 = vector.broadcast %cst_473 : f32 to vector<2x32xf32>
    %1353 = arith.mulf %1352, %1351 : vector<2x32xf32>
    %cst_474 = arith.constant 5.000000e-01 : f32
    %1354 = vector.broadcast %cst_474 : f32 to vector<2x32xf32>
    %1355 = arith.addf %1353, %1354 : vector<2x32xf32>
    %1356 = vector.extract_strided_slice %1336 {offsets = [0, 64], sizes = [2, 32], strides = [1, 1]} : vector<2x128xf32> to vector<2x32xf32>
    %1357 = math.tanh %1356 : vector<2x32xf32>
    %1358 = vector.extract_strided_slice %1336 {offsets = [0, 96], sizes = [2, 32], strides = [1, 1]} : vector<2x128xf32> to vector<2x32xf32>
    %cst_475 = arith.constant 5.000000e-01 : f32
    %1359 = vector.broadcast %cst_475 : f32 to vector<2x32xf32>
    %1360 = arith.mulf %1359, %1358 : vector<2x32xf32>
    %1361 = math.tanh %1360 : vector<2x32xf32>
    %cst_476 = arith.constant 5.000000e-01 : f32
    %1362 = vector.broadcast %cst_476 : f32 to vector<2x32xf32>
    %1363 = arith.mulf %1362, %1361 : vector<2x32xf32>
    %cst_477 = arith.constant 5.000000e-01 : f32
    %1364 = vector.broadcast %cst_477 : f32 to vector<2x32xf32>
    %1365 = arith.addf %1363, %1364 : vector<2x32xf32>
    %1366 = arith.mulf %1355, %1282 : vector<2x32xf32>
    %1367 = arith.mulf %1347, %1357 : vector<2x32xf32>
    %1368 = arith.addf %1366, %1367 : vector<2x32xf32>
    %1369 = math.tanh %1368 : vector<2x32xf32>
    %1370 = arith.mulf %1365, %1369 : vector<2x32xf32>
    %1371 = vector.extract_strided_slice %1339 {offsets = [0, 0], sizes = [2, 32], strides = [1, 1]} : vector<2x128xf32> to vector<2x32xf32>
    %cst_478 = arith.constant 5.000000e-01 : f32
    %1372 = vector.broadcast %cst_478 : f32 to vector<2x32xf32>
    %1373 = arith.mulf %1372, %1371 : vector<2x32xf32>
    %1374 = math.tanh %1373 : vector<2x32xf32>
    %cst_479 = arith.constant 5.000000e-01 : f32
    %1375 = vector.broadcast %cst_479 : f32 to vector<2x32xf32>
    %1376 = arith.mulf %1375, %1374 : vector<2x32xf32>
    %cst_480 = arith.constant 5.000000e-01 : f32
    %1377 = vector.broadcast %cst_480 : f32 to vector<2x32xf32>
    %1378 = arith.addf %1376, %1377 : vector<2x32xf32>
    %1379 = vector.extract_strided_slice %1339 {offsets = [0, 32], sizes = [2, 32], strides = [1, 1]} : vector<2x128xf32> to vector<2x32xf32>
    %cst_481 = arith.constant 5.000000e-01 : f32
    %1380 = vector.broadcast %cst_481 : f32 to vector<2x32xf32>
    %1381 = arith.mulf %1380, %1379 : vector<2x32xf32>
    %1382 = math.tanh %1381 : vector<2x32xf32>
    %cst_482 = arith.constant 5.000000e-01 : f32
    %1383 = vector.broadcast %cst_482 : f32 to vector<2x32xf32>
    %1384 = arith.mulf %1383, %1382 : vector<2x32xf32>
    %cst_483 = arith.constant 5.000000e-01 : f32
    %1385 = vector.broadcast %cst_483 : f32 to vector<2x32xf32>
    %1386 = arith.addf %1384, %1385 : vector<2x32xf32>
    %1387 = vector.extract_strided_slice %1339 {offsets = [0, 64], sizes = [2, 32], strides = [1, 1]} : vector<2x128xf32> to vector<2x32xf32>
    %1388 = math.tanh %1387 : vector<2x32xf32>
    %1389 = vector.extract_strided_slice %1339 {offsets = [0, 96], sizes = [2, 32], strides = [1, 1]} : vector<2x128xf32> to vector<2x32xf32>
    %cst_484 = arith.constant 5.000000e-01 : f32
    %1390 = vector.broadcast %cst_484 : f32 to vector<2x32xf32>
    %1391 = arith.mulf %1390, %1389 : vector<2x32xf32>
    %1392 = math.tanh %1391 : vector<2x32xf32>
    %cst_485 = arith.constant 5.000000e-01 : f32
    %1393 = vector.broadcast %cst_485 : f32 to vector<2x32xf32>
    %1394 = arith.mulf %1393, %1392 : vector<2x32xf32>
    %cst_486 = arith.constant 5.000000e-01 : f32
    %1395 = vector.broadcast %cst_486 : f32 to vector<2x32xf32>
    %1396 = arith.addf %1394, %1395 : vector<2x32xf32>
    %1397 = arith.mulf %1386, %1313 : vector<2x32xf32>
    %1398 = arith.mulf %1378, %1388 : vector<2x32xf32>
    %1399 = arith.addf %1397, %1398 : vector<2x32xf32>
    %1400 = math.tanh %1399 : vector<2x32xf32>
    %1401 = arith.mulf %1396, %1400 : vector<2x32xf32>
    %1402 = arith.index_cast %c7_i32_462 : i32 to index
    %c0_487 = arith.constant 0 : index
    %c0_488 = arith.constant 0 : index
    %1403 = vector.load %arg16[%1402, %c0_487, %c0_488] : memref<8x2x32xf32, #tpu.memory_space<vmem>>, vector<1x2x32xf32>
    %1404 = vector.shape_cast %1403 : vector<1x2x32xf32> to vector<2x32xf32>
    %1405 = vector.shape_cast %1370 : vector<2x32xf32> to vector<1x2x32xf32>
    tpu.vector_store %arg16[%1402, %c0_487, %c0_488], %1405 {strides = array<i32>} : memref<8x2x32xf32, #tpu.memory_space<vmem>>, vector<1x2x32xf32>,
    %1406 = arith.index_cast %1324 : i32 to index
    %c0_489 = arith.constant 0 : index
    %c0_490 = arith.constant 0 : index
    %1407 = vector.load %arg17[%1406, %c0_489, %c0_490] : memref<8x2x32xf32, #tpu.memory_space<vmem>>, vector<1x2x32xf32>
    %1408 = vector.shape_cast %1407 : vector<1x2x32xf32> to vector<2x32xf32>
    %1409 = vector.shape_cast %1401 : vector<2x32xf32> to vector<1x2x32xf32>
    tpu.vector_store %arg17[%1406, %c0_489, %c0_490], %1409 {strides = array<i32>} : memref<8x2x32xf32, #tpu.memory_space<vmem>>, vector<1x2x32xf32>,
    %c8_i32_491 = arith.constant 8 : i32
    %c0_492 = arith.constant 0 : index
    %c0_493 = arith.constant 0 : index
    %c0_494 = arith.constant 0 : index
    %1410 = vector.load %arg16[%c0_492, %c0_493, %c0_494] : memref<8x2x32xf32, #tpu.memory_space<vmem>>, vector<8x2x32xf32>
    %c0_495 = arith.constant 0 : index
    %c0_496 = arith.constant 0 : index
    %c0_497 = arith.constant 0 : index
    %1411 = vector.load %arg17[%c0_495, %c0_496, %c0_497] : memref<8x2x32xf32, #tpu.memory_space<vmem>>, vector<8x2x32xf32>
    %1412 = tpu.concatenate %1410, %1411 in 2 : vector<8x2x32xf32>, vector<8x2x32xf32> -> vector<8x2x64xf32>
    %1413 = vector.shape_cast %1412 : vector<8x2x64xf32> to vector<16x64xf32>
    %cst_498 = arith.constant 0.000000e+00 : f32
    %1414 = vector.broadcast %cst_498 : f32 to vector<16x64xf32>
    %1415 = arith.maximumf %1413, %1414 : vector<16x64xf32>
    %1416 = arith.truncf %1415 : vector<16x64xf32> to vector<16x64xbf16>
    %c0_499 = arith.constant 0 : index
    %c0_500 = arith.constant 0 : index
    %1417 = vector.load %arg10[%c0_499, %c0_500] : memref<64x64xbf16, #tpu.memory_space<vmem>>, vector<64x64xbf16>
    %cst_501 = arith.constant dense<0.000000e+00> : vector<16x64xf32>
    %1418 = tpu.matmul %1416, %1417, %cst_501 {dimension_numbers = #tpu.dot_dimension_numbers<[1], [0], [0], [1], [0, 0, 1, 1], [], []>} : vector<16x64xbf16>, vector<64x64xbf16>, vector<16x64xf32> -> vector<16x64xf32>
    %c0_502 = arith.constant 0 : index
    %c0_503 = arith.constant 0 : index
    %1419 = vector.load %arg11[%c0_502, %c0_503] : memref<1x64xf32, #tpu.memory_space<vmem>>, vector<1x64xf32>
    %1420 = vector.broadcast %1419 : vector<1x64xf32> to vector<16x64xf32>
    %1421 = arith.addf %1418, %1420 : vector<16x64xf32>
    %cst_504 = arith.constant 0.000000e+00 : f32
    %1422 = vector.broadcast %cst_504 : f32 to vector<16x64xf32>
    %1423 = arith.maximumf %1421, %1422 : vector<16x64xf32>
    %1424 = arith.truncf %1423 : vector<16x64xf32> to vector<16x64xbf16>
    %c0_505 = arith.constant 0 : index
    %c0_506 = arith.constant 0 : index
    %1425 = vector.load %arg12[%c0_505, %c0_506] : memref<64x4xbf16, #tpu.memory_space<vmem>>, vector<64x4xbf16>
    %cst_507 = arith.constant dense<0.000000e+00> : vector<16x4xf32>
    %1426 = tpu.matmul %1424, %1425, %cst_507 {dimension_numbers = #tpu.dot_dimension_numbers<[1], [0], [0], [1], [0, 0, 1, 1], [], []>} : vector<16x64xbf16>, vector<64x4xbf16>, vector<16x4xf32> -> vector<16x4xf32>
    %c0_508 = arith.constant 0 : index
    %c0_509 = arith.constant 0 : index
    %1427 = vector.load %arg13[%c0_508, %c0_509] : memref<1x4xf32, #tpu.memory_space<vmem>>, vector<1x4xf32>
    %1428 = vector.broadcast %1427 : vector<1x4xf32> to vector<16x4xf32>
    %1429 = arith.addf %1426, %1428 : vector<16x4xf32>
    %cst_510 = arith.constant 5.000000e-01 : f32
    %1430 = vector.broadcast %cst_510 : f32 to vector<16x4xf32>
    %1431 = arith.mulf %1430, %1429 : vector<16x4xf32>
    %1432 = math.tanh %1431 : vector<16x4xf32>
    %cst_511 = arith.constant 5.000000e-01 : f32
    %1433 = vector.broadcast %cst_511 : f32 to vector<16x4xf32>
    %1434 = arith.mulf %1433, %1432 : vector<16x4xf32>
    %cst_512 = arith.constant 5.000000e-01 : f32
    %1435 = vector.broadcast %cst_512 : f32 to vector<16x4xf32>
    %1436 = arith.addf %1434, %1435 : vector<16x4xf32>
    %1437 = vector.shape_cast %1436 : vector<16x4xf32> to vector<8x2x4xf32>
    %c0_513 = arith.constant 0 : index
    %c0_514 = arith.constant 0 : index
    %c0_515 = arith.constant 0 : index
    %1438 = vector.load %arg14[%c0_513, %c0_514, %c0_515] : memref<8x2x4xf32, #tpu.memory_space<vmem>>, vector<8x2x4xf32>
    tpu.vector_store %arg14[%c0_513, %c0_514, %c0_515], %1437 {strides = array<i32>} : memref<8x2x4xf32, #tpu.memory_space<vmem>>, vector<8x2x4xf32>,
    return
  }
  func.func @transform_0(%arg0: i32) -> (i32, i32, i32) {
    %c0_i32 = arith.constant 0 : i32
    %c0_i32_0 = arith.constant 0 : i32
    %c0_i32_1 = arith.constant 0 : i32
    return %c0_i32, %arg0, %c0_i32_0 : i32, i32, i32
  }
  func.func @transform_1(%arg0: i32) -> (i32, i32) {
    %c0_i32 = arith.constant 0 : i32
    %c0_i32_0 = arith.constant 0 : i32
    %c0_i32_1 = arith.constant 0 : i32
    return %c0_i32, %c0_i32_0 : i32, i32
  }
  func.func @transform_2(%arg0: i32) -> (i32, i32) {
    %c0_i32 = arith.constant 0 : i32
    %c0_i32_0 = arith.constant 0 : i32
    %c0_i32_1 = arith.constant 0 : i32
    return %c0_i32, %c0_i32_0 : i32, i32
  }
  func.func @transform_3(%arg0: i32) -> (i32, i32) {
    %c0_i32 = arith.constant 0 : i32
    %c0_i32_0 = arith.constant 0 : i32
    %c0_i32_1 = arith.constant 0 : i32
    return %c0_i32, %c0_i32_0 : i32, i32
  }
  func.func @transform_4(%arg0: i32) -> (i32, i32) {
    %c0_i32 = arith.constant 0 : i32
    %c0_i32_0 = arith.constant 0 : i32
    %c0_i32_1 = arith.constant 0 : i32
    return %c0_i32, %c0_i32_0 : i32, i32
  }
  func.func @transform_5(%arg0: i32) -> (i32, i32) {
    %c0_i32 = arith.constant 0 : i32
    %c0_i32_0 = arith.constant 0 : i32
    %c0_i32_1 = arith.constant 0 : i32
    return %c0_i32, %c0_i32_0 : i32, i32
  }
  func.func @transform_6(%arg0: i32) -> (i32, i32) {
    %c0_i32 = arith.constant 0 : i32
    %c0_i32_0 = arith.constant 0 : i32
    %c0_i32_1 = arith.constant 0 : i32
    return %c0_i32, %c0_i32_0 : i32, i32
  }
  func.func @transform_7(%arg0: i32) -> (i32, i32) {
    %c0_i32 = arith.constant 0 : i32
    %c0_i32_0 = arith.constant 0 : i32
    %c0_i32_1 = arith.constant 0 : i32
    return %c0_i32, %c0_i32_0 : i32, i32
  }
  func.func @transform_8(%arg0: i32) -> (i32, i32) {
    %c0_i32 = arith.constant 0 : i32
    %c0_i32_0 = arith.constant 0 : i32
    %c0_i32_1 = arith.constant 0 : i32
    return %c0_i32, %c0_i32_0 : i32, i32
  }
  func.func @transform_9(%arg0: i32) -> (i32, i32) {
    %c0_i32 = arith.constant 0 : i32
    %c0_i32_0 = arith.constant 0 : i32
    %c0_i32_1 = arith.constant 0 : i32
    return %c0_i32, %c0_i32_0 : i32, i32
  }
  func.func @transform_10(%arg0: i32) -> (i32, i32) {
    %c0_i32 = arith.constant 0 : i32
    %c0_i32_0 = arith.constant 0 : i32
    %c0_i32_1 = arith.constant 0 : i32
    return %c0_i32, %c0_i32_0 : i32, i32
  }
  func.func @transform_11(%arg0: i32) -> (i32, i32) {
    %c0_i32 = arith.constant 0 : i32
    %c0_i32_0 = arith.constant 0 : i32
    %c0_i32_1 = arith.constant 0 : i32
    return %c0_i32, %c0_i32_0 : i32, i32
  }
  func.func @transform_12(%arg0: i32) -> (i32, i32) {
    %c0_i32 = arith.constant 0 : i32
    %c0_i32_0 = arith.constant 0 : i32
    %c0_i32_1 = arith.constant 0 : i32
    return %c0_i32, %c0_i32_0 : i32, i32
  }
  func.func @transform_13(%arg0: i32) -> (i32, i32, i32) {
    %c0_i32 = arith.constant 0 : i32
    %c0_i32_0 = arith.constant 0 : i32
    %c0_i32_1 = arith.constant 0 : i32
    return %c0_i32, %arg0, %c0_i32_0 : i32, i32, i32
  }
}

</mosaic_0001>

<llo_original>
// kernel: tpu_custom_call.1
$region0: #{tpu_custom_call.1}
  #allocation0 [shape = 'u32[]', space=smem, size = 0x4, offset = 0x4, fixed_abs, tag = 'smem constant byte address 0x4 - core index']
  #allocation1 [shape = 'u32[144,128]{1,0:T(1,128)}', space=vmem, size = 0x12000, scoped, tag = 'internal scratch']
  #allocation2 [shape = 'f32[8,2,256]{2,1,0:T(2,128)}', space=vmem, size = 0x4000, scoped, tag = 'scratch operand']
  #allocation3 [shape = 'f32[8,2,32]{2,1,0:T(2,128)}', space=vmem, size = 0x2000, scoped, tag = 'scratch operand']
  #allocation4 [shape = 'f32[8,2,32]{2,1,0:T(2,128)}', space=vmem, size = 0x2000, scoped, tag = 'scratch operand']
  %s0 = inlined_call_operand.hbm [shape: f32[8,2,16], index: 0, kind: input, shape index: {}]
  %s1 = inlined_call_operand.hbm [shape: bf16[16,32], index: 1, kind: input, shape index: {}]
  %s2 = inlined_call_operand.vmem [shape: f32[1,32], index: 2, kind: input, shape index: {}]
  %s3 = inlined_call_operand.vmem [shape: bf16[32,256], index: 3, kind: input, shape index: {}]
  %s4 = inlined_call_operand.hbm [shape: bf16[64,256], index: 4, kind: input, shape index: {}]
  %s5 = inlined_call_operand.vmem [shape: f32[1,256], index: 5, kind: input, shape index: {}]
  %s6 = inlined_call_operand.hbm [shape: bf16[64,256], index: 6, kind: input, shape index: {}]
  %s7 = inlined_call_operand.hbm [shape: bf16[64,256], index: 7, kind: input, shape index: {}]
  %s8 = inlined_call_operand.vmem [shape: f32[1,256], index: 8, kind: input, shape index: {}]
  %s9 = inlined_call_operand.hbm [shape: bf16[64,64], index: 9, kind: input, shape index: {}]
  %s10 = inlined_call_operand.vmem [shape: f32[1,64], index: 10, kind: input, shape index: {}]
  %s11 = inlined_call_operand.vmem [shape: bf16[64,4], index: 11, kind: input, shape index: {}]
  %s12 = inlined_call_operand.vmem [shape: f32[1,4], index: 12, kind: input, shape index: {}]
  %s13 = inlined_call_operand.vmem [shape: f32[8,2,4], index: 13, kind: output, shape index: {}]
  %s14 = sld [smem:[#allocation0]]
  $region86: #{tpu_custom_call.1} parent=0
    _
  %s16 = ssub.s32 1, %s14
  %s17 = scalar_select 0, %s16, %s14
  $region1: #{tpu_custom_call.1} parent=0
    #allocation5 [shape = 'u8[8192]{0}', space=vmem, size = 0x2000, scoped, tag = 'input window, operand 0, single buffered']
    #allocation6 [shape = 's32[1]{0}', space=sflag, size = 0x4, scoped, tag = 'scoped memory for tpu_custom_call.1']
    #allocation7 [shape = 'u8[4096]{0}', space=vmem, size = 0x1000, scoped, tag = 'input window, operand 1, single buffered']
    #allocation8 [shape = 's32[1]{0}', space=sflag, size = 0x4, scoped, tag = 'scoped memory for tpu_custom_call.1']
    #allocation9 [shape = 'u8[32768]{0}', space=vmem, size = 0x8000, scoped, tag = 'input window, operand 4, single buffered']
    #allocation10 [shape = 'u8[32768]{0}', space=vmem, size = 0x8000, scoped, tag = 'input window, operand 6, single buffered']
    #allocation11 [shape = 's32[1]{0}', space=sflag, size = 0x4, scoped, tag = 'scoped memory for tpu_custom_call.1']
    #allocation12 [shape = 'u8[32768]{0}', space=vmem, size = 0x8000, scoped, tag = 'input window, operand 7, single buffered']
    #allocation13 [shape = 'u8[16384]{0}', space=vmem, size = 0x4000, scoped, tag = 'input window, operand 9, single buffered']
    #allocation14 [shape = 's32[1]{0}', space=sflag, size = 0x4, scoped, tag = 'scoped memory for tpu_custom_call.1']
    %18 = vsyncpa [#allocation6], 0
    %19 = vsyncpa [#allocation8], 0
    %20 = vsyncpa [#allocation11], 0
    %21 = vsyncpa [#allocation14], 0
    // Predicated region
    $region2: #{tpu_custom_call.1} parent=1 // pred_check
      _
    $region3: #{tpu_custom_call.1} parent=1 // pred_check_branch
      %23 = sbr.rel (0) target = $region5
    $region4: #{tpu_custom_call.1} parent=1 // pred_region
      %s25 = ssub.s32 256, 256
      %26 = vsyncadd [#allocation6], %s25
      %s27 = sshll.u32 [#allocation5], 4
      %s28 = int_to_ptr.vmem [resolvable:$true] %s27
      %33 = dma.hbm_to_vmem [thread:$0]  %s0, 256, %s28, [#allocation6], 32, 32, 2
    $region5: #{tpu_custom_call.1} parent=1 // pred_fallthru
      _
    // Predicated region
    $region6: #{tpu_custom_call.1} parent=1 // pred_check
      _
    $region7: #{tpu_custom_call.1} parent=1 // pred_check_branch
      %35 = sbr.rel (0) target = $region9
    $region8: #{tpu_custom_call.1} parent=1 // pred_region
      %s37 = ssub.s32 128, 128
      %38 = vsyncadd [#allocation8], %s37
      %s39 = sshll.u32 [#allocation7], 4
      %s40 = int_to_ptr.vmem [resolvable:$true] %s39
      %45 = dma.hbm_to_vmem [thread:$0]  %s1, 128, %s40, [#allocation8], 64, 64, 4
    $region9: #{tpu_custom_call.1} parent=1 // pred_fallthru
      _
    // Predicated region
    $region10: #{tpu_custom_call.1} parent=1 // pred_check
      _
    $region11: #{tpu_custom_call.1} parent=1 // pred_check_branch
      %47 = sbr.rel (0) target = $region13
    $region12: #{tpu_custom_call.1} parent=1 // pred_region
      _
    $region13: #{tpu_custom_call.1} parent=1 // pred_fallthru
      _
    // Predicated region
    $region14: #{tpu_custom_call.1} parent=1 // pred_check
      _
    $region15: #{tpu_custom_call.1} parent=1 // pred_check_branch
      %49 = sbr.rel (0) target = $region17
    $region16: #{tpu_custom_call.1} parent=1 // pred_region
      _
    $region17: #{tpu_custom_call.1} parent=1 // pred_fallthru
      _
    // Predicated region
    $region18: #{tpu_custom_call.1} parent=1 // pred_check
      _
    $region19: #{tpu_custom_call.1} parent=1 // pred_check_branch
      %51 = sbr.rel (0) target = $region21
    $region20: #{tpu_custom_call.1} parent=1 // pred_region
      %s53 = ssub.s32 1024, 1024
      %54 = vsyncadd [#allocation8], %s53
      %s55 = sshll.u32 [#allocation9], 4
      %s56 = int_to_ptr.vmem [resolvable:$true] %s55
      %61 = dma.hbm_to_vmem [thread:$0]  %s4, 1024, %s56, [#allocation8], 128, 128, 8
    $region21: #{tpu_custom_call.1} parent=1 // pred_fallthru
      _
    // Predicated region
    $region22: #{tpu_custom_call.1} parent=1 // pred_check
      _
    $region23: #{tpu_custom_call.1} parent=1 // pred_check_branch
      %63 = sbr.rel (0) target = $region25
    $region24: #{tpu_custom_call.1} parent=1 // pred_region
      _
    $region25: #{tpu_custom_call.1} parent=1 // pred_fallthru
      _
    // Predicated region
    $region26: #{tpu_custom_call.1} parent=1 // pred_check
      _
    $region27: #{tpu_custom_call.1} parent=1 // pred_check_branch
      %65 = sbr.rel (0) target = $region29
    $region28: #{tpu_custom_call.1} parent=1 // pred_region
      %s67 = ssub.s32 1024, 1024
      %68 = vsyncadd [#allocation11], %s67
      %s69 = sshll.u32 [#allocation10], 4
      %s70 = int_to_ptr.vmem [resolvable:$true] %s69
      %75 = dma.hbm_to_vmem [thread:$0]  %s6, 1024, %s70, [#allocation11], 128, 128, 8
    $region29: #{tpu_custom_call.1} parent=1 // pred_fallthru
      _
    // Predicated region
    $region30: #{tpu_custom_call.1} parent=1 // pred_check
      _
    $region31: #{tpu_custom_call.1} parent=1 // pred_check_branch
      %77 = sbr.rel (0) target = $region33
    $region32: #{tpu_custom_call.1} parent=1 // pred_region
      %s79 = ssub.s32 1024, 1024
      %80 = vsyncadd [#allocation11], %s79
      %s81 = sshll.u32 [#allocation12], 4
      %s82 = int_to_ptr.vmem [resolvable:$true] %s81
      %87 = dma.hbm_to_vmem [thread:$0]  %s7, 1024, %s82, [#allocation11], 128, 128, 8
    $region33: #{tpu_custom_call.1} parent=1 // pred_fallthru
      _
    // Predicated region
    $region34: #{tpu_custom_call.1} parent=1 // pred_check
      _
    $region35: #{tpu_custom_call.1} parent=1 // pred_check_branch
      %89 = sbr.rel (0) target = $region37
    $region36: #{tpu_custom_call.1} parent=1 // pred_region
      _
    $region37: #{tpu_custom_call.1} parent=1 // pred_fallthru
      _
    // Predicated region
    $region38: #{tpu_custom_call.1} parent=1 // pred_check
      _
    $region39: #{tpu_custom_call.1} parent=1 // pred_check_branch
      %91 = sbr.rel (0) target = $region41
    $region40: #{tpu_custom_call.1} parent=1 // pred_region
      %s93 = ssub.s32 512, 512
      %94 = vsyncadd [#allocation14], %s93
      %s95 = sshll.u32 [#allocation13], 4
      %s96 = int_to_ptr.vmem [resolvable:$true] %s95
      %101 = dma.hbm_to_vmem [thread:$0]  %s9, 512, %s96, [#allocation14], 64, 64, 4
    $region41: #{tpu_custom_call.1} parent=1 // pred_fallthru
      _
    // Predicated region
    $region42: #{tpu_custom_call.1} parent=1 // pred_check
      _
    $region43: #{tpu_custom_call.1} parent=1 // pred_check_branch
      %103 = sbr.rel (0) target = $region45
    $region44: #{tpu_custom_call.1} parent=1 // pred_region
      _
    $region45: #{tpu_custom_call.1} parent=1 // pred_fallthru
      _
    // Predicated region
    $region46: #{tpu_custom_call.1} parent=1 // pred_check
      _
    $region47: #{tpu_custom_call.1} parent=1 // pred_check_branch
      %105 = sbr.rel (0) target = $region49
    $region48: #{tpu_custom_call.1} parent=1 // pred_region
      _
    $region49: #{tpu_custom_call.1} parent=1 // pred_fallthru
      _
    // Predicated region
    $region50: #{tpu_custom_call.1} parent=1 // pred_check
      _
    $region51: #{tpu_custom_call.1} parent=1 // pred_check_branch
      %107 = sbr.rel (0) target = $region53
    $region52: #{tpu_custom_call.1} parent=1 // pred_region
      _
    $region53: #{tpu_custom_call.1} parent=1 // pred_fallthru
      _
    // Predicated region
    $region54: #{tpu_custom_call.1} parent=1 // pred_check
      _
    $region55: #{tpu_custom_call.1} parent=1 // pred_check_branch
      %109 = sbr.rel (0) target = $region57
    $region56: #{tpu_custom_call.1} parent=1 // pred_region
      %110 = dma.done [#allocation6], 256
    $region57: #{tpu_custom_call.1} parent=1 // pred_fallthru
      _
    // Predicated region
    $region58: #{tpu_custom_call.1} parent=1 // pred_check
      _
    $region59: #{tpu_custom_call.1} parent=1 // pred_check_branch
      %112 = sbr.rel (0) target = $region61
    $region60: #{tpu_custom_call.1} parent=1 // pred_region
      %113 = dma.done [#allocation8], 128
    $region61: #{tpu_custom_call.1} parent=1 // pred_fallthru
      _
    // Predicated region
    $region62: #{tpu_custom_call.1} parent=1 // pred_check
      _
    $region63: #{tpu_custom_call.1} parent=1 // pred_check_branch
      %115 = sbr.rel (0) target = $region65
    $region64: #{tpu_custom_call.1} parent=1 // pred_region
      %116 = dma.done [#allocation8], 1024
    $region65: #{tpu_custom_call.1} parent=1 // pred_fallthru
      _
    // Predicated region
    $region66: #{tpu_custom_call.1} parent=1 // pred_check
      _
    $region67: #{tpu_custom_call.1} parent=1 // pred_check_branch
      %118 = sbr.rel (0) target = $region69
    $region68: #{tpu_custom_call.1} parent=1 // pred_region
      %119 = dma.done [#allocation11], 1024
    $region69: #{tpu_custom_call.1} parent=1 // pred_fallthru
      _
    // Predicated region
    $region70: #{tpu_custom_call.1} parent=1 // pred_check
      _
    $region71: #{tpu_custom_call.1} parent=1 // pred_check_branch
      %121 = sbr.rel (0) target = $region73
    $region72: #{tpu_custom_call.1} parent=1 // pred_region
      %122 = dma.done [#allocation11], 1024
    $region73: #{tpu_custom_call.1} parent=1 // pred_fallthru
      _
    // Predicated region
    $region74: #{tpu_custom_call.1} parent=1 // pred_check
      _
    $region75: #{tpu_custom_call.1} parent=1 // pred_check_branch
      %124 = sbr.rel (0) target = $region77
    $region76: #{tpu_custom_call.1} parent=1 // pred_region
      %125 = dma.done [#allocation14], 512
    $region77: #{tpu_custom_call.1} parent=1 // pred_fallthru
      _
    %v127 = vld [vmem:[#allocation5] sm:$0x3]
    %v128 = vld [vmem:[#allocation5 + $0x2] sm:$0x3]
    %v129 = vld [vmem:[#allocation5 + $0x4] sm:$0x3]
    %v130 = vld [vmem:[#allocation5 + $0x6] sm:$0x3]
    %v131 = vld [vmem:[#allocation5 + $0x8] sm:$0x3]
    %v132 = vld [vmem:[#allocation5 + $0xa] sm:$0x3]
    %v133 = vld [vmem:[#allocation5 + $0xc] sm:$0x3]
    %v134 = vld [vmem:[#allocation5 + $0xe] sm:$0x3]
    %v143 = vcombine.low %v127, %v128
    %v144 = vcombine.low %v129, %v130
    %v146 = vunpack.c.l.s4 1983009808
    %v147 = vunpack.c.0.s8 %v146
    %v148 = vlaneseq
    %v149 = vshrl.u32 %v148, 7
    %v150 = vsub.s32 %v147, %v149
    %v151 = vrot.slane %v143, %v150
    %v153 = vunpack.c.l.s4 1983009808
    %v154 = vunpack.c.0.s8 %v153
    %v155 = vlaneseq
    %v156 = vshrl.u32 %v155, 7
    %v157 = vsub.s32 %v154, %v156
    %v158 = vrot.slane %v144, %v157
    %v159 = vcombine.low %v151, %v158
    %v160 = vcombine.low %v131, %v132
    %v161 = vcombine.low %v133, %v134
    %v163 = vunpack.c.l.s4 1983009808
    %v164 = vunpack.c.0.s8 %v163
    %v165 = vlaneseq
    %v166 = vshrl.u32 %v165, 7
    %v167 = vsub.s32 %v164, %v166
    %v168 = vrot.slane %v160, %v167
    %v170 = vunpack.c.l.s4 1983009808
    %v171 = vunpack.c.0.s8 %v170
    %v172 = vlaneseq
    %v173 = vshrl.u32 %v172, 7
    %v174 = vsub.s32 %v171, %v173
    %v175 = vrot.slane %v161, %v174
    %v176 = vcombine.low %v168, %v175
    %v179 = vpack.c.bf16 %v176, %v159
    %v180 = vld [vmem:[#allocation7] sm:$0xf]
    %v181 = vld [vmem:[#allocation7 + $0x4] sm:$0xf]
    %v182 = vld [vmem:[%s2] sm:$0x1]
    %v184 = vlaneseq
    %v185 = vshrl.u32 %v184, 7
    %v186 = vsub.s32 0, %v185
    %v187 = vrot.slane %v182, %v186
    %v191 = vunpack.c.l.b16 %v180
    %v192 = vunpack.c.l.b16 %v181
    %v193 = vpack.c.b16 %v192, %v191
    %vm195 = vcmask 130048
    %v197 = vsel %vm195, %v179, 0
    %199 = vmatprep.subr.bf16.mxu0 0
    %200 = vmatpush1.bf16.msra.mxu0 0
    %201 = vmatprep.subr.bf16.mxu0 0
    %202 = vmatpush1.bf16.msra.mxu0 0
    %203 = vmatprep.subr.bf16.mxu0 0
    %204 = vmatpush1.bf16.msra.mxu0 0
    %205 = vmatprep.subr.bf16.mxu0 0
    %206 = vmatpush1.bf16.msra.mxu0 0
    %207 = vmatprep.subr.bf16.mxu0 0
    %208 = vmatpush1.bf16.msra.mxu0 0
    %209 = vmatprep.subr.bf16.mxu0 0
    %210 = vmatpush1.bf16.msra.mxu0 0
    %211 = vmatprep.subr.bf16.mxu0 0
    %212 = vmatpush1.bf16.msra.mxu0 0
    %213 = vmatprep.subr.bf16.mxu0 0
    %214 = vmatpush1.bf16.msra.mxu0 %v193
    %215 = vmatprep.subr.bf16.mxu0 0
    %216 = vmatpush2.bf16.msra.mxu0 0
    %217 = vmatprep.subr.bf16.mxu0 0
    %218 = vmatpush2.bf16.msra.mxu0 0
    %219 = vmatprep.subr.bf16.mxu0 0
    %220 = vmatpush2.bf16.msra.mxu0 0
    %221 = vmatprep.subr.bf16.mxu0 0
    %222 = vmatpush2.bf16.msra.mxu0 0
    %223 = vmatprep.subr.bf16.mxu0 0
    %224 = vmatpush2.bf16.msra.mxu0 0
    %225 = vmatprep.subr.bf16.mxu0 0
    %226 = vmatpush2.bf16.msra.mxu0 0
    %227 = vmatprep.subr.bf16.mxu0 0
    %228 = vmatpush2.bf16.msra.mxu0 0
    %229 = vmatprep.subr.bf16.mxu0 0
    %230 = vmatpush2.bf16.msra.mxu0 0
    %231 = vmatprep.mubr.bf16.mxu0 0
    %232 = vmatmul.mubr.bf16.gmra.mxu0 %v197
    %v233 = vpop.f32.mrf.mxu0
    %v234 = vadd.f32 %v187, %v233
    %v235 = vpop.f32.mrf.mxu0
    %v236 = vpop.f32.mrf.mxu0
    %v237 = vadd.f32 %v187, %v236
    %v238 = vpop.f32.mrf.mxu0
    %239 = vdwg.mxu0
    %v240 = vmax.f32 %v234, 0.0
    %v241 = vmax.f32 %v237, 0.0
    %v242 = vld [vmem:[%s3] sm:$0xff]
    %v243 = vld [vmem:[%s3 + $0x8] sm:$0xff]
    %v244 = vld [vmem:[%s3 + $0x10] sm:$0xff]
    %v245 = vld [vmem:[%s3 + $0x18] sm:$0xff]
    %v246 = vld [vmem:[#allocation9] sm:$0xff]
    %v247 = vld [vmem:[#allocation9 + $0x8] sm:$0xff]
    %v248 = vld [vmem:[#allocation9 + $0x10] sm:$0xff]
    %v249 = vld [vmem:[#allocation9 + $0x18] sm:$0xff]
    %v250 = vld [vmem:[#allocation9 + $0x20] sm:$0xff]
    %v251 = vld [vmem:[#allocation9 + $0x28] sm:$0xff]
    %v252 = vld [vmem:[#allocation9 + $0x30] sm:$0xff]
    %v253 = vld [vmem:[#allocation9 + $0x38] sm:$0xff]
    %v254 = vld [vmem:[%s5] sm:$0x3]
    %v255 = vpack.c.bf16 %v241, %v240
    %v257 = vlaneseq
    %v258 = vshrl.u32 %v257, 7
    %v259 = vsub.s32 0, %v258
    %v260 = vrot.slane %v254, %v259
    %v261 = vlaneseq
    %v262 = vshrl.u32 %v261, 7
    %v263 = vsub.s32 1, %v262
    %v264 = vrot.slane %v254, %v263
    %v271 = vunpack.c.l.b16 %v242
    %v272 = vunpack.c.h.b16 %v242
    %v273 = vunpack.c.l.b16 %v243
    %v274 = vunpack.c.h.b16 %v243
    %v275 = vunpack.c.l.b16 %v244
    %v276 = vunpack.c.h.b16 %v244
    %v277 = vunpack.c.l.b16 %v245
    %v278 = vunpack.c.h.b16 %v245
    %v279 = vpack.c.b16 %v273, %v271
    %v280 = vpack.c.b16 %v274, %v272
    %v281 = vpack.c.b16 %v277, %v275
    %v282 = vpack.c.b16 %v278, %v276
    %vm287 = vcmask 261120
    %v289 = vsel %vm287, %v255, 0
    %291 = vmatprep.subr.bf16.mxu0 0
    %292 = vmatpush1.bf16.msra.mxu0 0
    %293 = vmatprep.subr.bf16.mxu0 0
    %294 = vmatpush1.bf16.msra.mxu0 0
    %295 = vmatprep.subr.bf16.mxu0 0
    %296 = vmatpush1.bf16.msra.mxu0 0
    %297 = vmatprep.subr.bf16.mxu0 0
    %298 = vmatpush1.bf16.msra.mxu0 0
    %299 = vmatprep.subr.bf16.mxu0 0
    %300 = vmatpush1.bf16.msra.mxu0 0
    %301 = vmatprep.subr.bf16.mxu0 0
    %302 = vmatpush1.bf16.msra.mxu0 0
    %303 = vmatprep.subr.bf16.mxu0 %v282
    %304 = vmatpush1.bf16.msra.mxu0 %v281
    %305 = vmatprep.subr.bf16.mxu0 %v280
    %306 = vmatpush1.bf16.msra.mxu0 %v279
    %307 = vmatprep.subr.bf16.mxu0 0
    %308 = vmatpush2.bf16.msra.mxu0 0
    %309 = vmatprep.subr.bf16.mxu0 0
    %310 = vmatpush2.bf16.msra.mxu0 0
    %311 = vmatprep.subr.bf16.mxu0 0
    %312 = vmatpush2.bf16.msra.mxu0 0
    %313 = vmatprep.subr.bf16.mxu0 0
    %314 = vmatpush2.bf16.msra.mxu0 0
    %315 = vmatprep.subr.bf16.mxu0 0
    %316 = vmatpush2.bf16.msra.mxu0 0
    %317 = vmatprep.subr.bf16.mxu0 0
    %318 = vmatpush2.bf16.msra.mxu0 0
    %319 = vmatprep.subr.bf16.mxu0 0
    %320 = vmatpush2.bf16.msra.mxu0 0
    %321 = vmatprep.subr.bf16.mxu0 0
    %322 = vmatpush2.bf16.msra.mxu0 0
    %323 = vmatprep.mubr.bf16.mxu0 0
    %324 = vmatmul.mubr.bf16.gmra.mxu0 %v289
    %v325 = vpop.f32.mrf.mxu0
    %v326 = vadd.f32 %v260, %v325
    %v327 = vpop.f32.mrf.mxu0
    %v328 = vadd.f32 %v264, %v327
    %v329 = vpop.f32.mrf.mxu0
    %v330 = vadd.f32 %v260, %v329
    %v331 = vpop.f32.mrf.mxu0
    %v332 = vadd.f32 %v264, %v331
    %333 = vdwg.mxu0
    %v338 = vcombine.low %v326, %v328
    %v339 = vcombine.high %v326, %v328
    %v341 = vunpack.c.l.s4 1983009808
    %v342 = vunpack.c.0.s8 %v341
    %v343 = vlaneseq
    %v344 = vshrl.u32 %v343, 7
    %v345 = vsub.s32 %v342, %v344
    %v346 = vrot.slane %v338, %v345
    %v348 = vunpack.c.l.s4 1983009808
    %v349 = vunpack.c.0.s8 %v348
    %v350 = vlaneseq
    %v351 = vshrl.u32 %v350, 7
    %v352 = vsub.s32 %v349, %v351
    %v353 = vrot.slane %v339, %v352
    %v354 = vcombine.high %v346, %v346
    %v355 = vcombine.high %v353, %v353
    %v356 = vcombine.low %v330, %v332
    %v357 = vcombine.high %v330, %v332
    %v359 = vunpack.c.l.s4 1983009808
    %v360 = vunpack.c.0.s8 %v359
    %v361 = vlaneseq
    %v362 = vshrl.u32 %v361, 7
    %v363 = vsub.s32 %v360, %v362
    %v364 = vrot.slane %v356, %v363
    %v366 = vunpack.c.l.s4 1983009808
    %v367 = vunpack.c.0.s8 %v366
    %v368 = vlaneseq
    %v369 = vshrl.u32 %v368, 7
    %v370 = vsub.s32 %v367, %v369
    %v371 = vrot.slane %v357, %v370
    %v372 = vcombine.high %v364, %v364
    %v373 = vcombine.high %v371, %v371
    %382 = vst [vmem:[#allocation2] sm:$0xf] %v346
    %383 = vst [vmem:[#allocation2 + $0x4] sm:$0xf] %v354
    %384 = vst [vmem:[#allocation2 + $0x8] sm:$0xf] %v353
    %385 = vst [vmem:[#allocation2 + $0xc] sm:$0xf] %v355
    %386 = vst [vmem:[#allocation2 + $0x10] sm:$0xf] %v364
    %387 = vst [vmem:[#allocation2 + $0x14] sm:$0xf] %v372
    %388 = vst [vmem:[#allocation2 + $0x18] sm:$0xf] %v371
    %389 = vst [vmem:[#allocation2 + $0x1c] sm:$0xf] %v373
    %v390 = vpack.c.bf16 0.0, 0.0
    %v399 = vunpack.c.l.b16 %v246
    %v400 = vunpack.c.h.b16 %v246
    %v401 = vunpack.c.l.b16 %v247
    %v402 = vunpack.c.h.b16 %v247
    %v403 = vunpack.c.l.b16 %v248
    %v404 = vunpack.c.h.b16 %v248
    %v405 = vunpack.c.l.b16 %v249
    %v406 = vunpack.c.h.b16 %v249
    %v407 = vunpack.c.l.b16 %v250
    %v408 = vunpack.c.h.b16 %v250
    %v409 = vunpack.c.l.b16 %v251
    %v410 = vunpack.c.h.b16 %v251
    %v411 = vunpack.c.l.b16 %v252
    %v412 = vunpack.c.h.b16 %v252
    %v413 = vunpack.c.l.b16 %v253
    %v414 = vunpack.c.h.b16 %v253
    %v415 = vpack.c.b16 %v401, %v399
    %v416 = vpack.c.b16 %v402, %v400
    %v417 = vpack.c.b16 %v405, %v403
    %v418 = vpack.c.b16 %v406, %v404
    %v419 = vpack.c.b16 %v409, %v407
    %v420 = vpack.c.b16 %v410, %v408
    %v421 = vpack.c.b16 %v413, %v411
    %v422 = vpack.c.b16 %v414, %v412
    %vm431 = vcmask 523264
    %v433 = vsel %vm431, %v390, 0
    %435 = vmatprep.subr.bf16.mxu0 0
    %436 = vmatpush1.bf16.msra.mxu0 0
    %437 = vmatprep.subr.bf16.mxu0 0
    %438 = vmatpush1.bf16.msra.mxu0 0
    %439 = vmatprep.subr.bf16.mxu0 0
    %440 = vmatpush1.bf16.msra.mxu0 0
    %441 = vmatprep.subr.bf16.mxu0 0
    %442 = vmatpush1.bf16.msra.mxu0 0
    %443 = vmatprep.subr.bf16.mxu0 %v422
    %444 = vmatpush1.bf16.msra.mxu0 %v421
    %445 = vmatprep.subr.bf16.mxu0 %v420
    %446 = vmatpush1.bf16.msra.mxu0 %v419
    %447 = vmatprep.subr.bf16.mxu0 %v418
    %448 = vmatpush1.bf16.msra.mxu0 %v417
    %449 = vmatprep.subr.bf16.mxu0 %v416
    %450 = vmatpush1.bf16.msra.mxu0 %v415
    %451 = vmatprep.subr.bf16.mxu0 0
    %452 = vmatpush2.bf16.msra.mxu0 0
    %453 = vmatprep.subr.bf16.mxu0 0
    %454 = vmatpush2.bf16.msra.mxu0 0
    %455 = vmatprep.subr.bf16.mxu0 0
    %456 = vmatpush2.bf16.msra.mxu0 0
    %457 = vmatprep.subr.bf16.mxu0 0
    %458 = vmatpush2.bf16.msra.mxu0 0
    %459 = vmatprep.subr.bf16.mxu0 0
    %460 = vmatpush2.bf16.msra.mxu0 0
    %461 = vmatprep.subr.bf16.mxu0 0
    %462 = vmatpush2.bf16.msra.mxu0 0
    %463 = vmatprep.subr.bf16.mxu0 0
    %464 = vmatpush2.bf16.msra.mxu0 0
    %465 = vmatprep.subr.bf16.mxu0 0
    %466 = vmatpush2.bf16.msra.mxu0 0
    %467 = vmatprep.mubr.bf16.mxu0 0
    %468 = vmatmul.mubr.bf16.gmra.mxu0 %v433
    %v469 = vpop.f32.mrf.mxu0
    %v470 = vadd.f32 0.0, %v469
    %v471 = vpop.f32.mrf.mxu0
    %v472 = vadd.f32 0.0, %v471
    %v473 = vpop.f32.mrf.mxu0
    %v474 = vpop.f32.mrf.mxu0
    %475 = vdwg.mxu0
    %v476 = vld [vmem:[#allocation2] sm:$0xf]
    %s477 = scalar_lea.vmem [#allocation2], 28
    %v478 = vld [vmem:[%s477] sm:$0xf]
    %v479 = vadd.f32 %v476, %v470
    %v481 = vrot.slane %v478, 2
    %v483 = vadd.f32 %v481, %v472
    %v484 = vmul.f32 %v479, 0.5
    %v485 = vtanh.pop %v484
    %v486 = vmul.f32 %v485, 0.5
    %v487 = vadd.f32 %v486, 0.5
    %v488 = vtanh.pop %v479
    %v489 = vmul.f32 %v487, 0.0
    %491 = vrot.lane.b32.xlu0 %v488, 64
    %v492 = vpop.permute.xlu0 %491
    %v494 = vmul.f32 %v487, %v492
    %496 = vrot.lane.b32.xlu0 %v494, 32
    %v497 = vpop.permute.xlu0 %496
    %v499 = vadd.f32 %v489, %v497
    %v500 = vtanh.pop %v499
    %502 = vrot.lane.b32.xlu0 %v500, 64
    %v503 = vpop.permute.xlu0 %502
    %v505 = vmul.f32 %v487, %v503
    %v506 = vmul.f32 %v483, 0.5
    %v507 = vtanh.pop %v506
    %v508 = vmul.f32 %v507, 0.5
    %v509 = vadd.f32 %v508, 0.5
    %v510 = vtanh.pop %v483
    %v511 = vmul.f32 %v509, 0.0
    %513 = vrot.lane.b32.xlu0 %v510, 64
    %v514 = vpop.permute.xlu0 %513
    %v516 = vmul.f32 %v509, %v514
    %518 = vrot.lane.b32.xlu0 %v516, 32
    %v519 = vpop.permute.xlu0 %518
    %v521 = vadd.f32 %v511, %v519
    %v522 = vtanh.pop %v521
    %524 = vrot.lane.b32.xlu0 %v522, 64
    %v525 = vpop.permute.xlu0 %524
    %v527 = vmul.f32 %v509, %v525
    %v530 = vunpack.c.l.s4 1983009808
    %v531 = vunpack.c.0.s8 %v530
    %v532 = vlaneseq
    %v533 = vshrl.u32 %v532, 7
    %v534 = vsub.s32 %v531, %v533
    %v535 = vrot.slane %v505, %v534
    %536 = vrot.lane.b32.xlu0 %v535, 32
    %v537 = vpop.permute.xlu0 %536
    %vm539 = vcmask 254976
    %540 = vst.msk [vmem:[#allocation3] sm:$0x3] %vm539, %v537
    %v543 = vunpack.c.l.s4 1983009808
    %v544 = vunpack.c.0.s8 %v543
    %v545 = vlaneseq
    %v546 = vshrl.u32 %v545, 7
    %v547 = vsub.s32 %v544, %v546
    %v548 = vrot.slane %v527, %v547
    %549 = vrot.lane.b32.xlu0 %v548, 32
    %v550 = vpop.permute.xlu0 %549
    %s552 = scalar_lea.vmem [#allocation4], 14
    %553 = vst.msk [vmem:[%s552] sm:$0x3] %vm539, %v550
    %554 = vrot.lane.b32.xlu0 %v548, 64
    %v555 = vpop.permute.xlu0 %554
    %v557 = vsel %vm287, %v537, %v555
    %v558 = vpack.c.bf16 %v557, %v557
    %v560 = vsel %vm431, %v558, 0
    %562 = vmatprep.subr.bf16.mxu0 0
    %563 = vmatpush1.bf16.msra.mxu0 0
    %564 = vmatprep.subr.bf16.mxu0 0
    %565 = vmatpush1.bf16.msra.mxu0 0
    %566 = vmatprep.subr.bf16.mxu0 0
    %567 = vmatpush1.bf16.msra.mxu0 0
    %568 = vmatprep.subr.bf16.mxu0 0
    %569 = vmatpush1.bf16.msra.mxu0 0
    %570 = vmatprep.subr.bf16.mxu0 %v422
    %571 = vmatpush1.bf16.msra.mxu0 %v421
    %572 = vmatprep.subr.bf16.mxu0 %v420
    %573 = vmatpush1.bf16.msra.mxu0 %v419
    %574 = vmatprep.subr.bf16.mxu0 %v418
    %575 = vmatpush1.bf16.msra.mxu0 %v417
    %576 = vmatprep.subr.bf16.mxu0 %v416
    %577 = vmatpush1.bf16.msra.mxu0 %v415
    %578 = vmatprep.subr.bf16.mxu0 0
    %579 = vmatpush2.bf16.msra.mxu0 0
    %580 = vmatprep.subr.bf16.mxu0 0
    %581 = vmatpush2.bf16.msra.mxu0 0
    %582 = vmatprep.subr.bf16.mxu0 0
    %583 = vmatpush2.bf16.msra.mxu0 0
    %584 = vmatprep.subr.bf16.mxu0 0
    %585 = vmatpush2.bf16.msra.mxu0 0
    %586 = vmatprep.subr.bf16.mxu0 0
    %587 = vmatpush2.bf16.msra.mxu0 0
    %588 = vmatprep.subr.bf16.mxu0 0
    %589 = vmatpush2.bf16.msra.mxu0 0
    %590 = vmatprep.subr.bf16.mxu0 0
    %591 = vmatpush2.bf16.msra.mxu0 0
    %592 = vmatprep.subr.bf16.mxu0 0
    %593 = vmatpush2.bf16.msra.mxu0 0
    %594 = vmatprep.mubr.bf16.mxu0 0
    %595 = vmatmul.mubr.bf16.gmra.mxu0 %v560
    %v596 = vpop.f32.mrf.mxu0
    %v597 = vadd.f32 0.0, %v596
    %v598 = vpop.f32.mrf.mxu0
    %v599 = vadd.f32 0.0, %v598
    %v600 = vpop.f32.mrf.mxu0
    %v601 = vpop.f32.mrf.mxu0
    %602 = vdwg.mxu0
    %s603 = scalar_lea.vmem [#allocation2], 4
    %v604 = vld [vmem:[%s603] sm:$0xf]
    %s605 = scalar_lea.vmem [#allocation2], 24
    %v606 = vld [vmem:[%s605] sm:$0xf]
    %v607 = vadd.f32 %v604, %v597
    %v609 = vrot.slane %v606, 2
    %v611 = vadd.f32 %v609, %v599
    %v612 = vmul.f32 %v607, 0.5
    %v613 = vtanh.pop %v612
    %v614 = vmul.f32 %v613, 0.5
    %v615 = vadd.f32 %v614, 0.5
    %v616 = vtanh.pop %v607
    %v617 = vmul.f32 %v615, %v499
    %619 = vrot.lane.b32.xlu0 %v616, 64
    %v620 = vpop.permute.xlu0 %619
    %v622 = vmul.f32 %v615, %v620
    %624 = vrot.lane.b32.xlu0 %v622, 32
    %v625 = vpop.permute.xlu0 %624
    %v627 = vadd.f32 %v617, %v625
    %v628 = vtanh.pop %v627
    %630 = vrot.lane.b32.xlu0 %v628, 64
    %v631 = vpop.permute.xlu0 %630
    %v633 = vmul.f32 %v615, %v631
    %v634 = vmul.f32 %v611, 0.5
    %v635 = vtanh.pop %v634
    %v636 = vmul.f32 %v635, 0.5
    %v637 = vadd.f32 %v636, 0.5
    %v638 = vtanh.pop %v611
    %v639 = vmul.f32 %v637, %v521
    %641 = vrot.lane.b32.xlu0 %v638, 64
    %v642 = vpop.permute.xlu0 %641
    %v644 = vmul.f32 %v637, %v642
    %646 = vrot.lane.b32.xlu0 %v644, 32
    %v647 = vpop.permute.xlu0 %646
    %v649 = vadd.f32 %v639, %v647
    %v650 = vtanh.pop %v649
    %652 = vrot.lane.b32.xlu0 %v650, 64
    %v653 = vpop.permute.xlu0 %652
    %v655 = vmul.f32 %v637, %v653
    %v658 = vunpack.c.l.s4 1983009808
    %v659 = vunpack.c.0.s8 %v658
    %v660 = vlaneseq
    %v661 = vshrl.u32 %v660, 7
    %v662 = vsub.s32 %v659, %v661
    %v663 = vrot.slane %v633, %v662
    %664 = vrot.lane.b32.xlu0 %v663, 32
    %v665 = vpop.permute.xlu0 %664
    %s667 = scalar_lea.vmem [#allocation3], 2
    %668 = vst.msk [vmem:[%s667] sm:$0x3] %vm539, %v665
    %v671 = vunpack.c.l.s4 1983009808
    %v672 = vunpack.c.0.s8 %v671
    %v673 = vlaneseq
    %v674 = vshrl.u32 %v673, 7
    %v675 = vsub.s32 %v672, %v674
    %v676 = vrot.slane %v655, %v675
    %677 = vrot.lane.b32.xlu0 %v676, 32
    %v678 = vpop.permute.xlu0 %677
    %s680 = scalar_lea.vmem [#allocation4], 12
    %681 = vst.msk [vmem:[%s680] sm:$0x3] %vm539, %v678
    %682 = vrot.lane.b32.xlu0 %v676, 64
    %v683 = vpop.permute.xlu0 %682
    %v685 = vsel %vm287, %v665, %v683
    %v686 = vpack.c.bf16 %v685, %v685
    %v688 = vsel %vm431, %v686, 0
    %690 = vmatprep.subr.bf16.mxu0 0
    %691 = vmatpush1.bf16.msra.mxu0 0
    %692 = vmatprep.subr.bf16.mxu0 0
    %693 = vmatpush1.bf16.msra.mxu0 0
    %694 = vmatprep.subr.bf16.mxu0 0
    %695 = vmatpush1.bf16.msra.mxu0 0
    %696 = vmatprep.subr.bf16.mxu0 0
    %697 = vmatpush1.bf16.msra.mxu0 0
    %698 = vmatprep.subr.bf16.mxu0 %v422
    %699 = vmatpush1.bf16.msra.mxu0 %v421
    %700 = vmatprep.subr.bf16.mxu0 %v420
    %701 = vmatpush1.bf16.msra.mxu0 %v419
    %702 = vmatprep.subr.bf16.mxu0 %v418
    %703 = vmatpush1.bf16.msra.mxu0 %v417
    %704 = vmatprep.subr.bf16.mxu0 %v416
    %705 = vmatpush1.bf16.msra.mxu0 %v415
    %706 = vmatprep.subr.bf16.mxu0 0
    %707 = vmatpush2.bf16.msra.mxu0 0
    %708 = vmatprep.subr.bf16.mxu0 0
    %709 = vmatpush2.bf16.msra.mxu0 0
    %710 = vmatprep.subr.bf16.mxu0 0
    %711 = vmatpush2.bf16.msra.mxu0 0
    %712 = vmatprep.subr.bf16.mxu0 0
    %713 = vmatpush2.bf16.msra.mxu0 0
    %714 = vmatprep.subr.bf16.mxu0 0
    %715 = vmatpush2.bf16.msra.mxu0 0
    %716 = vmatprep.subr.bf16.mxu0 0
    %717 = vmatpush2.bf16.msra.mxu0 0
    %718 = vmatprep.subr.bf16.mxu0 0
    %719 = vmatpush2.bf16.msra.mxu0 0
    %720 = vmatprep.subr.bf16.mxu0 0
    %721 = vmatpush2.bf16.msra.mxu0 0
    %722 = vmatprep.mubr.bf16.mxu0 0
    %723 = vmatmul.mubr.bf16.gmra.mxu0 %v688
    %v724 = vpop.f32.mrf.mxu0
    %v725 = vadd.f32 0.0, %v724
    %v726 = vpop.f32.mrf.mxu0
    %v727 = vadd.f32 0.0, %v726
    %v728 = vpop.f32.mrf.mxu0
    %v729 = vpop.f32.mrf.mxu0
    %730 = vdwg.mxu0
    %s731 = scalar_lea.vmem [#allocation2], 8
    %v732 = vld [vmem:[%s731] sm:$0xf]
    %s733 = scalar_lea.vmem [#allocation2], 20
    %v734 = vld [vmem:[%s733] sm:$0xf]
    %v735 = vadd.f32 %v732, %v725
    %v737 = vrot.slane %v734, 2
    %v739 = vadd.f32 %v737, %v727
    %v740 = vmul.f32 %v735, 0.5
    %v741 = vtanh.pop %v740
    %v742 = vmul.f32 %v741, 0.5
    %v743 = vadd.f32 %v742, 0.5
    %v744 = vtanh.pop %v735
    %v745 = vmul.f32 %v743, %v627
    %747 = vrot.lane.b32.xlu0 %v744, 64
    %v748 = vpop.permute.xlu0 %747
    %v750 = vmul.f32 %v743, %v748
    %752 = vrot.lane.b32.xlu0 %v750, 32
    %v753 = vpop.permute.xlu0 %752
    %v755 = vadd.f32 %v745, %v753
    %v756 = vtanh.pop %v755
    %758 = vrot.lane.b32.xlu0 %v756, 64
    %v759 = vpop.permute.xlu0 %758
    %v761 = vmul.f32 %v743, %v759
    %v762 = vmul.f32 %v739, 0.5
    %v763 = vtanh.pop %v762
    %v764 = vmul.f32 %v763, 0.5
    %v765 = vadd.f32 %v764, 0.5
    %v766 = vtanh.pop %v739
    %v767 = vmul.f32 %v765, %v649
    %769 = vrot.lane.b32.xlu0 %v766, 64
    %v770 = vpop.permute.xlu0 %769
    %v772 = vmul.f32 %v765, %v770
    %774 = vrot.lane.b32.xlu0 %v772, 32
    %v775 = vpop.permute.xlu0 %774
    %v777 = vadd.f32 %v767, %v775
    %v778 = vtanh.pop %v777
    %780 = vrot.lane.b32.xlu0 %v778, 64
    %v781 = vpop.permute.xlu0 %780
    %v783 = vmul.f32 %v765, %v781
    %v786 = vunpack.c.l.s4 1983009808
    %v787 = vunpack.c.0.s8 %v786
    %v788 = vlaneseq
    %v789 = vshrl.u32 %v788, 7
    %v790 = vsub.s32 %v787, %v789
    %v791 = vrot.slane %v761, %v790
    %792 = vrot.lane.b32.xlu0 %v791, 32
    %v793 = vpop.permute.xlu0 %792
    %s795 = scalar_lea.vmem [#allocation3], 4
    %796 = vst.msk [vmem:[%s795] sm:$0x3] %vm539, %v793
    %v799 = vunpack.c.l.s4 1983009808
    %v800 = vunpack.c.0.s8 %v799
    %v801 = vlaneseq
    %v802 = vshrl.u32 %v801, 7
    %v803 = vsub.s32 %v800, %v802
    %v804 = vrot.slane %v783, %v803
    %805 = vrot.lane.b32.xlu0 %v804, 32
    %v806 = vpop.permute.xlu0 %805
    %s808 = scalar_lea.vmem [#allocation4], 10
    %809 = vst.msk [vmem:[%s808] sm:$0x3] %vm539, %v806
    %810 = vrot.lane.b32.xlu0 %v804, 64
    %v811 = vpop.permute.xlu0 %810
    %v813 = vsel %vm287, %v793, %v811
    %v814 = vpack.c.bf16 %v813, %v813
    %v816 = vsel %vm431, %v814, 0
    %818 = vmatprep.subr.bf16.mxu0 0
    %819 = vmatpush1.bf16.msra.mxu0 0
    %820 = vmatprep.subr.bf16.mxu0 0
    %821 = vmatpush1.bf16.msra.mxu0 0
    %822 = vmatprep.subr.bf16.mxu0 0
    %823 = vmatpush1.bf16.msra.mxu0 0
    %824 = vmatprep.subr.bf16.mxu0 0
    %825 = vmatpush1.bf16.msra.mxu0 0
    %826 = vmatprep.subr.bf16.mxu0 %v422
    %827 = vmatpush1.bf16.msra.mxu0 %v421
    %828 = vmatprep.subr.bf16.mxu0 %v420
    %829 = vmatpush1.bf16.msra.mxu0 %v419
    %830 = vmatprep.subr.bf16.mxu0 %v418
    %831 = vmatpush1.bf16.msra.mxu0 %v417
    %832 = vmatprep.subr.bf16.mxu0 %v416
    %833 = vmatpush1.bf16.msra.mxu0 %v415
    %834 = vmatprep.subr.bf16.mxu0 0
    %835 = vmatpush2.bf16.msra.mxu0 0
    %836 = vmatprep.subr.bf16.mxu0 0
    %837 = vmatpush2.bf16.msra.mxu0 0
    %838 = vmatprep.subr.bf16.mxu0 0
    %839 = vmatpush2.bf16.msra.mxu0 0
    %840 = vmatprep.subr.bf16.mxu0 0
    %841 = vmatpush2.bf16.msra.mxu0 0
    %842 = vmatprep.subr.bf16.mxu0 0
    %843 = vmatpush2.bf16.msra.mxu0 0
    %844 = vmatprep.subr.bf16.mxu0 0
    %845 = vmatpush2.bf16.msra.mxu0 0
    %846 = vmatprep.subr.bf16.mxu0 0
    %847 = vmatpush2.bf16.msra.mxu0 0
    %848 = vmatprep.subr.bf16.mxu0 0
    %849 = vmatpush2.bf16.msra.mxu0 0
    %850 = vmatprep.mubr.bf16.mxu0 0
    %851 = vmatmul.mubr.bf16.gmra.mxu0 %v816
    %v852 = vpop.f32.mrf.mxu0
    %v853 = vadd.f32 0.0, %v852
    %v854 = vpop.f32.mrf.mxu0
    %v855 = vadd.f32 0.0, %v854
    %v856 = vpop.f32.mrf.mxu0
    %v857 = vpop.f32.mrf.mxu0
    %858 = vdwg.mxu0
    %s859 = scalar_lea.vmem [#allocation2], 12
    %v860 = vld [vmem:[%s859] sm:$0xf]
    %s861 = scalar_lea.vmem [#allocation2], 16
    %v862 = vld [vmem:[%s861] sm:$0xf]
    %v863 = vadd.f32 %v860, %v853
    %v865 = vrot.slane %v862, 2
    %v867 = vadd.f32 %v865, %v855
    %v868 = vmul.f32 %v863, 0.5
    %v869 = vtanh.pop %v868
    %v870 = vmul.f32 %v869, 0.5
    %v871 = vadd.f32 %v870, 0.5
    %v872 = vtanh.pop %v863
    %v873 = vmul.f32 %v871, %v755
    %875 = vrot.lane.b32.xlu0 %v872, 64
    %v876 = vpop.permute.xlu0 %875
    %v878 = vmul.f32 %v871, %v876
    %880 = vrot.lane.b32.xlu0 %v878, 32
    %v881 = vpop.permute.xlu0 %880
    %v883 = vadd.f32 %v873, %v881
    %v884 = vtanh.pop %v883
    %886 = vrot.lane.b32.xlu0 %v884, 64
    %v887 = vpop.permute.xlu0 %886
    %v889 = vmul.f32 %v871, %v887
    %v890 = vmul.f32 %v867, 0.5
    %v891 = vtanh.pop %v890
    %v892 = vmul.f32 %v891, 0.5
    %v893 = vadd.f32 %v892, 0.5
    %v894 = vtanh.pop %v867
    %v895 = vmul.f32 %v893, %v777
    %897 = vrot.lane.b32.xlu0 %v894, 64
    %v898 = vpop.permute.xlu0 %897
    %v900 = vmul.f32 %v893, %v898
    %902 = vrot.lane.b32.xlu0 %v900, 32
    %v903 = vpop.permute.xlu0 %902
    %v905 = vadd.f32 %v895, %v903
    %v906 = vtanh.pop %v905
    %908 = vrot.lane.b32.xlu0 %v906, 64
    %v909 = vpop.permute.xlu0 %908
    %v911 = vmul.f32 %v893, %v909
    %v914 = vunpack.c.l.s4 1983009808
    %v915 = vunpack.c.0.s8 %v914
    %v916 = vlaneseq
    %v917 = vshrl.u32 %v916, 7
    %v918 = vsub.s32 %v915, %v917
    %v919 = vrot.slane %v889, %v918
    %920 = vrot.lane.b32.xlu0 %v919, 32
    %v921 = vpop.permute.xlu0 %920
    %s923 = scalar_lea.vmem [#allocation3], 6
    %924 = vst.msk [vmem:[%s923] sm:$0x3] %vm539, %v921
    %v927 = vunpack.c.l.s4 1983009808
    %v928 = vunpack.c.0.s8 %v927
    %v929 = vlaneseq
    %v930 = vshrl.u32 %v929, 7
    %v931 = vsub.s32 %v928, %v930
    %v932 = vrot.slane %v911, %v931
    %933 = vrot.lane.b32.xlu0 %v932, 32
    %v934 = vpop.permute.xlu0 %933
    %s936 = scalar_lea.vmem [#allocation4], 8
    %937 = vst.msk [vmem:[%s936] sm:$0x3] %vm539, %v934
    %938 = vrot.lane.b32.xlu0 %v932, 64
    %v939 = vpop.permute.xlu0 %938
    %v941 = vsel %vm287, %v921, %v939
    %v942 = vpack.c.bf16 %v941, %v941
    %v944 = vsel %vm431, %v942, 0
    %946 = vmatprep.subr.bf16.mxu0 0
    %947 = vmatpush1.bf16.msra.mxu0 0
    %948 = vmatprep.subr.bf16.mxu0 0
    %949 = vmatpush1.bf16.msra.mxu0 0
    %950 = vmatprep.subr.bf16.mxu0 0
    %951 = vmatpush1.bf16.msra.mxu0 0
    %952 = vmatprep.subr.bf16.mxu0 0
    %953 = vmatpush1.bf16.msra.mxu0 0
    %954 = vmatprep.subr.bf16.mxu0 %v422
    %955 = vmatpush1.bf16.msra.mxu0 %v421
    %956 = vmatprep.subr.bf16.mxu0 %v420
    %957 = vmatpush1.bf16.msra.mxu0 %v419
    %958 = vmatprep.subr.bf16.mxu0 %v418
    %959 = vmatpush1.bf16.msra.mxu0 %v417
    %960 = vmatprep.subr.bf16.mxu0 %v416
    %961 = vmatpush1.bf16.msra.mxu0 %v415
    %962 = vmatprep.subr.bf16.mxu0 0
    %963 = vmatpush2.bf16.msra.mxu0 0
    %964 = vmatprep.subr.bf16.mxu0 0
    %965 = vmatpush2.bf16.msra.mxu0 0
    %966 = vmatprep.subr.bf16.mxu0 0
    %967 = vmatpush2.bf16.msra.mxu0 0
    %968 = vmatprep.subr.bf16.mxu0 0
    %969 = vmatpush2.bf16.msra.mxu0 0
    %970 = vmatprep.subr.bf16.mxu0 0
    %971 = vmatpush2.bf16.msra.mxu0 0
    %972 = vmatprep.subr.bf16.mxu0 0
    %973 = vmatpush2.bf16.msra.mxu0 0
    %974 = vmatprep.subr.bf16.mxu0 0
    %975 = vmatpush2.bf16.msra.mxu0 0
    %976 = vmatprep.subr.bf16.mxu0 0
    %977 = vmatpush2.bf16.msra.mxu0 0
    %978 = vmatprep.mubr.bf16.mxu0 0
    %979 = vmatmul.mubr.bf16.gmra.mxu0 %v944
    %v980 = vpop.f32.mrf.mxu0
    %v981 = vadd.f32 0.0, %v980
    %v982 = vpop.f32.mrf.mxu0
    %v983 = vadd.f32 0.0, %v982
    %v984 = vpop.f32.mrf.mxu0
    %v985 = vpop.f32.mrf.mxu0
    %986 = vdwg.mxu0
    %v987 = vld [vmem:[%s861] sm:$0xf]
    %v988 = vld [vmem:[%s859] sm:$0xf]
    %v989 = vadd.f32 %v987, %v981
    %v991 = vrot.slane %v988, 2
    %v993 = vadd.f32 %v991, %v983
    %v994 = vmul.f32 %v989, 0.5
    %v995 = vtanh.pop %v994
    %v996 = vmul.f32 %v995, 0.5
    %v997 = vadd.f32 %v996, 0.5
    %v998 = vtanh.pop %v989
    %v999 = vmul.f32 %v997, %v883
    %1001 = vrot.lane.b32.xlu0 %v998, 64
    %v1002 = vpop.permute.xlu0 %1001
    %v1004 = vmul.f32 %v997, %v1002
    %1006 = vrot.lane.b32.xlu0 %v1004, 32
    %v1007 = vpop.permute.xlu0 %1006
    %v1009 = vadd.f32 %v999, %v1007
    %v1010 = vtanh.pop %v1009
    %1012 = vrot.lane.b32.xlu0 %v1010, 64
    %v1013 = vpop.permute.xlu0 %1012
    %v1015 = vmul.f32 %v997, %v1013
    %v1016 = vmul.f32 %v993, 0.5
    %v1017 = vtanh.pop %v1016
    %v1018 = vmul.f32 %v1017, 0.5
    %v1019 = vadd.f32 %v1018, 0.5
    %v1020 = vtanh.pop %v993
    %v1021 = vmul.f32 %v1019, %v905
    %1023 = vrot.lane.b32.xlu0 %v1020, 64
    %v1024 = vpop.permute.xlu0 %1023
    %v1026 = vmul.f32 %v1019, %v1024
    %1028 = vrot.lane.b32.xlu0 %v1026, 32
    %v1029 = vpop.permute.xlu0 %1028
    %v1031 = vadd.f32 %v1021, %v1029
    %v1032 = vtanh.pop %v1031
    %1034 = vrot.lane.b32.xlu0 %v1032, 64
    %v1035 = vpop.permute.xlu0 %1034
    %v1037 = vmul.f32 %v1019, %v1035
    %v1040 = vunpack.c.l.s4 1983009808
    %v1041 = vunpack.c.0.s8 %v1040
    %v1042 = vlaneseq
    %v1043 = vshrl.u32 %v1042, 7
    %v1044 = vsub.s32 %v1041, %v1043
    %v1045 = vrot.slane %v1015, %v1044
    %1046 = vrot.lane.b32.xlu0 %v1045, 32
    %v1047 = vpop.permute.xlu0 %1046
    %s1049 = scalar_lea.vmem [#allocation3], 8
    %1050 = vst.msk [vmem:[%s1049] sm:$0x3] %vm539, %v1047
    %v1053 = vunpack.c.l.s4 1983009808
    %v1054 = vunpack.c.0.s8 %v1053
    %v1055 = vlaneseq
    %v1056 = vshrl.u32 %v1055, 7
    %v1057 = vsub.s32 %v1054, %v1056
    %v1058 = vrot.slane %v1037, %v1057
    %1059 = vrot.lane.b32.xlu0 %v1058, 32
    %v1060 = vpop.permute.xlu0 %1059
    %s1062 = scalar_lea.vmem [#allocation4], 6
    %1063 = vst.msk [vmem:[%s1062] sm:$0x3] %vm539, %v1060
    %1064 = vrot.lane.b32.xlu0 %v1058, 64
    %v1065 = vpop.permute.xlu0 %1064
    %v1067 = vsel %vm287, %v1047, %v1065
    %v1068 = vpack.c.bf16 %v1067, %v1067
    %v1070 = vsel %vm431, %v1068, 0
    %1072 = vmatprep.subr.bf16.mxu0 0
    %1073 = vmatpush1.bf16.msra.mxu0 0
    %1074 = vmatprep.subr.bf16.mxu0 0
    %1075 = vmatpush1.bf16.msra.mxu0 0
    %1076 = vmatprep.subr.bf16.mxu0 0
    %1077 = vmatpush1.bf16.msra.mxu0 0
    %1078 = vmatprep.subr.bf16.mxu0 0
    %1079 = vmatpush1.bf16.msra.mxu0 0
    %1080 = vmatprep.subr.bf16.mxu0 %v422
    %1081 = vmatpush1.bf16.msra.mxu0 %v421
    %1082 = vmatprep.subr.bf16.mxu0 %v420
    %1083 = vmatpush1.bf16.msra.mxu0 %v419
    %1084 = vmatprep.subr.bf16.mxu0 %v418
    %1085 = vmatpush1.bf16.msra.mxu0 %v417
    %1086 = vmatprep.subr.bf16.mxu0 %v416
    %1087 = vmatpush1.bf16.msra.mxu0 %v415
    %1088 = vmatprep.subr.bf16.mxu0 0
    %1089 = vmatpush2.bf16.msra.mxu0 0
    %1090 = vmatprep.subr.bf16.mxu0 0
    %1091 = vmatpush2.bf16.msra.mxu0 0
    %1092 = vmatprep.subr.bf16.mxu0 0
    %1093 = vmatpush2.bf16.msra.mxu0 0
    %1094 = vmatprep.subr.bf16.mxu0 0
    %1095 = vmatpush2.bf16.msra.mxu0 0
    %1096 = vmatprep.subr.bf16.mxu0 0
    %1097 = vmatpush2.bf16.msra.mxu0 0
    %1098 = vmatprep.subr.bf16.mxu0 0
    %1099 = vmatpush2.bf16.msra.mxu0 0
    %1100 = vmatprep.subr.bf16.mxu0 0
    %1101 = vmatpush2.bf16.msra.mxu0 0
    %1102 = vmatprep.subr.bf16.mxu0 0
    %1103 = vmatpush2.bf16.msra.mxu0 0
    %1104 = vmatprep.mubr.bf16.mxu0 0
    %1105 = vmatmul.mubr.bf16.gmra.mxu0 %v1070
    %v1106 = vpop.f32.mrf.mxu0
    %v1107 = vadd.f32 0.0, %v1106
    %v1108 = vpop.f32.mrf.mxu0
    %v1109 = vadd.f32 0.0, %v1108
    %v1110 = vpop.f32.mrf.mxu0
    %v1111 = vpop.f32.mrf.mxu0
    %1112 = vdwg.mxu0
    %v1113 = vld [vmem:[%s733] sm:$0xf]
    %v1114 = vld [vmem:[%s731] sm:$0xf]
    %v1115 = vadd.f32 %v1113, %v1107
    %v1117 = vrot.slane %v1114, 2
    %v1119 = vadd.f32 %v1117, %v1109
    %v1120 = vmul.f32 %v1115, 0.5
    %v1121 = vtanh.pop %v1120
    %v1122 = vmul.f32 %v1121, 0.5
    %v1123 = vadd.f32 %v1122, 0.5
    %v1124 = vtanh.pop %v1115
    %v1125 = vmul.f32 %v1123, %v1009
    %1127 = vrot.lane.b32.xlu0 %v1124, 64
    %v1128 = vpop.permute.xlu0 %1127
    %v1130 = vmul.f32 %v1123, %v1128
    %1132 = vrot.lane.b32.xlu0 %v1130, 32
    %v1133 = vpop.permute.xlu0 %1132
    %v1135 = vadd.f32 %v1125, %v1133
    %v1136 = vtanh.pop %v1135
    %1138 = vrot.lane.b32.xlu0 %v1136, 64
    %v1139 = vpop.permute.xlu0 %1138
    %v1141 = vmul.f32 %v1123, %v1139
    %v1142 = vmul.f32 %v1119, 0.5
    %v1143 = vtanh.pop %v1142
    %v1144 = vmul.f32 %v1143, 0.5
    %v1145 = vadd.f32 %v1144, 0.5
    %v1146 = vtanh.pop %v1119
    %v1147 = vmul.f32 %v1145, %v1031
    %1149 = vrot.lane.b32.xlu0 %v1146, 64
    %v1150 = vpop.permute.xlu0 %1149
    %v1152 = vmul.f32 %v1145, %v1150
    %1154 = vrot.lane.b32.xlu0 %v1152, 32
    %v1155 = vpop.permute.xlu0 %1154
    %v1157 = vadd.f32 %v1147, %v1155
    %v1158 = vtanh.pop %v1157
    %1160 = vrot.lane.b32.xlu0 %v1158, 64
    %v1161 = vpop.permute.xlu0 %1160
    %v1163 = vmul.f32 %v1145, %v1161
    %v1166 = vunpack.c.l.s4 1983009808
    %v1167 = vunpack.c.0.s8 %v1166
    %v1168 = vlaneseq
    %v1169 = vshrl.u32 %v1168, 7
    %v1170 = vsub.s32 %v1167, %v1169
    %v1171 = vrot.slane %v1141, %v1170
    %1172 = vrot.lane.b32.xlu0 %v1171, 32
    %v1173 = vpop.permute.xlu0 %1172
    %s1175 = scalar_lea.vmem [#allocation3], 10
    %1176 = vst.msk [vmem:[%s1175] sm:$0x3] %vm539, %v1173
    %v1179 = vunpack.c.l.s4 1983009808
    %v1180 = vunpack.c.0.s8 %v1179
    %v1181 = vlaneseq
    %v1182 = vshrl.u32 %v1181, 7
    %v1183 = vsub.s32 %v1180, %v1182
    %v1184 = vrot.slane %v1163, %v1183
    %1185 = vrot.lane.b32.xlu0 %v1184, 32
    %v1186 = vpop.permute.xlu0 %1185
    %s1188 = scalar_lea.vmem [#allocation4], 4
    %1189 = vst.msk [vmem:[%s1188] sm:$0x3] %vm539, %v1186
    %1190 = vrot.lane.b32.xlu0 %v1184, 64
    %v1191 = vpop.permute.xlu0 %1190
    %v1193 = vsel %vm287, %v1173, %v1191
    %v1194 = vpack.c.bf16 %v1193, %v1193
    %v1196 = vsel %vm431, %v1194, 0
    %1198 = vmatprep.subr.bf16.mxu0 0
    %1199 = vmatpush1.bf16.msra.mxu0 0
    %1200 = vmatprep.subr.bf16.mxu0 0
    %1201 = vmatpush1.bf16.msra.mxu0 0
    %1202 = vmatprep.subr.bf16.mxu0 0
    %1203 = vmatpush1.bf16.msra.mxu0 0
    %1204 = vmatprep.subr.bf16.mxu0 0
    %1205 = vmatpush1.bf16.msra.mxu0 0
    %1206 = vmatprep.subr.bf16.mxu0 %v422
    %1207 = vmatpush1.bf16.msra.mxu0 %v421
    %1208 = vmatprep.subr.bf16.mxu0 %v420
    %1209 = vmatpush1.bf16.msra.mxu0 %v419
    %1210 = vmatprep.subr.bf16.mxu0 %v418
    %1211 = vmatpush1.bf16.msra.mxu0 %v417
    %1212 = vmatprep.subr.bf16.mxu0 %v416
    %1213 = vmatpush1.bf16.msra.mxu0 %v415
    %1214 = vmatprep.subr.bf16.mxu0 0
    %1215 = vmatpush2.bf16.msra.mxu0 0
    %1216 = vmatprep.subr.bf16.mxu0 0
    %1217 = vmatpush2.bf16.msra.mxu0 0
    %1218 = vmatprep.subr.bf16.mxu0 0
    %1219 = vmatpush2.bf16.msra.mxu0 0
    %1220 = vmatprep.subr.bf16.mxu0 0
    %1221 = vmatpush2.bf16.msra.mxu0 0
    %1222 = vmatprep.subr.bf16.mxu0 0
    %1223 = vmatpush2.bf16.msra.mxu0 0
    %1224 = vmatprep.subr.bf16.mxu0 0
    %1225 = vmatpush2.bf16.msra.mxu0 0
    %1226 = vmatprep.subr.bf16.mxu0 0
    %1227 = vmatpush2.bf16.msra.mxu0 0
    %1228 = vmatprep.subr.bf16.mxu0 0
    %1229 = vmatpush2.bf16.msra.mxu0 0
    %1230 = vmatprep.mubr.bf16.mxu0 0
    %1231 = vmatmul.mubr.bf16.gmra.mxu0 %v1196
    %v1232 = vpop.f32.mrf.mxu0
    %v1233 = vadd.f32 0.0, %v1232
    %v1234 = vpop.f32.mrf.mxu0
    %v1235 = vadd.f32 0.0, %v1234
    %v1236 = vpop.f32.mrf.mxu0
    %v1237 = vpop.f32.mrf.mxu0
    %1238 = vdwg.mxu0
    %v1239 = vld [vmem:[%s605] sm:$0xf]
    %v1240 = vld [vmem:[%s603] sm:$0xf]
    %v1241 = vadd.f32 %v1239, %v1233
    %v1243 = vrot.slane %v1240, 2
    %v1245 = vadd.f32 %v1243, %v1235
    %v1246 = vmul.f32 %v1241, 0.5
    %v1247 = vtanh.pop %v1246
    %v1248 = vmul.f32 %v1247, 0.5
    %v1249 = vadd.f32 %v1248, 0.5
    %v1250 = vtanh.pop %v1241
    %v1251 = vmul.f32 %v1249, %v1135
    %1253 = vrot.lane.b32.xlu0 %v1250, 64
    %v1254 = vpop.permute.xlu0 %1253
    %v1256 = vmul.f32 %v1249, %v1254
    %1258 = vrot.lane.b32.xlu0 %v1256, 32
    %v1259 = vpop.permute.xlu0 %1258
    %v1261 = vadd.f32 %v1251, %v1259
    %v1262 = vtanh.pop %v1261
    %1264 = vrot.lane.b32.xlu0 %v1262, 64
    %v1265 = vpop.permute.xlu0 %1264
    %v1267 = vmul.f32 %v1249, %v1265
    %v1268 = vmul.f32 %v1245, 0.5
    %v1269 = vtanh.pop %v1268
    %v1270 = vmul.f32 %v1269, 0.5
    %v1271 = vadd.f32 %v1270, 0.5
    %v1272 = vtanh.pop %v1245
    %v1273 = vmul.f32 %v1271, %v1157
    %1275 = vrot.lane.b32.xlu0 %v1272, 64
    %v1276 = vpop.permute.xlu0 %1275
    %v1278 = vmul.f32 %v1271, %v1276
    %1280 = vrot.lane.b32.xlu0 %v1278, 32
    %v1281 = vpop.permute.xlu0 %1280
    %v1283 = vadd.f32 %v1273, %v1281
    %v1284 = vtanh.pop %v1283
    %1286 = vrot.lane.b32.xlu0 %v1284, 64
    %v1287 = vpop.permute.xlu0 %1286
    %v1289 = vmul.f32 %v1271, %v1287
    %v1292 = vunpack.c.l.s4 1983009808
    %v1293 = vunpack.c.0.s8 %v1292
    %v1294 = vlaneseq
    %v1295 = vshrl.u32 %v1294, 7
    %v1296 = vsub.s32 %v1293, %v1295
    %v1297 = vrot.slane %v1267, %v1296
    %1298 = vrot.lane.b32.xlu0 %v1297, 32
    %v1299 = vpop.permute.xlu0 %1298
    %s1301 = scalar_lea.vmem [#allocation3], 12
    %1302 = vst.msk [vmem:[%s1301] sm:$0x3] %vm539, %v1299
    %v1305 = vunpack.c.l.s4 1983009808
    %v1306 = vunpack.c.0.s8 %v1305
    %v1307 = vlaneseq
    %v1308 = vshrl.u32 %v1307, 7
    %v1309 = vsub.s32 %v1306, %v1308
    %v1310 = vrot.slane %v1289, %v1309
    %1311 = vrot.lane.b32.xlu0 %v1310, 32
    %v1312 = vpop.permute.xlu0 %1311
    %s1314 = scalar_lea.vmem [#allocation4], 2
    %1315 = vst.msk [vmem:[%s1314] sm:$0x3] %vm539, %v1312
    %1316 = vrot.lane.b32.xlu0 %v1310, 64
    %v1317 = vpop.permute.xlu0 %1316
    %v1319 = vsel %vm287, %v1299, %v1317
    %v1320 = vpack.c.bf16 %v1319, %v1319
    %v1322 = vsel %vm431, %v1320, 0
    %1324 = vmatprep.subr.bf16.mxu0 0
    %1325 = vmatpush1.bf16.msra.mxu0 0
    %1326 = vmatprep.subr.bf16.mxu0 0
    %1327 = vmatpush1.bf16.msra.mxu0 0
    %1328 = vmatprep.subr.bf16.mxu0 0
    %1329 = vmatpush1.bf16.msra.mxu0 0
    %1330 = vmatprep.subr.bf16.mxu0 0
    %1331 = vmatpush1.bf16.msra.mxu0 0
    %1332 = vmatprep.subr.bf16.mxu0 %v422
    %1333 = vmatpush1.bf16.msra.mxu0 %v421
    %1334 = vmatprep.subr.bf16.mxu0 %v420
    %1335 = vmatpush1.bf16.msra.mxu0 %v419
    %1336 = vmatprep.subr.bf16.mxu0 %v418
    %1337 = vmatpush1.bf16.msra.mxu0 %v417
    %1338 = vmatprep.subr.bf16.mxu0 %v416
    %1339 = vmatpush1.bf16.msra.mxu0 %v415
    %1340 = vmatprep.subr.bf16.mxu0 0
    %1341 = vmatpush2.bf16.msra.mxu0 0
    %1342 = vmatprep.subr.bf16.mxu0 0
    %1343 = vmatpush2.bf16.msra.mxu0 0
    %1344 = vmatprep.subr.bf16.mxu0 0
    %1345 = vmatpush2.bf16.msra.mxu0 0
    %1346 = vmatprep.subr.bf16.mxu0 0
    %1347 = vmatpush2.bf16.msra.mxu0 0
    %1348 = vmatprep.subr.bf16.mxu0 0
    %1349 = vmatpush2.bf16.msra.mxu0 0
    %1350 = vmatprep.subr.bf16.mxu0 0
    %1351 = vmatpush2.bf16.msra.mxu0 0
    %1352 = vmatprep.subr.bf16.mxu0 0
    %1353 = vmatpush2.bf16.msra.mxu0 0
    %1354 = vmatprep.subr.bf16.mxu0 0
    %1355 = vmatpush2.bf16.msra.mxu0 0
    %1356 = vmatprep.mubr.bf16.mxu0 0
    %1357 = vmatmul.mubr.bf16.gmra.mxu0 %v1322
    %v1358 = vpop.f32.mrf.mxu0
    %v1359 = vadd.f32 0.0, %v1358
    %v1360 = vpop.f32.mrf.mxu0
    %v1361 = vadd.f32 0.0, %v1360
    %v1362 = vpop.f32.mrf.mxu0
    %v1363 = vpop.f32.mrf.mxu0
    %1364 = vdwg.mxu0
    %v1365 = vld [vmem:[%s477] sm:$0xf]
    %v1366 = vld [vmem:[#allocation2] sm:$0xf]
    %v1367 = vadd.f32 %v1365, %v1359
    %v1369 = vrot.slane %v1366, 2
    %v1371 = vadd.f32 %v1369, %v1361
    %v1372 = vmul.f32 %v1367, 0.5
    %v1373 = vtanh.pop %v1372
    %v1374 = vmul.f32 %v1373, 0.5
    %v1375 = vadd.f32 %v1374, 0.5
    %v1376 = vtanh.pop %v1367
    %v1377 = vmul.f32 %v1375, %v1261
    %1379 = vrot.lane.b32.xlu0 %v1376, 64
    %v1380 = vpop.permute.xlu0 %1379
    %v1382 = vmul.f32 %v1375, %v1380
    %1384 = vrot.lane.b32.xlu0 %v1382, 32
    %v1385 = vpop.permute.xlu0 %1384
    %v1387 = vadd.f32 %v1377, %v1385
    %v1388 = vtanh.pop %v1387
    %1390 = vrot.lane.b32.xlu0 %v1388, 64
    %v1391 = vpop.permute.xlu0 %1390
    %v1393 = vmul.f32 %v1375, %v1391
    %v1394 = vmul.f32 %v1371, 0.5
    %v1395 = vtanh.pop %v1394
    %v1396 = vmul.f32 %v1395, 0.5
    %v1397 = vadd.f32 %v1396, 0.5
    %v1398 = vtanh.pop %v1371
    %v1399 = vmul.f32 %v1397, %v1283
    %1401 = vrot.lane.b32.xlu0 %v1398, 64
    %v1402 = vpop.permute.xlu0 %1401
    %v1404 = vmul.f32 %v1397, %v1402
    %1406 = vrot.lane.b32.xlu0 %v1404, 32
    %v1407 = vpop.permute.xlu0 %1406
    %v1409 = vadd.f32 %v1399, %v1407
    %v1410 = vtanh.pop %v1409
    %1412 = vrot.lane.b32.xlu0 %v1410, 64
    %v1413 = vpop.permute.xlu0 %1412
    %v1415 = vmul.f32 %v1397, %v1413
    %v1418 = vunpack.c.l.s4 1983009808
    %v1419 = vunpack.c.0.s8 %v1418
    %v1420 = vlaneseq
    %v1421 = vshrl.u32 %v1420, 7
    %v1422 = vsub.s32 %v1419, %v1421
    %v1423 = vrot.slane %v1393, %v1422
    %1424 = vrot.lane.b32.xlu0 %v1423, 32
    %v1425 = vpop.permute.xlu0 %1424
    %s1427 = scalar_lea.vmem [#allocation3], 14
    %1428 = vst.msk [vmem:[%s1427] sm:$0x3] %vm539, %v1425
    %v1431 = vunpack.c.l.s4 1983009808
    %v1432 = vunpack.c.0.s8 %v1431
    %v1433 = vlaneseq
    %v1434 = vshrl.u32 %v1433, 7
    %v1435 = vsub.s32 %v1432, %v1434
    %v1436 = vrot.slane %v1415, %v1435
    %1437 = vrot.lane.b32.xlu0 %v1436, 32
    %v1438 = vpop.permute.xlu0 %1437
    %1440 = vst.msk [vmem:[#allocation4] sm:$0x3] %vm539, %v1438
    %v1441 = vld [vmem:[#allocation3] sm:$0x3]
    %v1442 = vld [vmem:[#allocation3 + $0x2] sm:$0x3]
    %v1443 = vld [vmem:[#allocation3 + $0x4] sm:$0x3]
    %v1444 = vld [vmem:[#allocation3 + $0x6] sm:$0x3]
    %v1445 = vld [vmem:[#allocation3 + $0x8] sm:$0x3]
    %v1446 = vld [vmem:[#allocation3 + $0xa] sm:$0x3]
    %v1447 = vld [vmem:[#allocation3 + $0xc] sm:$0x3]
    %v1448 = vld [vmem:[#allocation3 + $0xe] sm:$0x3]
    %v1449 = vld [vmem:[#allocation4] sm:$0x3]
    %v1450 = vld [vmem:[#allocation4 + $0x2] sm:$0x3]
    %v1451 = vld [vmem:[#allocation4 + $0x4] sm:$0x3]
    %v1452 = vld [vmem:[#allocation4 + $0x6] sm:$0x3]
    %v1453 = vld [vmem:[#allocation4 + $0x8] sm:$0x3]
    %v1454 = vld [vmem:[#allocation4 + $0xa] sm:$0x3]
    %v1455 = vld [vmem:[#allocation4 + $0xc] sm:$0x3]
    %v1456 = vld [vmem:[#allocation4 + $0xe] sm:$0x3]
    %1465 = vrot.lane.b32.xlu0 %v1449, 32
    %v1466 = vpop.permute.xlu0 %1465
    %1467 = vrot.lane.b32.xlu0 %v1450, 32
    %v1468 = vpop.permute.xlu0 %1467
    %1469 = vrot.lane.b32.xlu0 %v1451, 32
    %v1470 = vpop.permute.xlu0 %1469
    %1471 = vrot.lane.b32.xlu0 %v1452, 32
    %v1472 = vpop.permute.xlu0 %1471
    %1473 = vrot.lane.b32.xlu0 %v1453, 32
    %v1474 = vpop.permute.xlu0 %1473
    %1475 = vrot.lane.b32.xlu0 %v1454, 32
    %v1476 = vpop.permute.xlu0 %1475
    %1477 = vrot.lane.b32.xlu0 %v1455, 32
    %v1478 = vpop.permute.xlu0 %1477
    %1479 = vrot.lane.b32.xlu0 %v1456, 32
    %v1480 = vpop.permute.xlu0 %1479
    %v1489 = vsel %vm287, %v1441, %v1466
    %v1490 = vsel %vm287, %v1442, %v1468
    %v1491 = vsel %vm287, %v1443, %v1470
    %v1492 = vsel %vm287, %v1444, %v1472
    %v1493 = vsel %vm287, %v1445, %v1474
    %v1494 = vsel %vm287, %v1446, %v1476
    %v1495 = vsel %vm287, %v1447, %v1478
    %v1496 = vsel %vm287, %v1448, %v1480
    %v1497 = vld [vmem:[#allocation10] sm:$0xff]
    %v1498 = vld [vmem:[#allocation10 + $0x8] sm:$0xff]
    %v1499 = vld [vmem:[#allocation10 + $0x10] sm:$0xff]
    %v1500 = vld [vmem:[#allocation10 + $0x18] sm:$0xff]
    %v1501 = vld [vmem:[#allocation10 + $0x20] sm:$0xff]
    %v1502 = vld [vmem:[#allocation10 + $0x28] sm:$0xff]
    %v1503 = vld [vmem:[#allocation10 + $0x30] sm:$0xff]
    %v1504 = vld [vmem:[#allocation10 + $0x38] sm:$0xff]
    %v1505 = vld [vmem:[#allocation12] sm:$0xff]
    %v1506 = vld [vmem:[#allocation12 + $0x8] sm:$0xff]
    %v1507 = vld [vmem:[#allocation12 + $0x10] sm:$0xff]
    %v1508 = vld [vmem:[#allocation12 + $0x18] sm:$0xff]
    %v1509 = vld [vmem:[#allocation12 + $0x20] sm:$0xff]
    %v1510 = vld [vmem:[#allocation12 + $0x28] sm:$0xff]
    %v1511 = vld [vmem:[#allocation12 + $0x30] sm:$0xff]
    %v1512 = vld [vmem:[#allocation12 + $0x38] sm:$0xff]
    %v1513 = vld [vmem:[%s8] sm:$0x3]
    %v1522 = vcombine.low %v1489, %v1490
    %v1523 = vcombine.low %v1491, %v1492
    %v1525 = vunpack.c.l.s4 1983009808
    %v1526 = vunpack.c.0.s8 %v1525
    %v1527 = vlaneseq
    %v1528 = vshrl.u32 %v1527, 7
    %v1529 = vsub.s32 %v1526, %v1528
    %v1530 = vrot.slane %v1522, %v1529
    %v1532 = vunpack.c.l.s4 1983009808
    %v1533 = vunpack.c.0.s8 %v1532
    %v1534 = vlaneseq
    %v1535 = vshrl.u32 %v1534, 7
    %v1536 = vsub.s32 %v1533, %v1535
    %v1537 = vrot.slane %v1523, %v1536
    %v1538 = vcombine.low %v1530, %v1537
    %v1539 = vcombine.low %v1493, %v1494
    %v1540 = vcombine.low %v1495, %v1496
    %v1542 = vunpack.c.l.s4 1983009808
    %v1543 = vunpack.c.0.s8 %v1542
    %v1544 = vlaneseq
    %v1545 = vshrl.u32 %v1544, 7
    %v1546 = vsub.s32 %v1543, %v1545
    %v1547 = vrot.slane %v1539, %v1546
    %v1549 = vunpack.c.l.s4 1983009808
    %v1550 = vunpack.c.0.s8 %v1549
    %v1551 = vlaneseq
    %v1552 = vshrl.u32 %v1551, 7
    %v1553 = vsub.s32 %v1550, %v1552
    %v1554 = vrot.slane %v1540, %v1553
    %v1555 = vcombine.low %v1547, %v1554
    %v1558 = vpack.c.bf16 %v1555, %v1538
    %v1560 = vlaneseq
    %v1561 = vshrl.u32 %v1560, 7
    %v1562 = vsub.s32 0, %v1561
    %v1563 = vrot.slane %v1513, %v1562
    %v1564 = vlaneseq
    %v1565 = vshrl.u32 %v1564, 7
    %v1566 = vsub.s32 1, %v1565
    %v1567 = vrot.slane %v1513, %v1566
    %v1578 = vunpack.c.l.b16 %v1497
    %v1579 = vunpack.c.h.b16 %v1497
    %v1580 = vunpack.c.l.b16 %v1498
    %v1581 = vunpack.c.h.b16 %v1498
    %v1582 = vunpack.c.l.b16 %v1499
    %v1583 = vunpack.c.h.b16 %v1499
    %v1584 = vunpack.c.l.b16 %v1500
    %v1585 = vunpack.c.h.b16 %v1500
    %v1586 = vunpack.c.l.b16 %v1501
    %v1587 = vunpack.c.h.b16 %v1501
    %v1588 = vunpack.c.l.b16 %v1502
    %v1589 = vunpack.c.h.b16 %v1502
    %v1590 = vunpack.c.l.b16 %v1503
    %v1591 = vunpack.c.h.b16 %v1503
    %v1592 = vunpack.c.l.b16 %v1504
    %v1593 = vunpack.c.h.b16 %v1504
    %v1594 = vpack.c.b16 %v1580, %v1578
    %v1595 = vpack.c.b16 %v1581, %v1579
    %v1596 = vpack.c.b16 %v1584, %v1582
    %v1597 = vpack.c.b16 %v1585, %v1583
    %v1598 = vpack.c.b16 %v1588, %v1586
    %v1599 = vpack.c.b16 %v1589, %v1587
    %v1600 = vpack.c.b16 %v1592, %v1590
    %v1601 = vpack.c.b16 %v1593, %v1591
    %v1611 = vsel %vm431, %v1558, 0
    %1613 = vmatprep.subr.bf16.mxu0 0
    %1614 = vmatpush1.bf16.msra.mxu0 0
    %1615 = vmatprep.subr.bf16.mxu0 0
    %1616 = vmatpush1.bf16.msra.mxu0 0
    %1617 = vmatprep.subr.bf16.mxu0 0
    %1618 = vmatpush1.bf16.msra.mxu0 0
    %1619 = vmatprep.subr.bf16.mxu0 0
    %1620 = vmatpush1.bf16.msra.mxu0 0
    %1621 = vmatprep.subr.bf16.mxu0 %v1601
    %1622 = vmatpush1.bf16.msra.mxu0 %v1600
    %1623 = vmatprep.subr.bf16.mxu0 %v1599
    %1624 = vmatpush1.bf16.msra.mxu0 %v1598
    %1625 = vmatprep.subr.bf16.mxu0 %v1597
    %1626 = vmatpush1.bf16.msra.mxu0 %v1596
    %1627 = vmatprep.subr.bf16.mxu0 %v1595
    %1628 = vmatpush1.bf16.msra.mxu0 %v1594
    %1629 = vmatprep.subr.bf16.mxu0 0
    %1630 = vmatpush2.bf16.msra.mxu0 0
    %1631 = vmatprep.subr.bf16.mxu0 0
    %1632 = vmatpush2.bf16.msra.mxu0 0
    %1633 = vmatprep.subr.bf16.mxu0 0
    %1634 = vmatpush2.bf16.msra.mxu0 0
    %1635 = vmatprep.subr.bf16.mxu0 0
    %1636 = vmatpush2.bf16.msra.mxu0 0
    %1637 = vmatprep.subr.bf16.mxu0 0
    %1638 = vmatpush2.bf16.msra.mxu0 0
    %1639 = vmatprep.subr.bf16.mxu0 0
    %1640 = vmatpush2.bf16.msra.mxu0 0
    %1641 = vmatprep.subr.bf16.mxu0 0
    %1642 = vmatpush2.bf16.msra.mxu0 0
    %1643 = vmatprep.subr.bf16.mxu0 0
    %1644 = vmatpush2.bf16.msra.mxu0 0
    %1645 = vmatprep.mubr.bf16.mxu0 0
    %1646 = vmatmul.mubr.bf16.gmra.mxu0 %v1611
    %v1647 = vpop.f32.mrf.mxu0
    %v1648 = vadd.f32 %v1563, %v1647
    %v1649 = vpop.f32.mrf.mxu0
    %v1650 = vadd.f32 %v1567, %v1649
    %v1651 = vpop.f32.mrf.mxu0
    %v1652 = vadd.f32 %v1563, %v1651
    %v1653 = vpop.f32.mrf.mxu0
    %v1654 = vadd.f32 %v1567, %v1653
    %1655 = vdwg.mxu0
    %v1660 = vcombine.low %v1648, %v1650
    %v1661 = vcombine.high %v1648, %v1650
    %v1663 = vunpack.c.l.s4 1983009808
    %v1664 = vunpack.c.0.s8 %v1663
    %v1665 = vlaneseq
    %v1666 = vshrl.u32 %v1665, 7
    %v1667 = vsub.s32 %v1664, %v1666
    %v1668 = vrot.slane %v1660, %v1667
    %v1670 = vunpack.c.l.s4 1983009808
    %v1671 = vunpack.c.0.s8 %v1670
    %v1672 = vlaneseq
    %v1673 = vshrl.u32 %v1672, 7
    %v1674 = vsub.s32 %v1671, %v1673
    %v1675 = vrot.slane %v1661, %v1674
    %v1676 = vcombine.high %v1668, %v1668
    %v1677 = vcombine.high %v1675, %v1675
    %v1678 = vcombine.low %v1652, %v1654
    %v1679 = vcombine.high %v1652, %v1654
    %v1681 = vunpack.c.l.s4 1983009808
    %v1682 = vunpack.c.0.s8 %v1681
    %v1683 = vlaneseq
    %v1684 = vshrl.u32 %v1683, 7
    %v1685 = vsub.s32 %v1682, %v1684
    %v1686 = vrot.slane %v1678, %v1685
    %v1688 = vunpack.c.l.s4 1983009808
    %v1689 = vunpack.c.0.s8 %v1688
    %v1690 = vlaneseq
    %v1691 = vshrl.u32 %v1690, 7
    %v1692 = vsub.s32 %v1689, %v1691
    %v1693 = vrot.slane %v1679, %v1692
    %v1694 = vcombine.high %v1686, %v1686
    %v1695 = vcombine.high %v1693, %v1693
    %1704 = vst [vmem:[#allocation2] sm:$0xf] %v1668
    %1705 = vst [vmem:[#allocation2 + $0x4] sm:$0xf] %v1676
    %1706 = vst [vmem:[#allocation2 + $0x8] sm:$0xf] %v1675
    %1707 = vst [vmem:[#allocation2 + $0xc] sm:$0xf] %v1677
    %1708 = vst [vmem:[#allocation2 + $0x10] sm:$0xf] %v1686
    %1709 = vst [vmem:[#allocation2 + $0x14] sm:$0xf] %v1694
    %1710 = vst [vmem:[#allocation2 + $0x18] sm:$0xf] %v1693
    %1711 = vst [vmem:[#allocation2 + $0x1c] sm:$0xf] %v1695
    %v1720 = vunpack.c.l.b16 %v1505
    %v1721 = vunpack.c.h.b16 %v1505
    %v1722 = vunpack.c.l.b16 %v1506
    %v1723 = vunpack.c.h.b16 %v1506
    %v1724 = vunpack.c.l.b16 %v1507
    %v1725 = vunpack.c.h.b16 %v1507
    %v1726 = vunpack.c.l.b16 %v1508
    %v1727 = vunpack.c.h.b16 %v1508
    %v1728 = vunpack.c.l.b16 %v1509
    %v1729 = vunpack.c.h.b16 %v1509
    %v1730 = vunpack.c.l.b16 %v1510
    %v1731 = vunpack.c.h.b16 %v1510
    %v1732 = vunpack.c.l.b16 %v1511
    %v1733 = vunpack.c.h.b16 %v1511
    %v1734 = vunpack.c.l.b16 %v1512
    %v1735 = vunpack.c.h.b16 %v1512
    %v1736 = vpack.c.b16 %v1722, %v1720
    %v1737 = vpack.c.b16 %v1723, %v1721
    %v1738 = vpack.c.b16 %v1726, %v1724
    %v1739 = vpack.c.b16 %v1727, %v1725
    %v1740 = vpack.c.b16 %v1730, %v1728
    %v1741 = vpack.c.b16 %v1731, %v1729
    %v1742 = vpack.c.b16 %v1734, %v1732
    %v1743 = vpack.c.b16 %v1735, %v1733
    %1752 = vmatprep.subr.bf16.mxu0 0
    %1753 = vmatpush1.bf16.msra.mxu0 0
    %1754 = vmatprep.subr.bf16.mxu0 0
    %1755 = vmatpush1.bf16.msra.mxu0 0
    %1756 = vmatprep.subr.bf16.mxu0 0
    %1757 = vmatpush1.bf16.msra.mxu0 0
    %1758 = vmatprep.subr.bf16.mxu0 0
    %1759 = vmatpush1.bf16.msra.mxu0 0
    %1760 = vmatprep.subr.bf16.mxu0 %v1743
    %1761 = vmatpush1.bf16.msra.mxu0 %v1742
    %1762 = vmatprep.subr.bf16.mxu0 %v1741
    %1763 = vmatpush1.bf16.msra.mxu0 %v1740
    %1764 = vmatprep.subr.bf16.mxu0 %v1739
    %1765 = vmatpush1.bf16.msra.mxu0 %v1738
    %1766 = vmatprep.subr.bf16.mxu0 %v1737
    %1767 = vmatpush1.bf16.msra.mxu0 %v1736
    %1768 = vmatprep.subr.bf16.mxu0 0
    %1769 = vmatpush2.bf16.msra.mxu0 0
    %1770 = vmatprep.subr.bf16.mxu0 0
    %1771 = vmatpush2.bf16.msra.mxu0 0
    %1772 = vmatprep.subr.bf16.mxu0 0
    %1773 = vmatpush2.bf16.msra.mxu0 0
    %1774 = vmatprep.subr.bf16.mxu0 0
    %1775 = vmatpush2.bf16.msra.mxu0 0
    %1776 = vmatprep.subr.bf16.mxu0 0
    %1777 = vmatpush2.bf16.msra.mxu0 0
    %1778 = vmatprep.subr.bf16.mxu0 0
    %1779 = vmatpush2.bf16.msra.mxu0 0
    %1780 = vmatprep.subr.bf16.mxu0 0
    %1781 = vmatpush2.bf16.msra.mxu0 0
    %1782 = vmatprep.subr.bf16.mxu0 0
    %1783 = vmatpush2.bf16.msra.mxu0 0
    %1784 = vmatprep.mubr.bf16.mxu0 0
    %1785 = vmatmul.mubr.bf16.gmra.mxu0 %v433
    %v1786 = vpop.f32.mrf.mxu0
    %v1787 = vadd.f32 0.0, %v1786
    %v1788 = vpop.f32.mrf.mxu0
    %v1789 = vadd.f32 0.0, %v1788
    %v1790 = vpop.f32.mrf.mxu0
    %v1791 = vpop.f32.mrf.mxu0
    %1792 = vdwg.mxu0
    %v1793 = vld [vmem:[#allocation2] sm:$0xf]
    %v1794 = vld [vmem:[%s477] sm:$0xf]
    %v1795 = vadd.f32 %v1793, %v1787
    %v1797 = vrot.slane %v1794, 2
    %v1799 = vadd.f32 %v1797, %v1789
    %v1800 = vmul.f32 %v1795, 0.5
    %v1801 = vtanh.pop %v1800
    %v1802 = vmul.f32 %v1801, 0.5
    %v1803 = vadd.f32 %v1802, 0.5
    %v1804 = vtanh.pop %v1795
    %v1805 = vmul.f32 %v1803, 0.0
    %1807 = vrot.lane.b32.xlu0 %v1804, 64
    %v1808 = vpop.permute.xlu0 %1807
    %v1810 = vmul.f32 %v1803, %v1808
    %1812 = vrot.lane.b32.xlu0 %v1810, 32
    %v1813 = vpop.permute.xlu0 %1812
    %v1815 = vadd.f32 %v1805, %v1813
    %v1816 = vtanh.pop %v1815
    %1818 = vrot.lane.b32.xlu0 %v1816, 64
    %v1819 = vpop.permute.xlu0 %1818
    %v1821 = vmul.f32 %v1803, %v1819
    %v1822 = vmul.f32 %v1799, 0.5
    %v1823 = vtanh.pop %v1822
    %v1824 = vmul.f32 %v1823, 0.5
    %v1825 = vadd.f32 %v1824, 0.5
    %v1826 = vtanh.pop %v1799
    %v1827 = vmul.f32 %v1825, 0.0
    %1829 = vrot.lane.b32.xlu0 %v1826, 64
    %v1830 = vpop.permute.xlu0 %1829
    %v1832 = vmul.f32 %v1825, %v1830
    %1834 = vrot.lane.b32.xlu0 %v1832, 32
    %v1835 = vpop.permute.xlu0 %1834
    %v1837 = vadd.f32 %v1827, %v1835
    %v1838 = vtanh.pop %v1837
    %1840 = vrot.lane.b32.xlu0 %v1838, 64
    %v1841 = vpop.permute.xlu0 %1840
    %v1843 = vmul.f32 %v1825, %v1841
    %v1846 = vunpack.c.l.s4 1983009808
    %v1847 = vunpack.c.0.s8 %v1846
    %v1848 = vlaneseq
    %v1849 = vshrl.u32 %v1848, 7
    %v1850 = vsub.s32 %v1847, %v1849
    %v1851 = vrot.slane %v1821, %v1850
    %1852 = vrot.lane.b32.xlu0 %v1851, 32
    %v1853 = vpop.permute.xlu0 %1852
    %1855 = vst.msk [vmem:[#allocation3] sm:$0x3] %vm539, %v1853
    %v1858 = vunpack.c.l.s4 1983009808
    %v1859 = vunpack.c.0.s8 %v1858
    %v1860 = vlaneseq
    %v1861 = vshrl.u32 %v1860, 7
    %v1862 = vsub.s32 %v1859, %v1861
    %v1863 = vrot.slane %v1843, %v1862
    %1864 = vrot.lane.b32.xlu0 %v1863, 32
    %v1865 = vpop.permute.xlu0 %1864
    %1867 = vst.msk [vmem:[%s552] sm:$0x3] %vm539, %v1865
    %1868 = vrot.lane.b32.xlu0 %v1863, 64
    %v1869 = vpop.permute.xlu0 %1868
    %v1871 = vsel %vm287, %v1853, %v1869
    %v1872 = vpack.c.bf16 %v1871, %v1871
    %v1874 = vsel %vm431, %v1872, 0
    %1876 = vmatprep.subr.bf16.mxu0 0
    %1877 = vmatpush1.bf16.msra.mxu0 0
    %1878 = vmatprep.subr.bf16.mxu0 0
    %1879 = vmatpush1.bf16.msra.mxu0 0
    %1880 = vmatprep.subr.bf16.mxu0 0
    %1881 = vmatpush1.bf16.msra.mxu0 0
    %1882 = vmatprep.subr.bf16.mxu0 0
    %1883 = vmatpush1.bf16.msra.mxu0 0
    %1884 = vmatprep.subr.bf16.mxu0 %v1743
    %1885 = vmatpush1.bf16.msra.mxu0 %v1742
    %1886 = vmatprep.subr.bf16.mxu0 %v1741
    %1887 = vmatpush1.bf16.msra.mxu0 %v1740
    %1888 = vmatprep.subr.bf16.mxu0 %v1739
    %1889 = vmatpush1.bf16.msra.mxu0 %v1738
    %1890 = vmatprep.subr.bf16.mxu0 %v1737
    %1891 = vmatpush1.bf16.msra.mxu0 %v1736
    %1892 = vmatprep.subr.bf16.mxu0 0
    %1893 = vmatpush2.bf16.msra.mxu0 0
    %1894 = vmatprep.subr.bf16.mxu0 0
    %1895 = vmatpush2.bf16.msra.mxu0 0
    %1896 = vmatprep.subr.bf16.mxu0 0
    %1897 = vmatpush2.bf16.msra.mxu0 0
    %1898 = vmatprep.subr.bf16.mxu0 0
    %1899 = vmatpush2.bf16.msra.mxu0 0
    %1900 = vmatprep.subr.bf16.mxu0 0
    %1901 = vmatpush2.bf16.msra.mxu0 0
    %1902 = vmatprep.subr.bf16.mxu0 0
    %1903 = vmatpush2.bf16.msra.mxu0 0
    %1904 = vmatprep.subr.bf16.mxu0 0
    %1905 = vmatpush2.bf16.msra.mxu0 0
    %1906 = vmatprep.subr.bf16.mxu0 0
    %1907 = vmatpush2.bf16.msra.mxu0 0
    %1908 = vmatprep.mubr.bf16.mxu0 0
    %1909 = vmatmul.mubr.bf16.gmra.mxu0 %v1874
    %v1910 = vpop.f32.mrf.mxu0
    %v1911 = vadd.f32 0.0, %v1910
    %v1912 = vpop.f32.mrf.mxu0
    %v1913 = vadd.f32 0.0, %v1912
    %v1914 = vpop.f32.mrf.mxu0
    %v1915 = vpop.f32.mrf.mxu0
    %1916 = vdwg.mxu0
    %v1917 = vld [vmem:[%s603] sm:$0xf]
    %v1918 = vld [vmem:[%s605] sm:$0xf]
    %v1919 = vadd.f32 %v1917, %v1911
    %v1921 = vrot.slane %v1918, 2
    %v1923 = vadd.f32 %v1921, %v1913
    %v1924 = vmul.f32 %v1919, 0.5
    %v1925 = vtanh.pop %v1924
    %v1926 = vmul.f32 %v1925, 0.5
    %v1927 = vadd.f32 %v1926, 0.5
    %v1928 = vtanh.pop %v1919
    %v1929 = vmul.f32 %v1927, %v1815
    %1931 = vrot.lane.b32.xlu0 %v1928, 64
    %v1932 = vpop.permute.xlu0 %1931
    %v1934 = vmul.f32 %v1927, %v1932
    %1936 = vrot.lane.b32.xlu0 %v1934, 32
    %v1937 = vpop.permute.xlu0 %1936
    %v1939 = vadd.f32 %v1929, %v1937
    %v1940 = vtanh.pop %v1939
    %1942 = vrot.lane.b32.xlu0 %v1940, 64
    %v1943 = vpop.permute.xlu0 %1942
    %v1945 = vmul.f32 %v1927, %v1943
    %v1946 = vmul.f32 %v1923, 0.5
    %v1947 = vtanh.pop %v1946
    %v1948 = vmul.f32 %v1947, 0.5
    %v1949 = vadd.f32 %v1948, 0.5
    %v1950 = vtanh.pop %v1923
    %v1951 = vmul.f32 %v1949, %v1837
    %1953 = vrot.lane.b32.xlu0 %v1950, 64
    %v1954 = vpop.permute.xlu0 %1953
    %v1956 = vmul.f32 %v1949, %v1954
    %1958 = vrot.lane.b32.xlu0 %v1956, 32
    %v1959 = vpop.permute.xlu0 %1958
    %v1961 = vadd.f32 %v1951, %v1959
    %v1962 = vtanh.pop %v1961
    %1964 = vrot.lane.b32.xlu0 %v1962, 64
    %v1965 = vpop.permute.xlu0 %1964
    %v1967 = vmul.f32 %v1949, %v1965
    %v1970 = vunpack.c.l.s4 1983009808
    %v1971 = vunpack.c.0.s8 %v1970
    %v1972 = vlaneseq
    %v1973 = vshrl.u32 %v1972, 7
    %v1974 = vsub.s32 %v1971, %v1973
    %v1975 = vrot.slane %v1945, %v1974
    %1976 = vrot.lane.b32.xlu0 %v1975, 32
    %v1977 = vpop.permute.xlu0 %1976
    %1979 = vst.msk [vmem:[%s667] sm:$0x3] %vm539, %v1977
    %v1982 = vunpack.c.l.s4 1983009808
    %v1983 = vunpack.c.0.s8 %v1982
    %v1984 = vlaneseq
    %v1985 = vshrl.u32 %v1984, 7
    %v1986 = vsub.s32 %v1983, %v1985
    %v1987 = vrot.slane %v1967, %v1986
    %1988 = vrot.lane.b32.xlu0 %v1987, 32
    %v1989 = vpop.permute.xlu0 %1988
    %1991 = vst.msk [vmem:[%s680] sm:$0x3] %vm539, %v1989
    %1992 = vrot.lane.b32.xlu0 %v1987, 64
    %v1993 = vpop.permute.xlu0 %1992
    %v1995 = vsel %vm287, %v1977, %v1993
    %v1996 = vpack.c.bf16 %v1995, %v1995
    %v1998 = vsel %vm431, %v1996, 0
    %2000 = vmatprep.subr.bf16.mxu0 0
    %2001 = vmatpush1.bf16.msra.mxu0 0
    %2002 = vmatprep.subr.bf16.mxu0 0
    %2003 = vmatpush1.bf16.msra.mxu0 0
    %2004 = vmatprep.subr.bf16.mxu0 0
    %2005 = vmatpush1.bf16.msra.mxu0 0
    %2006 = vmatprep.subr.bf16.mxu0 0
    %2007 = vmatpush1.bf16.msra.mxu0 0
    %2008 = vmatprep.subr.bf16.mxu0 %v1743
    %2009 = vmatpush1.bf16.msra.mxu0 %v1742
    %2010 = vmatprep.subr.bf16.mxu0 %v1741
    %2011 = vmatpush1.bf16.msra.mxu0 %v1740
    %2012 = vmatprep.subr.bf16.mxu0 %v1739
    %2013 = vmatpush1.bf16.msra.mxu0 %v1738
    %2014 = vmatprep.subr.bf16.mxu0 %v1737
    %2015 = vmatpush1.bf16.msra.mxu0 %v1736
    %2016 = vmatprep.subr.bf16.mxu0 0
    %2017 = vmatpush2.bf16.msra.mxu0 0
    %2018 = vmatprep.subr.bf16.mxu0 0
    %2019 = vmatpush2.bf16.msra.mxu0 0
    %2020 = vmatprep.subr.bf16.mxu0 0
    %2021 = vmatpush2.bf16.msra.mxu0 0
    %2022 = vmatprep.subr.bf16.mxu0 0
    %2023 = vmatpush2.bf16.msra.mxu0 0
    %2024 = vmatprep.subr.bf16.mxu0 0
    %2025 = vmatpush2.bf16.msra.mxu0 0
    %2026 = vmatprep.subr.bf16.mxu0 0
    %2027 = vmatpush2.bf16.msra.mxu0 0
    %2028 = vmatprep.subr.bf16.mxu0 0
    %2029 = vmatpush2.bf16.msra.mxu0 0
    %2030 = vmatprep.subr.bf16.mxu0 0
    %2031 = vmatpush2.bf16.msra.mxu0 0
    %2032 = vmatprep.mubr.bf16.mxu0 0
    %2033 = vmatmul.mubr.bf16.gmra.mxu0 %v1998
    %v2034 = vpop.f32.mrf.mxu0
    %v2035 = vadd.f32 0.0, %v2034
    %v2036 = vpop.f32.mrf.mxu0
    %v2037 = vadd.f32 0.0, %v2036
    %v2038 = vpop.f32.mrf.mxu0
    %v2039 = vpop.f32.mrf.mxu0
    %2040 = vdwg.mxu0
    %v2041 = vld [vmem:[%s731] sm:$0xf]
    %v2042 = vld [vmem:[%s733] sm:$0xf]
    %v2043 = vadd.f32 %v2041, %v2035
    %v2045 = vrot.slane %v2042, 2
    %v2047 = vadd.f32 %v2045, %v2037
    %v2048 = vmul.f32 %v2043, 0.5
    %v2049 = vtanh.pop %v2048
    %v2050 = vmul.f32 %v2049, 0.5
    %v2051 = vadd.f32 %v2050, 0.5
    %v2052 = vtanh.pop %v2043
    %v2053 = vmul.f32 %v2051, %v1939
    %2055 = vrot.lane.b32.xlu0 %v2052, 64
    %v2056 = vpop.permute.xlu0 %2055
    %v2058 = vmul.f32 %v2051, %v2056
    %2060 = vrot.lane.b32.xlu0 %v2058, 32
    %v2061 = vpop.permute.xlu0 %2060
    %v2063 = vadd.f32 %v2053, %v2061
    %v2064 = vtanh.pop %v2063
    %2066 = vrot.lane.b32.xlu0 %v2064, 64
    %v2067 = vpop.permute.xlu0 %2066
    %v2069 = vmul.f32 %v2051, %v2067
    %v2070 = vmul.f32 %v2047, 0.5
    %v2071 = vtanh.pop %v2070
    %v2072 = vmul.f32 %v2071, 0.5
    %v2073 = vadd.f32 %v2072, 0.5
    %v2074 = vtanh.pop %v2047
    %v2075 = vmul.f32 %v2073, %v1961
    %2077 = vrot.lane.b32.xlu0 %v2074, 64
    %v2078 = vpop.permute.xlu0 %2077
    %v2080 = vmul.f32 %v2073, %v2078
    %2082 = vrot.lane.b32.xlu0 %v2080, 32
    %v2083 = vpop.permute.xlu0 %2082
    %v2085 = vadd.f32 %v2075, %v2083
    %v2086 = vtanh.pop %v2085
    %2088 = vrot.lane.b32.xlu0 %v2086, 64
    %v2089 = vpop.permute.xlu0 %2088
    %v2091 = vmul.f32 %v2073, %v2089
    %v2094 = vunpack.c.l.s4 1983009808
    %v2095 = vunpack.c.0.s8 %v2094
    %v2096 = vlaneseq
    %v2097 = vshrl.u32 %v2096, 7
    %v2098 = vsub.s32 %v2095, %v2097
    %v2099 = vrot.slane %v2069, %v2098
    %2100 = vrot.lane.b32.xlu0 %v2099, 32
    %v2101 = vpop.permute.xlu0 %2100
    %2103 = vst.msk [vmem:[%s795] sm:$0x3] %vm539, %v2101
    %v2106 = vunpack.c.l.s4 1983009808
    %v2107 = vunpack.c.0.s8 %v2106
    %v2108 = vlaneseq
    %v2109 = vshrl.u32 %v2108, 7
    %v2110 = vsub.s32 %v2107, %v2109
    %v2111 = vrot.slane %v2091, %v2110
    %2112 = vrot.lane.b32.xlu0 %v2111, 32
    %v2113 = vpop.permute.xlu0 %2112
    %2115 = vst.msk [vmem:[%s808] sm:$0x3] %vm539, %v2113
    %2116 = vrot.lane.b32.xlu0 %v2111, 64
    %v2117 = vpop.permute.xlu0 %2116
    %v2119 = vsel %vm287, %v2101, %v2117
    %v2120 = vpack.c.bf16 %v2119, %v2119
    %v2122 = vsel %vm431, %v2120, 0
    %2124 = vmatprep.subr.bf16.mxu0 0
    %2125 = vmatpush1.bf16.msra.mxu0 0
    %2126 = vmatprep.subr.bf16.mxu0 0
    %2127 = vmatpush1.bf16.msra.mxu0 0
    %2128 = vmatprep.subr.bf16.mxu0 0
    %2129 = vmatpush1.bf16.msra.mxu0 0
    %2130 = vmatprep.subr.bf16.mxu0 0
    %2131 = vmatpush1.bf16.msra.mxu0 0
    %2132 = vmatprep.subr.bf16.mxu0 %v1743
    %2133 = vmatpush1.bf16.msra.mxu0 %v1742
    %2134 = vmatprep.subr.bf16.mxu0 %v1741
    %2135 = vmatpush1.bf16.msra.mxu0 %v1740
    %2136 = vmatprep.subr.bf16.mxu0 %v1739
    %2137 = vmatpush1.bf16.msra.mxu0 %v1738
    %2138 = vmatprep.subr.bf16.mxu0 %v1737
    %2139 = vmatpush1.bf16.msra.mxu0 %v1736
    %2140 = vmatprep.subr.bf16.mxu0 0
    %2141 = vmatpush2.bf16.msra.mxu0 0
    %2142 = vmatprep.subr.bf16.mxu0 0
    %2143 = vmatpush2.bf16.msra.mxu0 0
    %2144 = vmatprep.subr.bf16.mxu0 0
    %2145 = vmatpush2.bf16.msra.mxu0 0
    %2146 = vmatprep.subr.bf16.mxu0 0
    %2147 = vmatpush2.bf16.msra.mxu0 0
    %2148 = vmatprep.subr.bf16.mxu0 0
    %2149 = vmatpush2.bf16.msra.mxu0 0
    %2150 = vmatprep.subr.bf16.mxu0 0
    %2151 = vmatpush2.bf16.msra.mxu0 0
    %2152 = vmatprep.subr.bf16.mxu0 0
    %2153 = vmatpush2.bf16.msra.mxu0 0
    %2154 = vmatprep.subr.bf16.mxu0 0
    %2155 = vmatpush2.bf16.msra.mxu0 0
    %2156 = vmatprep.mubr.bf16.mxu0 0
    %2157 = vmatmul.mubr.bf16.gmra.mxu0 %v2122
    %v2158 = vpop.f32.mrf.mxu0
    %v2159 = vadd.f32 0.0, %v2158
    %v2160 = vpop.f32.mrf.mxu0
    %v2161 = vadd.f32 0.0, %v2160
    %v2162 = vpop.f32.mrf.mxu0
    %v2163 = vpop.f32.mrf.mxu0
    %2164 = vdwg.mxu0
    %v2165 = vld [vmem:[%s859] sm:$0xf]
    %v2166 = vld [vmem:[%s861] sm:$0xf]
    %v2167 = vadd.f32 %v2165, %v2159
    %v2169 = vrot.slane %v2166, 2
    %v2171 = vadd.f32 %v2169, %v2161
    %v2172 = vmul.f32 %v2167, 0.5
    %v2173 = vtanh.pop %v2172
    %v2174 = vmul.f32 %v2173, 0.5
    %v2175 = vadd.f32 %v2174, 0.5
    %v2176 = vtanh.pop %v2167
    %v2177 = vmul.f32 %v2175, %v2063
    %2179 = vrot.lane.b32.xlu0 %v2176, 64
    %v2180 = vpop.permute.xlu0 %2179
    %v2182 = vmul.f32 %v2175, %v2180
    %2184 = vrot.lane.b32.xlu0 %v2182, 32
    %v2185 = vpop.permute.xlu0 %2184
    %v2187 = vadd.f32 %v2177, %v2185
    %v2188 = vtanh.pop %v2187
    %2190 = vrot.lane.b32.xlu0 %v2188, 64
    %v2191 = vpop.permute.xlu0 %2190
    %v2193 = vmul.f32 %v2175, %v2191
    %v2194 = vmul.f32 %v2171, 0.5
    %v2195 = vtanh.pop %v2194
    %v2196 = vmul.f32 %v2195, 0.5
    %v2197 = vadd.f32 %v2196, 0.5
    %v2198 = vtanh.pop %v2171
    %v2199 = vmul.f32 %v2197, %v2085
    %2201 = vrot.lane.b32.xlu0 %v2198, 64
    %v2202 = vpop.permute.xlu0 %2201
    %v2204 = vmul.f32 %v2197, %v2202
    %2206 = vrot.lane.b32.xlu0 %v2204, 32
    %v2207 = vpop.permute.xlu0 %2206
    %v2209 = vadd.f32 %v2199, %v2207
    %v2210 = vtanh.pop %v2209
    %2212 = vrot.lane.b32.xlu0 %v2210, 64
    %v2213 = vpop.permute.xlu0 %2212
    %v2215 = vmul.f32 %v2197, %v2213
    %v2218 = vunpack.c.l.s4 1983009808
    %v2219 = vunpack.c.0.s8 %v2218
    %v2220 = vlaneseq
    %v2221 = vshrl.u32 %v2220, 7
    %v2222 = vsub.s32 %v2219, %v2221
    %v2223 = vrot.slane %v2193, %v2222
    %2224 = vrot.lane.b32.xlu0 %v2223, 32
    %v2225 = vpop.permute.xlu0 %2224
    %2227 = vst.msk [vmem:[%s923] sm:$0x3] %vm539, %v2225
    %v2230 = vunpack.c.l.s4 1983009808
    %v2231 = vunpack.c.0.s8 %v2230
    %v2232 = vlaneseq
    %v2233 = vshrl.u32 %v2232, 7
    %v2234 = vsub.s32 %v2231, %v2233
    %v2235 = vrot.slane %v2215, %v2234
    %2236 = vrot.lane.b32.xlu0 %v2235, 32
    %v2237 = vpop.permute.xlu0 %2236
    %2239 = vst.msk [vmem:[%s936] sm:$0x3] %vm539, %v2237
    %2240 = vrot.lane.b32.xlu0 %v2235, 64
    %v2241 = vpop.permute.xlu0 %2240
    %v2243 = vsel %vm287, %v2225, %v2241
    %v2244 = vpack.c.bf16 %v2243, %v2243
    %v2246 = vsel %vm431, %v2244, 0
    %2248 = vmatprep.subr.bf16.mxu0 0
    %2249 = vmatpush1.bf16.msra.mxu0 0
    %2250 = vmatprep.subr.bf16.mxu0 0
    %2251 = vmatpush1.bf16.msra.mxu0 0
    %2252 = vmatprep.subr.bf16.mxu0 0
    %2253 = vmatpush1.bf16.msra.mxu0 0
    %2254 = vmatprep.subr.bf16.mxu0 0
    %2255 = vmatpush1.bf16.msra.mxu0 0
    %2256 = vmatprep.subr.bf16.mxu0 %v1743
    %2257 = vmatpush1.bf16.msra.mxu0 %v1742
    %2258 = vmatprep.subr.bf16.mxu0 %v1741
    %2259 = vmatpush1.bf16.msra.mxu0 %v1740
    %2260 = vmatprep.subr.bf16.mxu0 %v1739
    %2261 = vmatpush1.bf16.msra.mxu0 %v1738
    %2262 = vmatprep.subr.bf16.mxu0 %v1737
    %2263 = vmatpush1.bf16.msra.mxu0 %v1736
    %2264 = vmatprep.subr.bf16.mxu0 0
    %2265 = vmatpush2.bf16.msra.mxu0 0
    %2266 = vmatprep.subr.bf16.mxu0 0
    %2267 = vmatpush2.bf16.msra.mxu0 0
    %2268 = vmatprep.subr.bf16.mxu0 0
    %2269 = vmatpush2.bf16.msra.mxu0 0
    %2270 = vmatprep.subr.bf16.mxu0 0
    %2271 = vmatpush2.bf16.msra.mxu0 0
    %2272 = vmatprep.subr.bf16.mxu0 0
    %2273 = vmatpush2.bf16.msra.mxu0 0
    %2274 = vmatprep.subr.bf16.mxu0 0
    %2275 = vmatpush2.bf16.msra.mxu0 0
    %2276 = vmatprep.subr.bf16.mxu0 0
    %2277 = vmatpush2.bf16.msra.mxu0 0
    %2278 = vmatprep.subr.bf16.mxu0 0
    %2279 = vmatpush2.bf16.msra.mxu0 0
    %2280 = vmatprep.mubr.bf16.mxu0 0
    %2281 = vmatmul.mubr.bf16.gmra.mxu0 %v2246
    %v2282 = vpop.f32.mrf.mxu0
    %v2283 = vadd.f32 0.0, %v2282
    %v2284 = vpop.f32.mrf.mxu0
    %v2285 = vadd.f32 0.0, %v2284
    %v2286 = vpop.f32.mrf.mxu0
    %v2287 = vpop.f32.mrf.mxu0
    %2288 = vdwg.mxu0
    %v2289 = vld [vmem:[%s861] sm:$0xf]
    %v2290 = vld [vmem:[%s859] sm:$0xf]
    %v2291 = vadd.f32 %v2289, %v2283
    %v2293 = vrot.slane %v2290, 2
    %v2295 = vadd.f32 %v2293, %v2285
    %v2296 = vmul.f32 %v2291, 0.5
    %v2297 = vtanh.pop %v2296
    %v2298 = vmul.f32 %v2297, 0.5
    %v2299 = vadd.f32 %v2298, 0.5
    %v2300 = vtanh.pop %v2291
    %v2301 = vmul.f32 %v2299, %v2187
    %2303 = vrot.lane.b32.xlu0 %v2300, 64
    %v2304 = vpop.permute.xlu0 %2303
    %v2306 = vmul.f32 %v2299, %v2304
    %2308 = vrot.lane.b32.xlu0 %v2306, 32
    %v2309 = vpop.permute.xlu0 %2308
    %v2311 = vadd.f32 %v2301, %v2309
    %v2312 = vtanh.pop %v2311
    %2314 = vrot.lane.b32.xlu0 %v2312, 64
    %v2315 = vpop.permute.xlu0 %2314
    %v2317 = vmul.f32 %v2299, %v2315
    %v2318 = vmul.f32 %v2295, 0.5
    %v2319 = vtanh.pop %v2318
    %v2320 = vmul.f32 %v2319, 0.5
    %v2321 = vadd.f32 %v2320, 0.5
    %v2322 = vtanh.pop %v2295
    %v2323 = vmul.f32 %v2321, %v2209
    %2325 = vrot.lane.b32.xlu0 %v2322, 64
    %v2326 = vpop.permute.xlu0 %2325
    %v2328 = vmul.f32 %v2321, %v2326
    %2330 = vrot.lane.b32.xlu0 %v2328, 32
    %v2331 = vpop.permute.xlu0 %2330
    %v2333 = vadd.f32 %v2323, %v2331
    %v2334 = vtanh.pop %v2333
    %2336 = vrot.lane.b32.xlu0 %v2334, 64
    %v2337 = vpop.permute.xlu0 %2336
    %v2339 = vmul.f32 %v2321, %v2337
    %v2342 = vunpack.c.l.s4 1983009808
    %v2343 = vunpack.c.0.s8 %v2342
    %v2344 = vlaneseq
    %v2345 = vshrl.u32 %v2344, 7
    %v2346 = vsub.s32 %v2343, %v2345
    %v2347 = vrot.slane %v2317, %v2346
    %2348 = vrot.lane.b32.xlu0 %v2347, 32
    %v2349 = vpop.permute.xlu0 %2348
    %2351 = vst.msk [vmem:[%s1049] sm:$0x3] %vm539, %v2349
    %v2354 = vunpack.c.l.s4 1983009808
    %v2355 = vunpack.c.0.s8 %v2354
    %v2356 = vlaneseq
    %v2357 = vshrl.u32 %v2356, 7
    %v2358 = vsub.s32 %v2355, %v2357
    %v2359 = vrot.slane %v2339, %v2358
    %2360 = vrot.lane.b32.xlu0 %v2359, 32
    %v2361 = vpop.permute.xlu0 %2360
    %2363 = vst.msk [vmem:[%s1062] sm:$0x3] %vm539, %v2361
    %2364 = vrot.lane.b32.xlu0 %v2359, 64
    %v2365 = vpop.permute.xlu0 %2364
    %v2367 = vsel %vm287, %v2349, %v2365
    %v2368 = vpack.c.bf16 %v2367, %v2367
    %v2370 = vsel %vm431, %v2368, 0
    %2372 = vmatprep.subr.bf16.mxu0 0
    %2373 = vmatpush1.bf16.msra.mxu0 0
    %2374 = vmatprep.subr.bf16.mxu0 0
    %2375 = vmatpush1.bf16.msra.mxu0 0
    %2376 = vmatprep.subr.bf16.mxu0 0
    %2377 = vmatpush1.bf16.msra.mxu0 0
    %2378 = vmatprep.subr.bf16.mxu0 0
    %2379 = vmatpush1.bf16.msra.mxu0 0
    %2380 = vmatprep.subr.bf16.mxu0 %v1743
    %2381 = vmatpush1.bf16.msra.mxu0 %v1742
    %2382 = vmatprep.subr.bf16.mxu0 %v1741
    %2383 = vmatpush1.bf16.msra.mxu0 %v1740
    %2384 = vmatprep.subr.bf16.mxu0 %v1739
    %2385 = vmatpush1.bf16.msra.mxu0 %v1738
    %2386 = vmatprep.subr.bf16.mxu0 %v1737
    %2387 = vmatpush1.bf16.msra.mxu0 %v1736
    %2388 = vmatprep.subr.bf16.mxu0 0
    %2389 = vmatpush2.bf16.msra.mxu0 0
    %2390 = vmatprep.subr.bf16.mxu0 0
    %2391 = vmatpush2.bf16.msra.mxu0 0
    %2392 = vmatprep.subr.bf16.mxu0 0
    %2393 = vmatpush2.bf16.msra.mxu0 0
    %2394 = vmatprep.subr.bf16.mxu0 0
    %2395 = vmatpush2.bf16.msra.mxu0 0
    %2396 = vmatprep.subr.bf16.mxu0 0
    %2397 = vmatpush2.bf16.msra.mxu0 0
    %2398 = vmatprep.subr.bf16.mxu0 0
    %2399 = vmatpush2.bf16.msra.mxu0 0
    %2400 = vmatprep.subr.bf16.mxu0 0
    %2401 = vmatpush2.bf16.msra.mxu0 0
    %2402 = vmatprep.subr.bf16.mxu0 0
    %2403 = vmatpush2.bf16.msra.mxu0 0
    %2404 = vmatprep.mubr.bf16.mxu0 0
    %2405 = vmatmul.mubr.bf16.gmra.mxu0 %v2370
    %v2406 = vpop.f32.mrf.mxu0
    %v2407 = vadd.f32 0.0, %v2406
    %v2408 = vpop.f32.mrf.mxu0
    %v2409 = vadd.f32 0.0, %v2408
    %v2410 = vpop.f32.mrf.mxu0
    %v2411 = vpop.f32.mrf.mxu0
    %2412 = vdwg.mxu0
    %v2413 = vld [vmem:[%s733] sm:$0xf]
    %v2414 = vld [vmem:[%s731] sm:$0xf]
    %v2415 = vadd.f32 %v2413, %v2407
    %v2417 = vrot.slane %v2414, 2
    %v2419 = vadd.f32 %v2417, %v2409
    %v2420 = vmul.f32 %v2415, 0.5
    %v2421 = vtanh.pop %v2420
    %v2422 = vmul.f32 %v2421, 0.5
    %v2423 = vadd.f32 %v2422, 0.5
    %v2424 = vtanh.pop %v2415
    %v2425 = vmul.f32 %v2423, %v2311
    %2427 = vrot.lane.b32.xlu0 %v2424, 64
    %v2428 = vpop.permute.xlu0 %2427
    %v2430 = vmul.f32 %v2423, %v2428
    %2432 = vrot.lane.b32.xlu0 %v2430, 32
    %v2433 = vpop.permute.xlu0 %2432
    %v2435 = vadd.f32 %v2425, %v2433
    %v2436 = vtanh.pop %v2435
    %2438 = vrot.lane.b32.xlu0 %v2436, 64
    %v2439 = vpop.permute.xlu0 %2438
    %v2441 = vmul.f32 %v2423, %v2439
    %v2442 = vmul.f32 %v2419, 0.5
    %v2443 = vtanh.pop %v2442
    %v2444 = vmul.f32 %v2443, 0.5
    %v2445 = vadd.f32 %v2444, 0.5
    %v2446 = vtanh.pop %v2419
    %v2447 = vmul.f32 %v2445, %v2333
    %2449 = vrot.lane.b32.xlu0 %v2446, 64
    %v2450 = vpop.permute.xlu0 %2449
    %v2452 = vmul.f32 %v2445, %v2450
    %2454 = vrot.lane.b32.xlu0 %v2452, 32
    %v2455 = vpop.permute.xlu0 %2454
    %v2457 = vadd.f32 %v2447, %v2455
    %v2458 = vtanh.pop %v2457
    %2460 = vrot.lane.b32.xlu0 %v2458, 64
    %v2461 = vpop.permute.xlu0 %2460
    %v2463 = vmul.f32 %v2445, %v2461
    %v2466 = vunpack.c.l.s4 1983009808
    %v2467 = vunpack.c.0.s8 %v2466
    %v2468 = vlaneseq
    %v2469 = vshrl.u32 %v2468, 7
    %v2470 = vsub.s32 %v2467, %v2469
    %v2471 = vrot.slane %v2441, %v2470
    %2472 = vrot.lane.b32.xlu0 %v2471, 32
    %v2473 = vpop.permute.xlu0 %2472
    %2475 = vst.msk [vmem:[%s1175] sm:$0x3] %vm539, %v2473
    %v2478 = vunpack.c.l.s4 1983009808
    %v2479 = vunpack.c.0.s8 %v2478
    %v2480 = vlaneseq
    %v2481 = vshrl.u32 %v2480, 7
    %v2482 = vsub.s32 %v2479, %v2481
    %v2483 = vrot.slane %v2463, %v2482
    %2484 = vrot.lane.b32.xlu0 %v2483, 32
    %v2485 = vpop.permute.xlu0 %2484
    %2487 = vst.msk [vmem:[%s1188] sm:$0x3] %vm539, %v2485
    %2488 = vrot.lane.b32.xlu0 %v2483, 64
    %v2489 = vpop.permute.xlu0 %2488
    %v2491 = vsel %vm287, %v2473, %v2489
    %v2492 = vpack.c.bf16 %v2491, %v2491
    %v2494 = vsel %vm431, %v2492, 0
    %2496 = vmatprep.subr.bf16.mxu0 0
    %2497 = vmatpush1.bf16.msra.mxu0 0
    %2498 = vmatprep.subr.bf16.mxu0 0
    %2499 = vmatpush1.bf16.msra.mxu0 0
    %2500 = vmatprep.subr.bf16.mxu0 0
    %2501 = vmatpush1.bf16.msra.mxu0 0
    %2502 = vmatprep.subr.bf16.mxu0 0
    %2503 = vmatpush1.bf16.msra.mxu0 0
    %2504 = vmatprep.subr.bf16.mxu0 %v1743
    %2505 = vmatpush1.bf16.msra.mxu0 %v1742
    %2506 = vmatprep.subr.bf16.mxu0 %v1741
    %2507 = vmatpush1.bf16.msra.mxu0 %v1740
    %2508 = vmatprep.subr.bf16.mxu0 %v1739
    %2509 = vmatpush1.bf16.msra.mxu0 %v1738
    %2510 = vmatprep.subr.bf16.mxu0 %v1737
    %2511 = vmatpush1.bf16.msra.mxu0 %v1736
    %2512 = vmatprep.subr.bf16.mxu0 0
    %2513 = vmatpush2.bf16.msra.mxu0 0
    %2514 = vmatprep.subr.bf16.mxu0 0
    %2515 = vmatpush2.bf16.msra.mxu0 0
    %2516 = vmatprep.subr.bf16.mxu0 0
    %2517 = vmatpush2.bf16.msra.mxu0 0
    %2518 = vmatprep.subr.bf16.mxu0 0
    %2519 = vmatpush2.bf16.msra.mxu0 0
    %2520 = vmatprep.subr.bf16.mxu0 0
    %2521 = vmatpush2.bf16.msra.mxu0 0
    %2522 = vmatprep.subr.bf16.mxu0 0
    %2523 = vmatpush2.bf16.msra.mxu0 0
    %2524 = vmatprep.subr.bf16.mxu0 0
    %2525 = vmatpush2.bf16.msra.mxu0 0
    %2526 = vmatprep.subr.bf16.mxu0 0
    %2527 = vmatpush2.bf16.msra.mxu0 0
    %2528 = vmatprep.mubr.bf16.mxu0 0
    %2529 = vmatmul.mubr.bf16.gmra.mxu0 %v2494
    %v2530 = vpop.f32.mrf.mxu0
    %v2531 = vadd.f32 0.0, %v2530
    %v2532 = vpop.f32.mrf.mxu0
    %v2533 = vadd.f32 0.0, %v2532
    %v2534 = vpop.f32.mrf.mxu0
    %v2535 = vpop.f32.mrf.mxu0
    %2536 = vdwg.mxu0
    %v2537 = vld [vmem:[%s605] sm:$0xf]
    %v2538 = vld [vmem:[%s603] sm:$0xf]
    %v2539 = vadd.f32 %v2537, %v2531
    %v2541 = vrot.slane %v2538, 2
    %v2543 = vadd.f32 %v2541, %v2533
    %v2544 = vmul.f32 %v2539, 0.5
    %v2545 = vtanh.pop %v2544
    %v2546 = vmul.f32 %v2545, 0.5
    %v2547 = vadd.f32 %v2546, 0.5
    %v2548 = vtanh.pop %v2539
    %v2549 = vmul.f32 %v2547, %v2435
    %2551 = vrot.lane.b32.xlu0 %v2548, 64
    %v2552 = vpop.permute.xlu0 %2551
    %v2554 = vmul.f32 %v2547, %v2552
    %2556 = vrot.lane.b32.xlu0 %v2554, 32
    %v2557 = vpop.permute.xlu0 %2556
    %v2559 = vadd.f32 %v2549, %v2557
    %v2560 = vtanh.pop %v2559
    %2562 = vrot.lane.b32.xlu0 %v2560, 64
    %v2563 = vpop.permute.xlu0 %2562
    %v2565 = vmul.f32 %v2547, %v2563
    %v2566 = vmul.f32 %v2543, 0.5
    %v2567 = vtanh.pop %v2566
    %v2568 = vmul.f32 %v2567, 0.5
    %v2569 = vadd.f32 %v2568, 0.5
    %v2570 = vtanh.pop %v2543
    %v2571 = vmul.f32 %v2569, %v2457
    %2573 = vrot.lane.b32.xlu0 %v2570, 64
    %v2574 = vpop.permute.xlu0 %2573
    %v2576 = vmul.f32 %v2569, %v2574
    %2578 = vrot.lane.b32.xlu0 %v2576, 32
    %v2579 = vpop.permute.xlu0 %2578
    %v2581 = vadd.f32 %v2571, %v2579
    %v2582 = vtanh.pop %v2581
    %2584 = vrot.lane.b32.xlu0 %v2582, 64
    %v2585 = vpop.permute.xlu0 %2584
    %v2587 = vmul.f32 %v2569, %v2585
    %v2590 = vunpack.c.l.s4 1983009808
    %v2591 = vunpack.c.0.s8 %v2590
    %v2592 = vlaneseq
    %v2593 = vshrl.u32 %v2592, 7
    %v2594 = vsub.s32 %v2591, %v2593
    %v2595 = vrot.slane %v2565, %v2594
    %2596 = vrot.lane.b32.xlu0 %v2595, 32
    %v2597 = vpop.permute.xlu0 %2596
    %2599 = vst.msk [vmem:[%s1301] sm:$0x3] %vm539, %v2597
    %v2602 = vunpack.c.l.s4 1983009808
    %v2603 = vunpack.c.0.s8 %v2602
    %v2604 = vlaneseq
    %v2605 = vshrl.u32 %v2604, 7
    %v2606 = vsub.s32 %v2603, %v2605
    %v2607 = vrot.slane %v2587, %v2606
    %2608 = vrot.lane.b32.xlu0 %v2607, 32
    %v2609 = vpop.permute.xlu0 %2608
    %2611 = vst.msk [vmem:[%s1314] sm:$0x3] %vm539, %v2609
    %2612 = vrot.lane.b32.xlu0 %v2607, 64
    %v2613 = vpop.permute.xlu0 %2612
    %v2615 = vsel %vm287, %v2597, %v2613
    %v2616 = vpack.c.bf16 %v2615, %v2615
    %v2618 = vsel %vm431, %v2616, 0
    %2620 = vmatprep.subr.bf16.mxu0 0
    %2621 = vmatpush1.bf16.msra.mxu0 0
    %2622 = vmatprep.subr.bf16.mxu0 0
    %2623 = vmatpush1.bf16.msra.mxu0 0
    %2624 = vmatprep.subr.bf16.mxu0 0
    %2625 = vmatpush1.bf16.msra.mxu0 0
    %2626 = vmatprep.subr.bf16.mxu0 0
    %2627 = vmatpush1.bf16.msra.mxu0 0
    %2628 = vmatprep.subr.bf16.mxu0 %v1743
    %2629 = vmatpush1.bf16.msra.mxu0 %v1742
    %2630 = vmatprep.subr.bf16.mxu0 %v1741
    %2631 = vmatpush1.bf16.msra.mxu0 %v1740
    %2632 = vmatprep.subr.bf16.mxu0 %v1739
    %2633 = vmatpush1.bf16.msra.mxu0 %v1738
    %2634 = vmatprep.subr.bf16.mxu0 %v1737
    %2635 = vmatpush1.bf16.msra.mxu0 %v1736
    %2636 = vmatprep.subr.bf16.mxu0 0
    %2637 = vmatpush2.bf16.msra.mxu0 0
    %2638 = vmatprep.subr.bf16.mxu0 0
    %2639 = vmatpush2.bf16.msra.mxu0 0
    %2640 = vmatprep.subr.bf16.mxu0 0
    %2641 = vmatpush2.bf16.msra.mxu0 0
    %2642 = vmatprep.subr.bf16.mxu0 0
    %2643 = vmatpush2.bf16.msra.mxu0 0
    %2644 = vmatprep.subr.bf16.mxu0 0
    %2645 = vmatpush2.bf16.msra.mxu0 0
    %2646 = vmatprep.subr.bf16.mxu0 0
    %2647 = vmatpush2.bf16.msra.mxu0 0
    %2648 = vmatprep.subr.bf16.mxu0 0
    %2649 = vmatpush2.bf16.msra.mxu0 0
    %2650 = vmatprep.subr.bf16.mxu0 0
    %2651 = vmatpush2.bf16.msra.mxu0 0
    %2652 = vmatprep.mubr.bf16.mxu0 0
    %2653 = vmatmul.mubr.bf16.gmra.mxu0 %v2618
    %v2654 = vpop.f32.mrf.mxu0
    %v2655 = vadd.f32 0.0, %v2654
    %v2656 = vpop.f32.mrf.mxu0
    %v2657 = vadd.f32 0.0, %v2656
    %v2658 = vpop.f32.mrf.mxu0
    %v2659 = vpop.f32.mrf.mxu0
    %2660 = vdwg.mxu0
    %v2661 = vld [vmem:[%s477] sm:$0xf]
    %v2662 = vld [vmem:[#allocation2] sm:$0xf]
    %v2663 = vadd.f32 %v2661, %v2655
    %v2665 = vrot.slane %v2662, 2
    %v2667 = vadd.f32 %v2665, %v2657
    %v2668 = vmul.f32 %v2663, 0.5
    %v2669 = vtanh.pop %v2668
    %v2670 = vmul.f32 %v2669, 0.5
    %v2671 = vadd.f32 %v2670, 0.5
    %v2672 = vtanh.pop %v2663
    %v2673 = vmul.f32 %v2671, %v2559
    %2675 = vrot.lane.b32.xlu0 %v2672, 64
    %v2676 = vpop.permute.xlu0 %2675
    %v2678 = vmul.f32 %v2671, %v2676
    %2680 = vrot.lane.b32.xlu0 %v2678, 32
    %v2681 = vpop.permute.xlu0 %2680
    %v2683 = vadd.f32 %v2673, %v2681
    %v2684 = vtanh.pop %v2683
    %2686 = vrot.lane.b32.xlu0 %v2684, 64
    %v2687 = vpop.permute.xlu0 %2686
    %v2689 = vmul.f32 %v2671, %v2687
    %v2690 = vmul.f32 %v2667, 0.5
    %v2691 = vtanh.pop %v2690
    %v2692 = vmul.f32 %v2691, 0.5
    %v2693 = vadd.f32 %v2692, 0.5
    %v2694 = vtanh.pop %v2667
    %v2695 = vmul.f32 %v2693, %v2581
    %2697 = vrot.lane.b32.xlu0 %v2694, 64
    %v2698 = vpop.permute.xlu0 %2697
    %v2700 = vmul.f32 %v2693, %v2698
    %2702 = vrot.lane.b32.xlu0 %v2700, 32
    %v2703 = vpop.permute.xlu0 %2702
    %v2705 = vadd.f32 %v2695, %v2703
    %v2706 = vtanh.pop %v2705
    %2708 = vrot.lane.b32.xlu0 %v2706, 64
    %v2709 = vpop.permute.xlu0 %2708
    %v2711 = vmul.f32 %v2693, %v2709
    %v2714 = vunpack.c.l.s4 1983009808
    %v2715 = vunpack.c.0.s8 %v2714
    %v2716 = vlaneseq
    %v2717 = vshrl.u32 %v2716, 7
    %v2718 = vsub.s32 %v2715, %v2717
    %v2719 = vrot.slane %v2689, %v2718
    %2720 = vrot.lane.b32.xlu0 %v2719, 32
    %v2721 = vpop.permute.xlu0 %2720
    %2723 = vst.msk [vmem:[%s1427] sm:$0x3] %vm539, %v2721
    %v2726 = vunpack.c.l.s4 1983009808
    %v2727 = vunpack.c.0.s8 %v2726
    %v2728 = vlaneseq
    %v2729 = vshrl.u32 %v2728, 7
    %v2730 = vsub.s32 %v2727, %v2729
    %v2731 = vrot.slane %v2711, %v2730
    %2732 = vrot.lane.b32.xlu0 %v2731, 32
    %v2733 = vpop.permute.xlu0 %2732
    %2735 = vst.msk [vmem:[#allocation4] sm:$0x3] %vm539, %v2733
    %v2736 = vld [vmem:[#allocation3] sm:$0x3]
    %v2737 = vld [vmem:[#allocation3 + $0x2] sm:$0x3]
    %v2738 = vld [vmem:[#allocation3 + $0x4] sm:$0x3]
    %v2739 = vld [vmem:[#allocation3 + $0x6] sm:$0x3]
    %v2740 = vld [vmem:[#allocation3 + $0x8] sm:$0x3]
    %v2741 = vld [vmem:[#allocation3 + $0xa] sm:$0x3]
    %v2742 = vld [vmem:[#allocation3 + $0xc] sm:$0x3]
    %v2743 = vld [vmem:[#allocation3 + $0xe] sm:$0x3]
    %v2744 = vld [vmem:[#allocation4] sm:$0x3]
    %v2745 = vld [vmem:[#allocation4 + $0x2] sm:$0x3]
    %v2746 = vld [vmem:[#allocation4 + $0x4] sm:$0x3]
    %v2747 = vld [vmem:[#allocation4 + $0x6] sm:$0x3]
    %v2748 = vld [vmem:[#allocation4 + $0x8] sm:$0x3]
    %v2749 = vld [vmem:[#allocation4 + $0xa] sm:$0x3]
    %v2750 = vld [vmem:[#allocation4 + $0xc] sm:$0x3]
    %v2751 = vld [vmem:[#allocation4 + $0xe] sm:$0x3]
    %2760 = vrot.lane.b32.xlu0 %v2744, 32
    %v2761 = vpop.permute.xlu0 %2760
    %2762 = vrot.lane.b32.xlu0 %v2745, 32
    %v2763 = vpop.permute.xlu0 %2762
    %2764 = vrot.lane.b32.xlu0 %v2746, 32
    %v2765 = vpop.permute.xlu0 %2764
    %2766 = vrot.lane.b32.xlu0 %v2747, 32
    %v2767 = vpop.permute.xlu0 %2766
    %2768 = vrot.lane.b32.xlu0 %v2748, 32
    %v2769 = vpop.permute.xlu0 %2768
    %2770 = vrot.lane.b32.xlu0 %v2749, 32
    %v2771 = vpop.permute.xlu0 %2770
    %2772 = vrot.lane.b32.xlu0 %v2750, 32
    %v2773 = vpop.permute.xlu0 %2772
    %2774 = vrot.lane.b32.xlu0 %v2751, 32
    %v2775 = vpop.permute.xlu0 %2774
    %v2784 = vsel %vm287, %v2736, %v2761
    %v2785 = vsel %vm287, %v2737, %v2763
    %v2786 = vsel %vm287, %v2738, %v2765
    %v2787 = vsel %vm287, %v2739, %v2767
    %v2788 = vsel %vm287, %v2740, %v2769
    %v2789 = vsel %vm287, %v2741, %v2771
    %v2790 = vsel %vm287, %v2742, %v2773
    %v2791 = vsel %vm287, %v2743, %v2775
    %v2792 = vmax.f32 %v2784, 0.0
    %v2793 = vmax.f32 %v2785, 0.0
    %v2794 = vmax.f32 %v2786, 0.0
    %v2795 = vmax.f32 %v2787, 0.0
    %v2796 = vmax.f32 %v2788, 0.0
    %v2797 = vmax.f32 %v2789, 0.0
    %v2798 = vmax.f32 %v2790, 0.0
    %v2799 = vmax.f32 %v2791, 0.0
    %v2808 = vcombine.low %v2792, %v2793
    %v2809 = vcombine.low %v2794, %v2795
    %v2811 = vunpack.c.l.s4 1983009808
    %v2812 = vunpack.c.0.s8 %v2811
    %v2813 = vlaneseq
    %v2814 = vshrl.u32 %v2813, 7
    %v2815 = vsub.s32 %v2812, %v2814
    %v2816 = vrot.slane %v2808, %v2815
    %v2818 = vunpack.c.l.s4 1983009808
    %v2819 = vunpack.c.0.s8 %v2818
    %v2820 = vlaneseq
    %v2821 = vshrl.u32 %v2820, 7
    %v2822 = vsub.s32 %v2819, %v2821
    %v2823 = vrot.slane %v2809, %v2822
    %v2824 = vcombine.low %v2816, %v2823
    %v2825 = vcombine.low %v2796, %v2797
    %v2826 = vcombine.low %v2798, %v2799
    %v2828 = vunpack.c.l.s4 1983009808
    %v2829 = vunpack.c.0.s8 %v2828
    %v2830 = vlaneseq
    %v2831 = vshrl.u32 %v2830, 7
    %v2832 = vsub.s32 %v2829, %v2831
    %v2833 = vrot.slane %v2825, %v2832
    %v2835 = vunpack.c.l.s4 1983009808
    %v2836 = vunpack.c.0.s8 %v2835
    %v2837 = vlaneseq
    %v2838 = vshrl.u32 %v2837, 7
    %v2839 = vsub.s32 %v2836, %v2838
    %v2840 = vrot.slane %v2826, %v2839
    %v2841 = vcombine.low %v2833, %v2840
    %v2844 = vpack.c.bf16 %v2841, %v2824
    %v2845 = vld [vmem:[#allocation13] sm:$0xf]
    %v2846 = vld [vmem:[#allocation13 + $0x4] sm:$0xf]
    %v2847 = vld [vmem:[#allocation13 + $0x8] sm:$0xf]
    %v2848 = vld [vmem:[#allocation13 + $0xc] sm:$0xf]
    %v2849 = vld [vmem:[#allocation13 + $0x10] sm:$0xf]
    %v2850 = vld [vmem:[#allocation13 + $0x14] sm:$0xf]
    %v2851 = vld [vmem:[#allocation13 + $0x18] sm:$0xf]
    %v2852 = vld [vmem:[#allocation13 + $0x1c] sm:$0xf]
    %v2853 = vld [vmem:[%s10] sm:$0x1]
    %v2855 = vlaneseq
    %v2856 = vshrl.u32 %v2855, 7
    %v2857 = vsub.s32 0, %v2856
    %v2858 = vrot.slane %v2853, %v2857
    %v2868 = vunpack.c.l.b16 %v2845
    %v2869 = vunpack.c.l.b16 %v2846
    %v2870 = vunpack.c.l.b16 %v2847
    %v2871 = vunpack.c.l.b16 %v2848
    %v2872 = vunpack.c.l.b16 %v2849
    %v2873 = vunpack.c.l.b16 %v2850
    %v2874 = vunpack.c.l.b16 %v2851
    %v2875 = vunpack.c.l.b16 %v2852
    %v2876 = vpack.c.b16 %v2869, %v2868
    %v2877 = vpack.c.b16 %v2871, %v2870
    %v2878 = vpack.c.b16 %v2873, %v2872
    %v2879 = vpack.c.b16 %v2875, %v2874
    %v2885 = vsel %vm431, %v2844, 0
    %2887 = vmatprep.subr.bf16.mxu0 0
    %2888 = vmatpush1.bf16.msra.mxu0 0
    %2889 = vmatprep.subr.bf16.mxu0 0
    %2890 = vmatpush1.bf16.msra.mxu0 0
    %2891 = vmatprep.subr.bf16.mxu0 0
    %2892 = vmatpush1.bf16.msra.mxu0 0
    %2893 = vmatprep.subr.bf16.mxu0 0
    %2894 = vmatpush1.bf16.msra.mxu0 0
    %2895 = vmatprep.subr.bf16.mxu0 0
    %2896 = vmatpush1.bf16.msra.mxu0 %v2879
    %2897 = vmatprep.subr.bf16.mxu0 0
    %2898 = vmatpush1.bf16.msra.mxu0 %v2878
    %2899 = vmatprep.subr.bf16.mxu0 0
    %2900 = vmatpush1.bf16.msra.mxu0 %v2877
    %2901 = vmatprep.subr.bf16.mxu0 0
    %2902 = vmatpush1.bf16.msra.mxu0 %v2876
    %2903 = vmatprep.subr.bf16.mxu0 0
    %2904 = vmatpush2.bf16.msra.mxu0 0
    %2905 = vmatprep.subr.bf16.mxu0 0
    %2906 = vmatpush2.bf16.msra.mxu0 0
    %2907 = vmatprep.subr.bf16.mxu0 0
    %2908 = vmatpush2.bf16.msra.mxu0 0
    %2909 = vmatprep.subr.bf16.mxu0 0
    %2910 = vmatpush2.bf16.msra.mxu0 0
    %2911 = vmatprep.subr.bf16.mxu0 0
    %2912 = vmatpush2.bf16.msra.mxu0 0
    %2913 = vmatprep.subr.bf16.mxu0 0
    %2914 = vmatpush2.bf16.msra.mxu0 0
    %2915 = vmatprep.subr.bf16.mxu0 0
    %2916 = vmatpush2.bf16.msra.mxu0 0
    %2917 = vmatprep.subr.bf16.mxu0 0
    %2918 = vmatpush2.bf16.msra.mxu0 0
    %2919 = vmatprep.mubr.bf16.mxu0 0
    %2920 = vmatmul.mubr.bf16.gmra.mxu0 %v2885
    %v2921 = vpop.f32.mrf.mxu0
    %v2922 = vadd.f32 %v2858, %v2921
    %v2923 = vpop.f32.mrf.mxu0
    %v2924 = vpop.f32.mrf.mxu0
    %v2925 = vadd.f32 %v2858, %v2924
    %v2926 = vpop.f32.mrf.mxu0
    %2927 = vdwg.mxu0
    %v2928 = vmax.f32 %v2922, 0.0
    %v2929 = vmax.f32 %v2925, 0.0
    %v2930 = vpack.c.bf16 %v2929, %v2928
    %v2931 = vld [vmem:[%s11] sm:$0xf]
    %v2932 = vld [vmem:[%s11 + $0x4] sm:$0xf]
    %v2933 = vld [vmem:[%s11 + $0x8] sm:$0xf]
    %v2934 = vld [vmem:[%s11 + $0xc] sm:$0xf]
    %v2935 = vld [vmem:[%s11 + $0x10] sm:$0xf]
    %v2936 = vld [vmem:[%s11 + $0x14] sm:$0xf]
    %v2937 = vld [vmem:[%s11 + $0x18] sm:$0xf]
    %v2938 = vld [vmem:[%s11 + $0x1c] sm:$0xf]
    %v2939 = vld [vmem:[%s12] sm:$0x1]
    %v2941 = vlaneseq
    %v2942 = vshrl.u32 %v2941, 7
    %v2943 = vsub.s32 0, %v2942
    %v2944 = vrot.slane %v2939, %v2943
    %v2954 = vunpack.c.l.b16 %v2931
    %v2955 = vunpack.c.l.b16 %v2932
    %v2956 = vunpack.c.l.b16 %v2933
    %v2957 = vunpack.c.l.b16 %v2934
    %v2958 = vunpack.c.l.b16 %v2935
    %v2959 = vunpack.c.l.b16 %v2936
    %v2960 = vunpack.c.l.b16 %v2937
    %v2961 = vunpack.c.l.b16 %v2938
    %v2962 = vpack.c.b16 %v2955, %v2954
    %v2963 = vpack.c.b16 %v2957, %v2956
    %v2964 = vpack.c.b16 %v2959, %v2958
    %v2965 = vpack.c.b16 %v2961, %v2960
    %v2971 = vsel %vm431, %v2930, 0
    %2973 = vmatprep.subr.bf16.mxu0 0
    %2974 = vmatpush1.bf16.msra.mxu0 0
    %2975 = vmatprep.subr.bf16.mxu0 0
    %2976 = vmatpush1.bf16.msra.mxu0 0
    %2977 = vmatprep.subr.bf16.mxu0 0
    %2978 = vmatpush1.bf16.msra.mxu0 0
    %2979 = vmatprep.subr.bf16.mxu0 0
    %2980 = vmatpush1.bf16.msra.mxu0 0
    %2981 = vmatprep.subr.bf16.mxu0 0
    %2982 = vmatpush1.bf16.msra.mxu0 %v2965
    %2983 = vmatprep.subr.bf16.mxu0 0
    %2984 = vmatpush1.bf16.msra.mxu0 %v2964
    %2985 = vmatprep.subr.bf16.mxu0 0
    %2986 = vmatpush1.bf16.msra.mxu0 %v2963
    %2987 = vmatprep.subr.bf16.mxu0 0
    %2988 = vmatpush1.bf16.msra.mxu0 %v2962
    %2989 = vmatprep.subr.bf16.mxu0 0
    %2990 = vmatpush2.bf16.msra.mxu0 0
    %2991 = vmatprep.subr.bf16.mxu0 0
    %2992 = vmatpush2.bf16.msra.mxu0 0
    %2993 = vmatprep.subr.bf16.mxu0 0
    %2994 = vmatpush2.bf16.msra.mxu0 0
    %2995 = vmatprep.subr.bf16.mxu0 0
    %2996 = vmatpush2.bf16.msra.mxu0 0
    %2997 = vmatprep.subr.bf16.mxu0 0
    %2998 = vmatpush2.bf16.msra.mxu0 0
    %2999 = vmatprep.subr.bf16.mxu0 0
    %3000 = vmatpush2.bf16.msra.mxu0 0
    %3001 = vmatprep.subr.bf16.mxu0 0
    %3002 = vmatpush2.bf16.msra.mxu0 0
    %3003 = vmatprep.subr.bf16.mxu0 0
    %3004 = vmatpush2.bf16.msra.mxu0 0
    %3005 = vmatprep.mubr.bf16.mxu0 0
    %3006 = vmatmul.mubr.bf16.gmra.mxu0 %v2971
    %v3007 = vpop.f32.mrf.mxu0
    %v3008 = vadd.f32 %v2944, %v3007
    %v3009 = vpop.f32.mrf.mxu0
    %v3010 = vpop.f32.mrf.mxu0
    %v3011 = vadd.f32 %v2944, %v3010
    %v3012 = vpop.f32.mrf.mxu0
    %3013 = vdwg.mxu0
    %v3014 = vmul.f32 %v3008, 0.5
    %v3015 = vmul.f32 %v3011, 0.5
    %v3016 = vtanh.pop %v3014
    %v3017 = vtanh.pop %v3015
    %v3018 = vmul.f32 %v3016, 0.5
    %v3019 = vmul.f32 %v3017, 0.5
    %v3020 = vadd.f32 %v3018, 0.5
    %v3021 = vadd.f32 %v3019, 0.5
    %v3024 = vcombine.high %v3020, %v3020
    %v3026 = vunpack.c.l.s4 1983009808
    %v3027 = vunpack.c.0.s8 %v3026
    %v3028 = vlaneseq
    %v3029 = vshrl.u32 %v3028, 7
    %v3030 = vsub.s32 %v3027, %v3029
    %v3031 = vrot.slane %v3020, %v3030
    %v3033 = vunpack.c.l.s4 1983009808
    %v3034 = vunpack.c.0.s8 %v3033
    %v3035 = vlaneseq
    %v3036 = vshrl.u32 %v3035, 7
    %v3037 = vsub.s32 %v3034, %v3036
    %v3038 = vrot.slane %v3024, %v3037
    %v3039 = vcombine.high %v3031, %v3031
    %v3040 = vcombine.high %v3038, %v3038
    %v3041 = vcombine.high %v3021, %v3021
    %v3043 = vunpack.c.l.s4 1983009808
    %v3044 = vunpack.c.0.s8 %v3043
    %v3045 = vlaneseq
    %v3046 = vshrl.u32 %v3045, 7
    %v3047 = vsub.s32 %v3044, %v3046
    %v3048 = vrot.slane %v3021, %v3047
    %v3050 = vunpack.c.l.s4 1983009808
    %v3051 = vunpack.c.0.s8 %v3050
    %v3052 = vlaneseq
    %v3053 = vshrl.u32 %v3052, 7
    %v3054 = vsub.s32 %v3051, %v3053
    %v3055 = vrot.slane %v3041, %v3054
    %v3056 = vcombine.high %v3048, %v3048
    %v3057 = vcombine.high %v3055, %v3055
    %vm3066 = vcmask 25600
    %3067 = vst.msk [vmem:[%s13] sm:$0x3] %vm3066, %v3031
    %3068 = vst.msk [vmem:[%s13 + $0x2] sm:$0x3] %vm3066, %v3039
    %3069 = vst.msk [vmem:[%s13 + $0x4] sm:$0x3] %vm3066, %v3038
    %3070 = vst.msk [vmem:[%s13 + $0x6] sm:$0x3] %vm3066, %v3040
    %3071 = vst.msk [vmem:[%s13 + $0x8] sm:$0x3] %vm3066, %v3048
    %3072 = vst.msk [vmem:[%s13 + $0xa] sm:$0x3] %vm3066, %v3056
    %3073 = vst.msk [vmem:[%s13 + $0xc] sm:$0x3] %vm3066, %v3055
    %3074 = vst.msk [vmem:[%s13 + $0xe] sm:$0x3] %vm3066, %v3057
    // Predicated region
    $region78: #{tpu_custom_call.1} parent=1 // pred_check
      _
    $region79: #{tpu_custom_call.1} parent=1 // pred_check_branch
      %3076 = sbr.rel (0) target = $region81
    $region80: #{tpu_custom_call.1} parent=1 // pred_region
      _
    $region81: #{tpu_custom_call.1} parent=1 // pred_fallthru
      _
    // Predicated region
    $region82: #{tpu_custom_call.1} parent=1 // pred_check
      _
    $region83: #{tpu_custom_call.1} parent=1 // pred_check_branch
      %3078 = sbr.rel (0) target = $region85
    $region84: #{tpu_custom_call.1} parent=1 // pred_region
      _
    $region85: #{tpu_custom_call.1} parent=1 // pred_fallthru
      _
    %3079 = vsyncpa [#allocation6], 1
    %3080 = vsyncpa [#allocation8], 1
    %3081 = vsyncpa [#allocation11], 1
    %3082 = vsyncpa [#allocation14], 1

</llo_original>
